<compile_context>
chip_gen: v7x
topology: tpu7x:2x2x1
jax: 0.10.0
libtpu: 0.0.40
codegen_flags: <defaults>
</compile_context>

<pallas_src>
import functools

import jax
import jax.numpy as jnp
from jax.experimental import pallas as pl
from jax.experimental.pallas import tpu as pltpu


def _compute_attention(w_ref, mx_flat, av_flat, att_ref, pad_ref, *, H, W,
                       use_rows):
    """Write sigmoid(conv7x7(concat(mx, av))) into att_ref (shape (1, H*W)).

    mx_flat / av_flat are (1, H*W) float32 values (channel max / channel mean).
    att_ref may have any dtype; the result is cast once on store.
    """
    if use_rows:
        # Small spatial maps: scatter flat rows into a zero-padded
        # (2, H+6, W+6) scratch; the 7x7 window then slides with cheap
        # sublane/lane slices.  Runs once per batch element.
        pad_ref[...] = jnp.zeros_like(pad_ref)
        for y in range(H):
            row = slice(y * W, (y + 1) * W)
            pad_ref[0, 3 + y, 3:3 + W] = mx_flat[0, row]
            pad_ref[1, 3 + y, 3:3 + W] = av_flat[0, row]

        # 7x7 conv, 2 in-ch -> 1 out-ch, stride 1, pad 3, no bias.  The dx
        # (lane) shift is hoisted: 14 lane-sliced loads total; the 7 dy taps
        # per shift are cheap sublane slices of an in-register value.
        acc = jnp.zeros((H, W), jnp.float32)
        for ci in range(2):
            for dx in range(7):
                col = pad_ref[ci, :, dx:dx + W]                # (H+6, W)
                for dy in range(7):
                    w = w_ref[ci * 49 + dy * 7 + dx]
                    acc = acc + w * col[dy:dy + H, :]
        att = jax.nn.sigmoid(acc)                              # (H, W)
        for y in range(H):
            att_ref[0, y * W:(y + 1) * W] = att[y, :].astype(att_ref.dtype)
    else:
        # Large spatial maps: compute the 7x7 conv directly on the flat
        # (1, H*W) accumulators using static lane rolls + border masks, so
        # there is no per-row masked-store scatter in the epilogue.
        HW = H * W
        idx = jax.lax.broadcasted_iota(jnp.int32, (1, HW), 1)
        yy = idx // W
        xx = idx - yy * W
        acc = jnp.zeros((1, HW), jnp.float32)
        for ci, src in enumerate((mx_flat, av_flat)):
            for dy in range(-3, 4):
                ym = jnp.logical_and(yy + dy >= 0, yy + dy < H)
                for dx in range(-3, 4):
                    s = dy * W + dx
                    # out[p] = src[p + s]  (jnp.roll semantics: shift by -s;
                    # wrap-around positions are killed by the border mask).
                    shifted = jnp.roll(src, -s, axis=1)
                    valid = jnp.logical_and(
                        ym, jnp.logical_and(xx + dx >= 0, xx + dx < W))
                    w = w_ref[ci * 49 + (dy + 3) * 7 + (dx + 3)]
                    acc = acc + jnp.where(valid, shifted, 0.0) * w
        att_ref[...] = jax.nn.sigmoid(acc).astype(att_ref.dtype)


def _sam_single_pass_kernel(w_ref, x_ref, o_ref, att_ref, *pad, C, H, W,
                            use_rows):
    # Whole (C, H*W) channel slab is resident: reduce -> conv -> sigmoid ->
    # scale in one grid step per batch element (single HBM read + write).
    xt = x_ref[...]                                            # (C, HW) native
    mx = jnp.max(xt, axis=0, keepdims=True).astype(jnp.float32)
    av = jnp.sum(xt, axis=0, keepdims=True, dtype=jnp.float32) * (1.0 / C)
    _compute_attention(w_ref, mx, av, att_ref,
                       pad[0] if use_rows else None,
                       H=H, W=W, use_rows=use_rows)
    o_ref[...] = xt * att_ref[...]                             # native dtype


def _sam_two_phase_kernel(w_ref, x_ref, o_ref, max_acc, sum_acc, att_ref, *pad,
                          C, H, W, use_rows):
    # grid = (batch, phase, C tile).
    # Phase 0: stream C tiles, keep running max/sum; on the last tile build
    #          the attention map (conv + sigmoid), pre-cast to native dtype.
    # Phase 1: stream C tiles again, write out = x * att (no cast, no upcast).
    phase = pl.program_id(1)
    cidx = pl.program_id(2)
    last_c = pl.num_programs(2) - 1

    @pl.when(jnp.logical_and(phase == 0, cidx == 0))
    def _init():
        max_acc[...] = jnp.full_like(max_acc, -jnp.inf)
        sum_acc[...] = jnp.zeros_like(sum_acc)

    @pl.when(phase == 0)
    def _reduce():
        xt = x_ref[...]                                        # (CT, HW)
        max_acc[...] = jnp.maximum(
            max_acc[...],
            jnp.max(xt, axis=0, keepdims=True).astype(jnp.float32))
        sum_acc[...] = sum_acc[...] + jnp.sum(
            xt, axis=0, keepdims=True, dtype=jnp.float32)

    @pl.when(jnp.logical_and(phase == 0, cidx == last_c))
    def _attention():
        _compute_attention(w_ref, max_acc[...], sum_acc[...] * (1.0 / C),
                           att_ref, pad[0] if use_rows else None,
                           H=H, W=W, use_rows=use_rows)

    @pl.when(phase == 1)
    def _scale():
        o_ref[...] = x_ref[...] * att_ref[...]


def _vmem_limits():
    """(physical_vmem_bytes, scoped_vmem_limit_bytes) for this generation."""
    try:
        phys = int(getattr(pltpu.get_tpu_info(), "vmem_capacity_bytes",
                           64 * 1024 * 1024))
    except Exception:
        phys = 64 * 1024 * 1024                                # conservative (v7x)
    limit = min(int(phys * 3 // 4), 100 * 1024 * 1024)         # 96 MiB / 48 MiB
    return phys, limit


def _pick_channel_tile(C, HW, itemsize, budget_bytes):
    """Largest channel tile (divisor of C) whose (ct, HW) slab fits the budget.

    Granularity is dtype-aware (sublane packing): 8 for 4-byte, 16 for 2-byte,
    32 for 1-byte dtypes.  Falls back to the smallest aligned divisor only if
    nothing fits (graceful degradation instead of a guaranteed VMEM failure).
    """
    def tile_bytes(ct):
        return ct * HW * itemsize

    if tile_bytes(C) <= budget_bytes:
        return C
    gran = {4: 8, 2: 16, 1: 32}.get(itemsize, 8)
    cands = [d for d in range(gran, C, gran) if C % d == 0]
    fitting = [d for d in cands if tile_bytes(d) <= budget_bytes]
    if fitting:
        return max(fitting)
    if cands:
        return min(cands)
    return C


def sam_forward(x, conv_weight, *, channel_tile=None):
    """x: (B, C, H, W); conv_weight: (1, 2, 7, 7). Returns (B, C, H, W)."""
    B, C, H, W = x.shape
    HW = H * W
    itemsize = x.dtype.itemsize
    use_rows = H <= 32                  # small maps: padded-scratch conv path

    w_flat = conv_weight.reshape(-1).astype(jnp.float32)       # (98,)
    x_flat = x.reshape(B, C, HW)                               # free lane-dense view

    phys, vmem_limit = _vmem_limits()
    scratch_bytes = (2 * HW * 4 + HW * itemsize
                     + (2 * (H + 6) * (W + 6) * 4 if use_rows else 0))
    # 4 live tile buffers: double-buffered input + double-buffered output.
    tile_cap = (24 << 20) if phys >= (96 << 20) else (10 << 20)
    budget = max(min((vmem_limit - scratch_bytes - (2 << 20)) // 4, tile_cap),
                 1 << 20)

    ct = (channel_tile if channel_tile is not None
          else _pick_channel_tile(C, HW, itemsize, budget))
    assert C % ct == 0
    nct = C // ct

    pad_scratch = ([pltpu.VMEM((2, H + 6, W + 6), jnp.float32)]
                   if use_rows else [])

    if nct == 1:
        # Single-pass path: one grid step per batch element.
        kernel = functools.partial(_sam_single_pass_kernel,
                                   C=C, H=H, W=W, use_rows=use_rows)
        grid = (B,)
        in_specs = [
            pl.BlockSpec(memory_space=pltpu.MemorySpace.SMEM),          # weights
            pl.BlockSpec((pl.Squeezed(), C, HW), lambda b: (b, 0, 0)),
        ]
        out_specs = pl.BlockSpec((pl.Squeezed(), C, HW), lambda b: (b, 0, 0))
        scratch_shapes = [pltpu.VMEM((1, HW), x.dtype)] + pad_scratch   # att map
        dims = ("parallel",)
        passes = 2                                              # read + write
    else:
        # Two-phase streaming path for slabs that exceed the VMEM tile budget.
        kernel = functools.partial(_sam_two_phase_kernel,
                                   C=C, H=H, W=W, use_rows=use_rows)
        grid = (B, 2, nct)                                      # (batch, phase, C tile)
        in_specs = [
            pl.BlockSpec(memory_space=pltpu.MemorySpace.SMEM),          # weights
            pl.BlockSpec((pl.Squeezed(), ct, HW), lambda b, p, c: (b, c, 0)),
        ]
        # Output block index stays pinned at (b, 0) through all of phase 0 and
        # only walks the channel tiles in phase 1, so the buffer is always
        # fully written before it is flushed.  Keep this invariant if editing.
        out_specs = pl.BlockSpec((pl.Squeezed(), ct, HW),
                                 lambda b, p, c: (b, c * p, 0))
        scratch_shapes = ([pltpu.VMEM((1, HW), jnp.float32),            # running max
                           pltpu.VMEM((1, HW), jnp.float32),            # running sum
                           pltpu.VMEM((1, HW), x.dtype)]                # att (pre-cast)
                          + pad_scratch)
        dims = ("parallel", "arbitrary", "arbitrary")
        passes = 3                                              # 2 reads + write

    cost = pl.CostEstimate(
        flops=2 * 2 * 49 * B * HW + 3 * B * C * HW,             # conv + reduce + scale
        transcendentals=B * HW,                                 # sigmoid
        bytes_accessed=passes * B * C * HW * itemsize + 98 * 4)

    out_flat = pl.pallas_call(
        kernel,
        out_shape=jax.ShapeDtypeStruct((B, C, HW), x.dtype),
        grid=grid,
        in_specs=in_specs,
        out_specs=out_specs,
        scratch_shapes=scratch_shapes,
        compiler_params=pltpu.CompilerParams(
            dimension_semantics=dims,
            vmem_limit_bytes=vmem_limit),
        cost_estimate=cost,
    )(w_flat, x_flat)
    return out_flat.reshape(B, C, H, W)


def sam_reference(x, conv_weight):
    """Pure-JAX reference matching the PyTorch forward."""
    mx = jnp.max(x, axis=1, keepdims=True)
    av = jnp.mean(x, axis=1, keepdims=True)
    concat = jnp.concatenate([mx, av], axis=1)
    out = jax.lax.conv_general_dilated(
        concat, conv_weight, window_strides=(1, 1),
        padding=[(3, 3), (3, 3)],
        dimension_numbers=("NCHW", "OIHW", "NCHW"))
    return jax.nn.sigmoid(out) * x


if __name__ == "__main__":
    key = jax.random.PRNGKey(0)
    k_x, k_w = jax.random.split(key)

    B, C, H, W = 2, 4, 16, 16
    x = jax.random.normal(k_x, (B, C, H, W), dtype=jnp.float32)

    # Deterministic conv weight init (kaiming-uniform-like, bias=False).
    fan_in = 2 * 7 * 7
    bound = 1.0 / (fan_in ** 0.5)
    conv_weight = jax.random.uniform(
        k_w, (1, 2, 7, 7), minval=-bound, maxval=bound, dtype=jnp.float32)

    out = sam_forward(x, conv_weight)
    out = jax.block_until_ready(out)

    ref = sam_reference(x, conv_weight)
    assert out.shape == ref.shape == (B, C, H, W)
    assert jnp.allclose(out, ref, rtol=1e-4, atol=1e-5), (
        float(jnp.max(jnp.abs(out - ref))))

    # Also exercise the multi-tile (two-phase) streaming path.
    out2 = jax.block_until_ready(sam_forward(x, conv_weight, channel_tile=2))
    assert jnp.allclose(out2, ref, rtol=1e-4, atol=1e-5), (
        float(jnp.max(jnp.abs(out2 - ref))))

    print("KERNEL_OK")
</pallas_src>

<mosaic_0001>
module attributes {stable_mosaic.version = 11 : i64} {
  func.func @_sam_single_pass_kernel(%arg0: i32, %arg1: memref<98xf32, #tpu.memory_space<smem>>, %arg2: memref<1x4x256xf32, #tpu.memory_space<vmem>>, %arg3: memref<1x4x256xf32, #tpu.memory_space<vmem>>, %arg4: memref<1x256xf32, #tpu.memory_space<vmem>>, %arg5: memref<2x22x22xf32, #tpu.memory_space<vmem>>) attributes {dimension_semantics = [#tpu.dimension_semantics<parallel>], iteration_bounds = array<i64: 2>, scalar_prefetch = 0 : i64, scratch_operands = 2 : i64, tpu.core_type = #tpu.core_type<tc>, window_params = [{transform_indices = @transform_0, window_bounds = array<i64: 98>}, {transform_indices = @transform_1, window_bounds = array<i64: 1, 4, 256>}, {transform_indices = @transform_2, window_bounds = array<i64: 1, 4, 256>}]} {
    %c0 = arith.constant 0 : index
    %c0_0 = arith.constant 0 : index
    %c0_1 = arith.constant 0 : index
    %0 = vector.load %arg2[%c0, %c0_0, %c0_1] : memref<1x4x256xf32, #tpu.memory_space<vmem>>, vector<1x4x256xf32>
    %1 = vector.shape_cast %0 : vector<1x4x256xf32> to vector<4x256xf32>
    %cst = arith.constant dense<0xFF800000> : vector<256xf32>
    %2 = vector.multi_reduction <maximumf>, %1, %cst [0] : vector<4x256xf32> to vector<256xf32>
    %3 = vector.shape_cast %2 : vector<256xf32> to vector<1x256xf32>
    %cst_2 = arith.constant dense<0.000000e+00> : vector<256xf32>
    %4 = vector.multi_reduction <add>, %1, %cst_2 [0] : vector<4x256xf32> to vector<256xf32>
    %5 = vector.shape_cast %4 : vector<256xf32> to vector<1x256xf32>
    %cst_3 = arith.constant 2.500000e-01 : f32
    %6 = vector.broadcast %cst_3 : f32 to vector<1x256xf32>
    %7 = arith.mulf %5, %6 : vector<1x256xf32>
    %cst_4 = arith.constant 0.000000e+00 : f32
    %8 = vector.broadcast %cst_4 : f32 to vector<2x22x22xf32>
    %c0_5 = arith.constant 0 : index
    %c0_6 = arith.constant 0 : index
    %c0_7 = arith.constant 0 : index
    %9 = vector.load %arg5[%c0_5, %c0_6, %c0_7] : memref<2x22x22xf32, #tpu.memory_space<vmem>>, vector<2x22x22xf32>
    tpu.vector_store %arg5[%c0_5, %c0_6, %c0_7], %8 {strides = array<i32>} : memref<2x22x22xf32, #tpu.memory_space<vmem>>, vector<2x22x22xf32>,
    %10 = vector.extract_strided_slice %3 {offsets = [0, 0], sizes = [1, 16], strides = [1, 1]} : vector<1x256xf32> to vector<1x16xf32>
    %11 = vector.shape_cast %10 : vector<1x16xf32> to vector<16xf32>
    %c0_8 = arith.constant 0 : index
    %c3 = arith.constant 3 : index
    %c3_9 = arith.constant 3 : index
    %12 = vector.load %arg5[%c0_8, %c3, %c3_9] : memref<2x22x22xf32, #tpu.memory_space<vmem>>, vector<1x1x16xf32>
    %13 = vector.shape_cast %12 : vector<1x1x16xf32> to vector<16xf32>
    %14 = vector.shape_cast %11 : vector<16xf32> to vector<1x1x16xf32>
    tpu.vector_store %arg5[%c0_8, %c3, %c3_9], %14 {strides = array<i32>} : memref<2x22x22xf32, #tpu.memory_space<vmem>>, vector<1x1x16xf32>,
    %15 = vector.extract_strided_slice %7 {offsets = [0, 0], sizes = [1, 16], strides = [1, 1]} : vector<1x256xf32> to vector<1x16xf32>
    %16 = vector.shape_cast %15 : vector<1x16xf32> to vector<16xf32>
    %c1 = arith.constant 1 : index
    %c3_10 = arith.constant 3 : index
    %c3_11 = arith.constant 3 : index
    %17 = vector.load %arg5[%c1, %c3_10, %c3_11] : memref<2x22x22xf32, #tpu.memory_space<vmem>>, vector<1x1x16xf32>
    %18 = vector.shape_cast %17 : vector<1x1x16xf32> to vector<16xf32>
    %19 = vector.shape_cast %16 : vector<16xf32> to vector<1x1x16xf32>
    tpu.vector_store %arg5[%c1, %c3_10, %c3_11], %19 {strides = array<i32>} : memref<2x22x22xf32, #tpu.memory_space<vmem>>, vector<1x1x16xf32>,
    %20 = vector.extract_strided_slice %3 {offsets = [0, 16], sizes = [1, 16], strides = [1, 1]} : vector<1x256xf32> to vector<1x16xf32>
    %21 = vector.shape_cast %20 : vector<1x16xf32> to vector<16xf32>
    %c0_12 = arith.constant 0 : index
    %c4 = arith.constant 4 : index
    %c3_13 = arith.constant 3 : index
    %22 = vector.load %arg5[%c0_12, %c4, %c3_13] : memref<2x22x22xf32, #tpu.memory_space<vmem>>, vector<1x1x16xf32>
    %23 = vector.shape_cast %22 : vector<1x1x16xf32> to vector<16xf32>
    %24 = vector.shape_cast %21 : vector<16xf32> to vector<1x1x16xf32>
    tpu.vector_store %arg5[%c0_12, %c4, %c3_13], %24 {strides = array<i32>} : memref<2x22x22xf32, #tpu.memory_space<vmem>>, vector<1x1x16xf32>,
    %25 = vector.extract_strided_slice %7 {offsets = [0, 16], sizes = [1, 16], strides = [1, 1]} : vector<1x256xf32> to vector<1x16xf32>
    %26 = vector.shape_cast %25 : vector<1x16xf32> to vector<16xf32>
    %c1_14 = arith.constant 1 : index
    %c4_15 = arith.constant 4 : index
    %c3_16 = arith.constant 3 : index
    %27 = vector.load %arg5[%c1_14, %c4_15, %c3_16] : memref<2x22x22xf32, #tpu.memory_space<vmem>>, vector<1x1x16xf32>
    %28 = vector.shape_cast %27 : vector<1x1x16xf32> to vector<16xf32>
    %29 = vector.shape_cast %26 : vector<16xf32> to vector<1x1x16xf32>
    tpu.vector_store %arg5[%c1_14, %c4_15, %c3_16], %29 {strides = array<i32>} : memref<2x22x22xf32, #tpu.memory_space<vmem>>, vector<1x1x16xf32>,
    %30 = vector.extract_strided_slice %3 {offsets = [0, 32], sizes = [1, 16], strides = [1, 1]} : vector<1x256xf32> to vector<1x16xf32>
    %31 = vector.shape_cast %30 : vector<1x16xf32> to vector<16xf32>
    %c0_17 = arith.constant 0 : index
    %c5 = arith.constant 5 : index
    %c3_18 = arith.constant 3 : index
    %32 = vector.load %arg5[%c0_17, %c5, %c3_18] : memref<2x22x22xf32, #tpu.memory_space<vmem>>, vector<1x1x16xf32>
    %33 = vector.shape_cast %32 : vector<1x1x16xf32> to vector<16xf32>
    %34 = vector.shape_cast %31 : vector<16xf32> to vector<1x1x16xf32>
    tpu.vector_store %arg5[%c0_17, %c5, %c3_18], %34 {strides = array<i32>} : memref<2x22x22xf32, #tpu.memory_space<vmem>>, vector<1x1x16xf32>,
    %35 = vector.extract_strided_slice %7 {offsets = [0, 32], sizes = [1, 16], strides = [1, 1]} : vector<1x256xf32> to vector<1x16xf32>
    %36 = vector.shape_cast %35 : vector<1x16xf32> to vector<16xf32>
    %c1_19 = arith.constant 1 : index
    %c5_20 = arith.constant 5 : index
    %c3_21 = arith.constant 3 : index
    %37 = vector.load %arg5[%c1_19, %c5_20, %c3_21] : memref<2x22x22xf32, #tpu.memory_space<vmem>>, vector<1x1x16xf32>
    %38 = vector.shape_cast %37 : vector<1x1x16xf32> to vector<16xf32>
    %39 = vector.shape_cast %36 : vector<16xf32> to vector<1x1x16xf32>
    tpu.vector_store %arg5[%c1_19, %c5_20, %c3_21], %39 {strides = array<i32>} : memref<2x22x22xf32, #tpu.memory_space<vmem>>, vector<1x1x16xf32>,
    %40 = vector.extract_strided_slice %3 {offsets = [0, 48], sizes = [1, 16], strides = [1, 1]} : vector<1x256xf32> to vector<1x16xf32>
    %41 = vector.shape_cast %40 : vector<1x16xf32> to vector<16xf32>
    %c0_22 = arith.constant 0 : index
    %c6 = arith.constant 6 : index
    %c3_23 = arith.constant 3 : index
    %42 = vector.load %arg5[%c0_22, %c6, %c3_23] : memref<2x22x22xf32, #tpu.memory_space<vmem>>, vector<1x1x16xf32>
    %43 = vector.shape_cast %42 : vector<1x1x16xf32> to vector<16xf32>
    %44 = vector.shape_cast %41 : vector<16xf32> to vector<1x1x16xf32>
    tpu.vector_store %arg5[%c0_22, %c6, %c3_23], %44 {strides = array<i32>} : memref<2x22x22xf32, #tpu.memory_space<vmem>>, vector<1x1x16xf32>,
    %45 = vector.extract_strided_slice %7 {offsets = [0, 48], sizes = [1, 16], strides = [1, 1]} : vector<1x256xf32> to vector<1x16xf32>
    %46 = vector.shape_cast %45 : vector<1x16xf32> to vector<16xf32>
    %c1_24 = arith.constant 1 : index
    %c6_25 = arith.constant 6 : index
    %c3_26 = arith.constant 3 : index
    %47 = vector.load %arg5[%c1_24, %c6_25, %c3_26] : memref<2x22x22xf32, #tpu.memory_space<vmem>>, vector<1x1x16xf32>
    %48 = vector.shape_cast %47 : vector<1x1x16xf32> to vector<16xf32>
    %49 = vector.shape_cast %46 : vector<16xf32> to vector<1x1x16xf32>
    tpu.vector_store %arg5[%c1_24, %c6_25, %c3_26], %49 {strides = array<i32>} : memref<2x22x22xf32, #tpu.memory_space<vmem>>, vector<1x1x16xf32>,
    %50 = vector.extract_strided_slice %3 {offsets = [0, 64], sizes = [1, 16], strides = [1, 1]} : vector<1x256xf32> to vector<1x16xf32>
    %51 = vector.shape_cast %50 : vector<1x16xf32> to vector<16xf32>
    %c0_27 = arith.constant 0 : index
    %c7 = arith.constant 7 : index
    %c3_28 = arith.constant 3 : index
    %52 = vector.load %arg5[%c0_27, %c7, %c3_28] : memref<2x22x22xf32, #tpu.memory_space<vmem>>, vector<1x1x16xf32>
    %53 = vector.shape_cast %52 : vector<1x1x16xf32> to vector<16xf32>
    %54 = vector.shape_cast %51 : vector<16xf32> to vector<1x1x16xf32>
    tpu.vector_store %arg5[%c0_27, %c7, %c3_28], %54 {strides = array<i32>} : memref<2x22x22xf32, #tpu.memory_space<vmem>>, vector<1x1x16xf32>,
    %55 = vector.extract_strided_slice %7 {offsets = [0, 64], sizes = [1, 16], strides = [1, 1]} : vector<1x256xf32> to vector<1x16xf32>
    %56 = vector.shape_cast %55 : vector<1x16xf32> to vector<16xf32>
    %c1_29 = arith.constant 1 : index
    %c7_30 = arith.constant 7 : index
    %c3_31 = arith.constant 3 : index
    %57 = vector.load %arg5[%c1_29, %c7_30, %c3_31] : memref<2x22x22xf32, #tpu.memory_space<vmem>>, vector<1x1x16xf32>
    %58 = vector.shape_cast %57 : vector<1x1x16xf32> to vector<16xf32>
    %59 = vector.shape_cast %56 : vector<16xf32> to vector<1x1x16xf32>
    tpu.vector_store %arg5[%c1_29, %c7_30, %c3_31], %59 {strides = array<i32>} : memref<2x22x22xf32, #tpu.memory_space<vmem>>, vector<1x1x16xf32>,
    %60 = vector.extract_strided_slice %3 {offsets = [0, 80], sizes = [1, 16], strides = [1, 1]} : vector<1x256xf32> to vector<1x16xf32>
    %61 = vector.shape_cast %60 : vector<1x16xf32> to vector<16xf32>
    %c0_32 = arith.constant 0 : index
    %c8 = arith.constant 8 : index
    %c3_33 = arith.constant 3 : index
    %62 = vector.load %arg5[%c0_32, %c8, %c3_33] : memref<2x22x22xf32, #tpu.memory_space<vmem>>, vector<1x1x16xf32>
    %63 = vector.shape_cast %62 : vector<1x1x16xf32> to vector<16xf32>
    %64 = vector.shape_cast %61 : vector<16xf32> to vector<1x1x16xf32>
    tpu.vector_store %arg5[%c0_32, %c8, %c3_33], %64 {strides = array<i32>} : memref<2x22x22xf32, #tpu.memory_space<vmem>>, vector<1x1x16xf32>,
    %65 = vector.extract_strided_slice %7 {offsets = [0, 80], sizes = [1, 16], strides = [1, 1]} : vector<1x256xf32> to vector<1x16xf32>
    %66 = vector.shape_cast %65 : vector<1x16xf32> to vector<16xf32>
    %c1_34 = arith.constant 1 : index
    %c8_35 = arith.constant 8 : index
    %c3_36 = arith.constant 3 : index
    %67 = vector.load %arg5[%c1_34, %c8_35, %c3_36] : memref<2x22x22xf32, #tpu.memory_space<vmem>>, vector<1x1x16xf32>
    %68 = vector.shape_cast %67 : vector<1x1x16xf32> to vector<16xf32>
    %69 = vector.shape_cast %66 : vector<16xf32> to vector<1x1x16xf32>
    tpu.vector_store %arg5[%c1_34, %c8_35, %c3_36], %69 {strides = array<i32>} : memref<2x22x22xf32, #tpu.memory_space<vmem>>, vector<1x1x16xf32>,
    %70 = vector.extract_strided_slice %3 {offsets = [0, 96], sizes = [1, 16], strides = [1, 1]} : vector<1x256xf32> to vector<1x16xf32>
    %71 = vector.shape_cast %70 : vector<1x16xf32> to vector<16xf32>
    %c0_37 = arith.constant 0 : index
    %c9 = arith.constant 9 : index
    %c3_38 = arith.constant 3 : index
    %72 = vector.load %arg5[%c0_37, %c9, %c3_38] : memref<2x22x22xf32, #tpu.memory_space<vmem>>, vector<1x1x16xf32>
    %73 = vector.shape_cast %72 : vector<1x1x16xf32> to vector<16xf32>
    %74 = vector.shape_cast %71 : vector<16xf32> to vector<1x1x16xf32>
    tpu.vector_store %arg5[%c0_37, %c9, %c3_38], %74 {strides = array<i32>} : memref<2x22x22xf32, #tpu.memory_space<vmem>>, vector<1x1x16xf32>,
    %75 = vector.extract_strided_slice %7 {offsets = [0, 96], sizes = [1, 16], strides = [1, 1]} : vector<1x256xf32> to vector<1x16xf32>
    %76 = vector.shape_cast %75 : vector<1x16xf32> to vector<16xf32>
    %c1_39 = arith.constant 1 : index
    %c9_40 = arith.constant 9 : index
    %c3_41 = arith.constant 3 : index
    %77 = vector.load %arg5[%c1_39, %c9_40, %c3_41] : memref<2x22x22xf32, #tpu.memory_space<vmem>>, vector<1x1x16xf32>
    %78 = vector.shape_cast %77 : vector<1x1x16xf32> to vector<16xf32>
    %79 = vector.shape_cast %76 : vector<16xf32> to vector<1x1x16xf32>
    tpu.vector_store %arg5[%c1_39, %c9_40, %c3_41], %79 {strides = array<i32>} : memref<2x22x22xf32, #tpu.memory_space<vmem>>, vector<1x1x16xf32>,
    %80 = vector.extract_strided_slice %3 {offsets = [0, 112], sizes = [1, 16], strides = [1, 1]} : vector<1x256xf32> to vector<1x16xf32>
    %81 = vector.shape_cast %80 : vector<1x16xf32> to vector<16xf32>
    %c0_42 = arith.constant 0 : index
    %c10 = arith.constant 10 : index
    %c3_43 = arith.constant 3 : index
    %82 = vector.load %arg5[%c0_42, %c10, %c3_43] : memref<2x22x22xf32, #tpu.memory_space<vmem>>, vector<1x1x16xf32>
    %83 = vector.shape_cast %82 : vector<1x1x16xf32> to vector<16xf32>
    %84 = vector.shape_cast %81 : vector<16xf32> to vector<1x1x16xf32>
    tpu.vector_store %arg5[%c0_42, %c10, %c3_43], %84 {strides = array<i32>} : memref<2x22x22xf32, #tpu.memory_space<vmem>>, vector<1x1x16xf32>,
    %85 = vector.extract_strided_slice %7 {offsets = [0, 112], sizes = [1, 16], strides = [1, 1]} : vector<1x256xf32> to vector<1x16xf32>
    %86 = vector.shape_cast %85 : vector<1x16xf32> to vector<16xf32>
    %c1_44 = arith.constant 1 : index
    %c10_45 = arith.constant 10 : index
    %c3_46 = arith.constant 3 : index
    %87 = vector.load %arg5[%c1_44, %c10_45, %c3_46] : memref<2x22x22xf32, #tpu.memory_space<vmem>>, vector<1x1x16xf32>
    %88 = vector.shape_cast %87 : vector<1x1x16xf32> to vector<16xf32>
    %89 = vector.shape_cast %86 : vector<16xf32> to vector<1x1x16xf32>
    tpu.vector_store %arg5[%c1_44, %c10_45, %c3_46], %89 {strides = array<i32>} : memref<2x22x22xf32, #tpu.memory_space<vmem>>, vector<1x1x16xf32>,
    %90 = vector.extract_strided_slice %3 {offsets = [0, 128], sizes = [1, 16], strides = [1, 1]} : vector<1x256xf32> to vector<1x16xf32>
    %91 = vector.shape_cast %90 : vector<1x16xf32> to vector<16xf32>
    %c0_47 = arith.constant 0 : index
    %c11 = arith.constant 11 : index
    %c3_48 = arith.constant 3 : index
    %92 = vector.load %arg5[%c0_47, %c11, %c3_48] : memref<2x22x22xf32, #tpu.memory_space<vmem>>, vector<1x1x16xf32>
    %93 = vector.shape_cast %92 : vector<1x1x16xf32> to vector<16xf32>
    %94 = vector.shape_cast %91 : vector<16xf32> to vector<1x1x16xf32>
    tpu.vector_store %arg5[%c0_47, %c11, %c3_48], %94 {strides = array<i32>} : memref<2x22x22xf32, #tpu.memory_space<vmem>>, vector<1x1x16xf32>,
    %95 = vector.extract_strided_slice %7 {offsets = [0, 128], sizes = [1, 16], strides = [1, 1]} : vector<1x256xf32> to vector<1x16xf32>
    %96 = vector.shape_cast %95 : vector<1x16xf32> to vector<16xf32>
    %c1_49 = arith.constant 1 : index
    %c11_50 = arith.constant 11 : index
    %c3_51 = arith.constant 3 : index
    %97 = vector.load %arg5[%c1_49, %c11_50, %c3_51] : memref<2x22x22xf32, #tpu.memory_space<vmem>>, vector<1x1x16xf32>
    %98 = vector.shape_cast %97 : vector<1x1x16xf32> to vector<16xf32>
    %99 = vector.shape_cast %96 : vector<16xf32> to vector<1x1x16xf32>
    tpu.vector_store %arg5[%c1_49, %c11_50, %c3_51], %99 {strides = array<i32>} : memref<2x22x22xf32, #tpu.memory_space<vmem>>, vector<1x1x16xf32>,
    %100 = vector.extract_strided_slice %3 {offsets = [0, 144], sizes = [1, 16], strides = [1, 1]} : vector<1x256xf32> to vector<1x16xf32>
    %101 = vector.shape_cast %100 : vector<1x16xf32> to vector<16xf32>
    %c0_52 = arith.constant 0 : index
    %c12 = arith.constant 12 : index
    %c3_53 = arith.constant 3 : index
    %102 = vector.load %arg5[%c0_52, %c12, %c3_53] : memref<2x22x22xf32, #tpu.memory_space<vmem>>, vector<1x1x16xf32>
    %103 = vector.shape_cast %102 : vector<1x1x16xf32> to vector<16xf32>
    %104 = vector.shape_cast %101 : vector<16xf32> to vector<1x1x16xf32>
    tpu.vector_store %arg5[%c0_52, %c12, %c3_53], %104 {strides = array<i32>} : memref<2x22x22xf32, #tpu.memory_space<vmem>>, vector<1x1x16xf32>,
    %105 = vector.extract_strided_slice %7 {offsets = [0, 144], sizes = [1, 16], strides = [1, 1]} : vector<1x256xf32> to vector<1x16xf32>
    %106 = vector.shape_cast %105 : vector<1x16xf32> to vector<16xf32>
    %c1_54 = arith.constant 1 : index
    %c12_55 = arith.constant 12 : index
    %c3_56 = arith.constant 3 : index
    %107 = vector.load %arg5[%c1_54, %c12_55, %c3_56] : memref<2x22x22xf32, #tpu.memory_space<vmem>>, vector<1x1x16xf32>
    %108 = vector.shape_cast %107 : vector<1x1x16xf32> to vector<16xf32>
    %109 = vector.shape_cast %106 : vector<16xf32> to vector<1x1x16xf32>
    tpu.vector_store %arg5[%c1_54, %c12_55, %c3_56], %109 {strides = array<i32>} : memref<2x22x22xf32, #tpu.memory_space<vmem>>, vector<1x1x16xf32>,
    %110 = vector.extract_strided_slice %3 {offsets = [0, 160], sizes = [1, 16], strides = [1, 1]} : vector<1x256xf32> to vector<1x16xf32>
    %111 = vector.shape_cast %110 : vector<1x16xf32> to vector<16xf32>
    %c0_57 = arith.constant 0 : index
    %c13 = arith.constant 13 : index
    %c3_58 = arith.constant 3 : index
    %112 = vector.load %arg5[%c0_57, %c13, %c3_58] : memref<2x22x22xf32, #tpu.memory_space<vmem>>, vector<1x1x16xf32>
    %113 = vector.shape_cast %112 : vector<1x1x16xf32> to vector<16xf32>
    %114 = vector.shape_cast %111 : vector<16xf32> to vector<1x1x16xf32>
    tpu.vector_store %arg5[%c0_57, %c13, %c3_58], %114 {strides = array<i32>} : memref<2x22x22xf32, #tpu.memory_space<vmem>>, vector<1x1x16xf32>,
    %115 = vector.extract_strided_slice %7 {offsets = [0, 160], sizes = [1, 16], strides = [1, 1]} : vector<1x256xf32> to vector<1x16xf32>
    %116 = vector.shape_cast %115 : vector<1x16xf32> to vector<16xf32>
    %c1_59 = arith.constant 1 : index
    %c13_60 = arith.constant 13 : index
    %c3_61 = arith.constant 3 : index
    %117 = vector.load %arg5[%c1_59, %c13_60, %c3_61] : memref<2x22x22xf32, #tpu.memory_space<vmem>>, vector<1x1x16xf32>
    %118 = vector.shape_cast %117 : vector<1x1x16xf32> to vector<16xf32>
    %119 = vector.shape_cast %116 : vector<16xf32> to vector<1x1x16xf32>
    tpu.vector_store %arg5[%c1_59, %c13_60, %c3_61], %119 {strides = array<i32>} : memref<2x22x22xf32, #tpu.memory_space<vmem>>, vector<1x1x16xf32>,
    %120 = vector.extract_strided_slice %3 {offsets = [0, 176], sizes = [1, 16], strides = [1, 1]} : vector<1x256xf32> to vector<1x16xf32>
    %121 = vector.shape_cast %120 : vector<1x16xf32> to vector<16xf32>
    %c0_62 = arith.constant 0 : index
    %c14 = arith.constant 14 : index
    %c3_63 = arith.constant 3 : index
    %122 = vector.load %arg5[%c0_62, %c14, %c3_63] : memref<2x22x22xf32, #tpu.memory_space<vmem>>, vector<1x1x16xf32>
    %123 = vector.shape_cast %122 : vector<1x1x16xf32> to vector<16xf32>
    %124 = vector.shape_cast %121 : vector<16xf32> to vector<1x1x16xf32>
    tpu.vector_store %arg5[%c0_62, %c14, %c3_63], %124 {strides = array<i32>} : memref<2x22x22xf32, #tpu.memory_space<vmem>>, vector<1x1x16xf32>,
    %125 = vector.extract_strided_slice %7 {offsets = [0, 176], sizes = [1, 16], strides = [1, 1]} : vector<1x256xf32> to vector<1x16xf32>
    %126 = vector.shape_cast %125 : vector<1x16xf32> to vector<16xf32>
    %c1_64 = arith.constant 1 : index
    %c14_65 = arith.constant 14 : index
    %c3_66 = arith.constant 3 : index
    %127 = vector.load %arg5[%c1_64, %c14_65, %c3_66] : memref<2x22x22xf32, #tpu.memory_space<vmem>>, vector<1x1x16xf32>
    %128 = vector.shape_cast %127 : vector<1x1x16xf32> to vector<16xf32>
    %129 = vector.shape_cast %126 : vector<16xf32> to vector<1x1x16xf32>
    tpu.vector_store %arg5[%c1_64, %c14_65, %c3_66], %129 {strides = array<i32>} : memref<2x22x22xf32, #tpu.memory_space<vmem>>, vector<1x1x16xf32>,
    %130 = vector.extract_strided_slice %3 {offsets = [0, 192], sizes = [1, 16], strides = [1, 1]} : vector<1x256xf32> to vector<1x16xf32>
    %131 = vector.shape_cast %130 : vector<1x16xf32> to vector<16xf32>
    %c0_67 = arith.constant 0 : index
    %c15 = arith.constant 15 : index
    %c3_68 = arith.constant 3 : index
    %132 = vector.load %arg5[%c0_67, %c15, %c3_68] : memref<2x22x22xf32, #tpu.memory_space<vmem>>, vector<1x1x16xf32>
    %133 = vector.shape_cast %132 : vector<1x1x16xf32> to vector<16xf32>
    %134 = vector.shape_cast %131 : vector<16xf32> to vector<1x1x16xf32>
    tpu.vector_store %arg5[%c0_67, %c15, %c3_68], %134 {strides = array<i32>} : memref<2x22x22xf32, #tpu.memory_space<vmem>>, vector<1x1x16xf32>,
    %135 = vector.extract_strided_slice %7 {offsets = [0, 192], sizes = [1, 16], strides = [1, 1]} : vector<1x256xf32> to vector<1x16xf32>
    %136 = vector.shape_cast %135 : vector<1x16xf32> to vector<16xf32>
    %c1_69 = arith.constant 1 : index
    %c15_70 = arith.constant 15 : index
    %c3_71 = arith.constant 3 : index
    %137 = vector.load %arg5[%c1_69, %c15_70, %c3_71] : memref<2x22x22xf32, #tpu.memory_space<vmem>>, vector<1x1x16xf32>
    %138 = vector.shape_cast %137 : vector<1x1x16xf32> to vector<16xf32>
    %139 = vector.shape_cast %136 : vector<16xf32> to vector<1x1x16xf32>
    tpu.vector_store %arg5[%c1_69, %c15_70, %c3_71], %139 {strides = array<i32>} : memref<2x22x22xf32, #tpu.memory_space<vmem>>, vector<1x1x16xf32>,
    %140 = vector.extract_strided_slice %3 {offsets = [0, 208], sizes = [1, 16], strides = [1, 1]} : vector<1x256xf32> to vector<1x16xf32>
    %141 = vector.shape_cast %140 : vector<1x16xf32> to vector<16xf32>
    %c0_72 = arith.constant 0 : index
    %c16 = arith.constant 16 : index
    %c3_73 = arith.constant 3 : index
    %142 = vector.load %arg5[%c0_72, %c16, %c3_73] : memref<2x22x22xf32, #tpu.memory_space<vmem>>, vector<1x1x16xf32>
    %143 = vector.shape_cast %142 : vector<1x1x16xf32> to vector<16xf32>
    %144 = vector.shape_cast %141 : vector<16xf32> to vector<1x1x16xf32>
    tpu.vector_store %arg5[%c0_72, %c16, %c3_73], %144 {strides = array<i32>} : memref<2x22x22xf32, #tpu.memory_space<vmem>>, vector<1x1x16xf32>,
    %145 = vector.extract_strided_slice %7 {offsets = [0, 208], sizes = [1, 16], strides = [1, 1]} : vector<1x256xf32> to vector<1x16xf32>
    %146 = vector.shape_cast %145 : vector<1x16xf32> to vector<16xf32>
    %c1_74 = arith.constant 1 : index
    %c16_75 = arith.constant 16 : index
    %c3_76 = arith.constant 3 : index
    %147 = vector.load %arg5[%c1_74, %c16_75, %c3_76] : memref<2x22x22xf32, #tpu.memory_space<vmem>>, vector<1x1x16xf32>
    %148 = vector.shape_cast %147 : vector<1x1x16xf32> to vector<16xf32>
    %149 = vector.shape_cast %146 : vector<16xf32> to vector<1x1x16xf32>
    tpu.vector_store %arg5[%c1_74, %c16_75, %c3_76], %149 {strides = array<i32>} : memref<2x22x22xf32, #tpu.memory_space<vmem>>, vector<1x1x16xf32>,
    %150 = vector.extract_strided_slice %3 {offsets = [0, 224], sizes = [1, 16], strides = [1, 1]} : vector<1x256xf32> to vector<1x16xf32>
    %151 = vector.shape_cast %150 : vector<1x16xf32> to vector<16xf32>
    %c0_77 = arith.constant 0 : index
    %c17 = arith.constant 17 : index
    %c3_78 = arith.constant 3 : index
    %152 = vector.load %arg5[%c0_77, %c17, %c3_78] : memref<2x22x22xf32, #tpu.memory_space<vmem>>, vector<1x1x16xf32>
    %153 = vector.shape_cast %152 : vector<1x1x16xf32> to vector<16xf32>
    %154 = vector.shape_cast %151 : vector<16xf32> to vector<1x1x16xf32>
    tpu.vector_store %arg5[%c0_77, %c17, %c3_78], %154 {strides = array<i32>} : memref<2x22x22xf32, #tpu.memory_space<vmem>>, vector<1x1x16xf32>,
    %155 = vector.extract_strided_slice %7 {offsets = [0, 224], sizes = [1, 16], strides = [1, 1]} : vector<1x256xf32> to vector<1x16xf32>
    %156 = vector.shape_cast %155 : vector<1x16xf32> to vector<16xf32>
    %c1_79 = arith.constant 1 : index
    %c17_80 = arith.constant 17 : index
    %c3_81 = arith.constant 3 : index
    %157 = vector.load %arg5[%c1_79, %c17_80, %c3_81] : memref<2x22x22xf32, #tpu.memory_space<vmem>>, vector<1x1x16xf32>
    %158 = vector.shape_cast %157 : vector<1x1x16xf32> to vector<16xf32>
    %159 = vector.shape_cast %156 : vector<16xf32> to vector<1x1x16xf32>
    tpu.vector_store %arg5[%c1_79, %c17_80, %c3_81], %159 {strides = array<i32>} : memref<2x22x22xf32, #tpu.memory_space<vmem>>, vector<1x1x16xf32>,
    %160 = vector.extract_strided_slice %3 {offsets = [0, 240], sizes = [1, 16], strides = [1, 1]} : vector<1x256xf32> to vector<1x16xf32>
    %161 = vector.shape_cast %160 : vector<1x16xf32> to vector<16xf32>
    %c0_82 = arith.constant 0 : index
    %c18 = arith.constant 18 : index
    %c3_83 = arith.constant 3 : index
    %162 = vector.load %arg5[%c0_82, %c18, %c3_83] : memref<2x22x22xf32, #tpu.memory_space<vmem>>, vector<1x1x16xf32>
    %163 = vector.shape_cast %162 : vector<1x1x16xf32> to vector<16xf32>
    %164 = vector.shape_cast %161 : vector<16xf32> to vector<1x1x16xf32>
    tpu.vector_store %arg5[%c0_82, %c18, %c3_83], %164 {strides = array<i32>} : memref<2x22x22xf32, #tpu.memory_space<vmem>>, vector<1x1x16xf32>,
    %165 = vector.extract_strided_slice %7 {offsets = [0, 240], sizes = [1, 16], strides = [1, 1]} : vector<1x256xf32> to vector<1x16xf32>
    %166 = vector.shape_cast %165 : vector<1x16xf32> to vector<16xf32>
    %c1_84 = arith.constant 1 : index
    %c18_85 = arith.constant 18 : index
    %c3_86 = arith.constant 3 : index
    %167 = vector.load %arg5[%c1_84, %c18_85, %c3_86] : memref<2x22x22xf32, #tpu.memory_space<vmem>>, vector<1x1x16xf32>
    %168 = vector.shape_cast %167 : vector<1x1x16xf32> to vector<16xf32>
    %169 = vector.shape_cast %166 : vector<16xf32> to vector<1x1x16xf32>
    tpu.vector_store %arg5[%c1_84, %c18_85, %c3_86], %169 {strides = array<i32>} : memref<2x22x22xf32, #tpu.memory_space<vmem>>, vector<1x1x16xf32>,
    %cst_87 = arith.constant 0.000000e+00 : f32
    %170 = vector.broadcast %cst_87 : f32 to vector<16x16xf32>
    %c0_88 = arith.constant 0 : index
    %c0_89 = arith.constant 0 : index
    %c0_90 = arith.constant 0 : index
    %171 = vector.load %arg5[%c0_88, %c0_89, %c0_90] : memref<2x22x22xf32, #tpu.memory_space<vmem>>, vector<1x22x16xf32>
    %172 = vector.shape_cast %171 : vector<1x22x16xf32> to vector<22x16xf32>
    %c0_91 = arith.constant 0 : index
    %173 = memref.load %arg1[%c0_91] : memref<98xf32, #tpu.memory_space<smem>>
    %174 = vector.extract_strided_slice %172 {offsets = [0, 0], sizes = [16, 16], strides = [1, 1]} : vector<22x16xf32> to vector<16x16xf32>
    %175 = vector.broadcast %173 : f32 to vector<16x16xf32>
    %176 = arith.mulf %175, %174 : vector<16x16xf32>
    %177 = arith.addf %170, %176 : vector<16x16xf32>
    %c7_92 = arith.constant 7 : index
    %178 = memref.load %arg1[%c7_92] : memref<98xf32, #tpu.memory_space<smem>>
    %179 = vector.extract_strided_slice %172 {offsets = [1, 0], sizes = [16, 16], strides = [1, 1]} : vector<22x16xf32> to vector<16x16xf32>
    %180 = vector.broadcast %178 : f32 to vector<16x16xf32>
    %181 = arith.mulf %180, %179 : vector<16x16xf32>
    %182 = arith.addf %177, %181 : vector<16x16xf32>
    %c14_93 = arith.constant 14 : index
    %183 = memref.load %arg1[%c14_93] : memref<98xf32, #tpu.memory_space<smem>>
    %184 = vector.extract_strided_slice %172 {offsets = [2, 0], sizes = [16, 16], strides = [1, 1]} : vector<22x16xf32> to vector<16x16xf32>
    %185 = vector.broadcast %183 : f32 to vector<16x16xf32>
    %186 = arith.mulf %185, %184 : vector<16x16xf32>
    %187 = arith.addf %182, %186 : vector<16x16xf32>
    %c21 = arith.constant 21 : index
    %188 = memref.load %arg1[%c21] : memref<98xf32, #tpu.memory_space<smem>>
    %189 = vector.extract_strided_slice %172 {offsets = [3, 0], sizes = [16, 16], strides = [1, 1]} : vector<22x16xf32> to vector<16x16xf32>
    %190 = vector.broadcast %188 : f32 to vector<16x16xf32>
    %191 = arith.mulf %190, %189 : vector<16x16xf32>
    %192 = arith.addf %187, %191 : vector<16x16xf32>
    %c28 = arith.constant 28 : index
    %193 = memref.load %arg1[%c28] : memref<98xf32, #tpu.memory_space<smem>>
    %194 = vector.extract_strided_slice %172 {offsets = [4, 0], sizes = [16, 16], strides = [1, 1]} : vector<22x16xf32> to vector<16x16xf32>
    %195 = vector.broadcast %193 : f32 to vector<16x16xf32>
    %196 = arith.mulf %195, %194 : vector<16x16xf32>
    %197 = arith.addf %192, %196 : vector<16x16xf32>
    %c35 = arith.constant 35 : index
    %198 = memref.load %arg1[%c35] : memref<98xf32, #tpu.memory_space<smem>>
    %199 = vector.extract_strided_slice %172 {offsets = [5, 0], sizes = [16, 16], strides = [1, 1]} : vector<22x16xf32> to vector<16x16xf32>
    %200 = vector.broadcast %198 : f32 to vector<16x16xf32>
    %201 = arith.mulf %200, %199 : vector<16x16xf32>
    %202 = arith.addf %197, %201 : vector<16x16xf32>
    %c42 = arith.constant 42 : index
    %203 = memref.load %arg1[%c42] : memref<98xf32, #tpu.memory_space<smem>>
    %204 = vector.extract_strided_slice %172 {offsets = [6, 0], sizes = [16, 16], strides = [1, 1]} : vector<22x16xf32> to vector<16x16xf32>
    %205 = vector.broadcast %203 : f32 to vector<16x16xf32>
    %206 = arith.mulf %205, %204 : vector<16x16xf32>
    %207 = arith.addf %202, %206 : vector<16x16xf32>
    %c0_94 = arith.constant 0 : index
    %c0_95 = arith.constant 0 : index
    %c1_96 = arith.constant 1 : index
    %208 = vector.load %arg5[%c0_94, %c0_95, %c1_96] : memref<2x22x22xf32, #tpu.memory_space<vmem>>, vector<1x22x16xf32>
    %209 = vector.shape_cast %208 : vector<1x22x16xf32> to vector<22x16xf32>
    %c1_97 = arith.constant 1 : index
    %210 = memref.load %arg1[%c1_97] : memref<98xf32, #tpu.memory_space<smem>>
    %211 = vector.extract_strided_slice %209 {offsets = [0, 0], sizes = [16, 16], strides = [1, 1]} : vector<22x16xf32> to vector<16x16xf32>
    %212 = vector.broadcast %210 : f32 to vector<16x16xf32>
    %213 = arith.mulf %212, %211 : vector<16x16xf32>
    %214 = arith.addf %207, %213 : vector<16x16xf32>
    %c8_98 = arith.constant 8 : index
    %215 = memref.load %arg1[%c8_98] : memref<98xf32, #tpu.memory_space<smem>>
    %216 = vector.extract_strided_slice %209 {offsets = [1, 0], sizes = [16, 16], strides = [1, 1]} : vector<22x16xf32> to vector<16x16xf32>
    %217 = vector.broadcast %215 : f32 to vector<16x16xf32>
    %218 = arith.mulf %217, %216 : vector<16x16xf32>
    %219 = arith.addf %214, %218 : vector<16x16xf32>
    %c15_99 = arith.constant 15 : index
    %220 = memref.load %arg1[%c15_99] : memref<98xf32, #tpu.memory_space<smem>>
    %221 = vector.extract_strided_slice %209 {offsets = [2, 0], sizes = [16, 16], strides = [1, 1]} : vector<22x16xf32> to vector<16x16xf32>
    %222 = vector.broadcast %220 : f32 to vector<16x16xf32>
    %223 = arith.mulf %222, %221 : vector<16x16xf32>
    %224 = arith.addf %219, %223 : vector<16x16xf32>
    %c22 = arith.constant 22 : index
    %225 = memref.load %arg1[%c22] : memref<98xf32, #tpu.memory_space<smem>>
    %226 = vector.extract_strided_slice %209 {offsets = [3, 0], sizes = [16, 16], strides = [1, 1]} : vector<22x16xf32> to vector<16x16xf32>
    %227 = vector.broadcast %225 : f32 to vector<16x16xf32>
    %228 = arith.mulf %227, %226 : vector<16x16xf32>
    %229 = arith.addf %224, %228 : vector<16x16xf32>
    %c29 = arith.constant 29 : index
    %230 = memref.load %arg1[%c29] : memref<98xf32, #tpu.memory_space<smem>>
    %231 = vector.extract_strided_slice %209 {offsets = [4, 0], sizes = [16, 16], strides = [1, 1]} : vector<22x16xf32> to vector<16x16xf32>
    %232 = vector.broadcast %230 : f32 to vector<16x16xf32>
    %233 = arith.mulf %232, %231 : vector<16x16xf32>
    %234 = arith.addf %229, %233 : vector<16x16xf32>
    %c36 = arith.constant 36 : index
    %235 = memref.load %arg1[%c36] : memref<98xf32, #tpu.memory_space<smem>>
    %236 = vector.extract_strided_slice %209 {offsets = [5, 0], sizes = [16, 16], strides = [1, 1]} : vector<22x16xf32> to vector<16x16xf32>
    %237 = vector.broadcast %235 : f32 to vector<16x16xf32>
    %238 = arith.mulf %237, %236 : vector<16x16xf32>
    %239 = arith.addf %234, %238 : vector<16x16xf32>
    %c43 = arith.constant 43 : index
    %240 = memref.load %arg1[%c43] : memref<98xf32, #tpu.memory_space<smem>>
    %241 = vector.extract_strided_slice %209 {offsets = [6, 0], sizes = [16, 16], strides = [1, 1]} : vector<22x16xf32> to vector<16x16xf32>
    %242 = vector.broadcast %240 : f32 to vector<16x16xf32>
    %243 = arith.mulf %242, %241 : vector<16x16xf32>
    %244 = arith.addf %239, %243 : vector<16x16xf32>
    %c0_100 = arith.constant 0 : index
    %c0_101 = arith.constant 0 : index
    %c2 = arith.constant 2 : index
    %245 = vector.load %arg5[%c0_100, %c0_101, %c2] : memref<2x22x22xf32, #tpu.memory_space<vmem>>, vector<1x22x16xf32>
    %246 = vector.shape_cast %245 : vector<1x22x16xf32> to vector<22x16xf32>
    %c2_102 = arith.constant 2 : index
    %247 = memref.load %arg1[%c2_102] : memref<98xf32, #tpu.memory_space<smem>>
    %248 = vector.extract_strided_slice %246 {offsets = [0, 0], sizes = [16, 16], strides = [1, 1]} : vector<22x16xf32> to vector<16x16xf32>
    %249 = vector.broadcast %247 : f32 to vector<16x16xf32>
    %250 = arith.mulf %249, %248 : vector<16x16xf32>
    %251 = arith.addf %244, %250 : vector<16x16xf32>
    %c9_103 = arith.constant 9 : index
    %252 = memref.load %arg1[%c9_103] : memref<98xf32, #tpu.memory_space<smem>>
    %253 = vector.extract_strided_slice %246 {offsets = [1, 0], sizes = [16, 16], strides = [1, 1]} : vector<22x16xf32> to vector<16x16xf32>
    %254 = vector.broadcast %252 : f32 to vector<16x16xf32>
    %255 = arith.mulf %254, %253 : vector<16x16xf32>
    %256 = arith.addf %251, %255 : vector<16x16xf32>
    %c16_104 = arith.constant 16 : index
    %257 = memref.load %arg1[%c16_104] : memref<98xf32, #tpu.memory_space<smem>>
    %258 = vector.extract_strided_slice %246 {offsets = [2, 0], sizes = [16, 16], strides = [1, 1]} : vector<22x16xf32> to vector<16x16xf32>
    %259 = vector.broadcast %257 : f32 to vector<16x16xf32>
    %260 = arith.mulf %259, %258 : vector<16x16xf32>
    %261 = arith.addf %256, %260 : vector<16x16xf32>
    %c23 = arith.constant 23 : index
    %262 = memref.load %arg1[%c23] : memref<98xf32, #tpu.memory_space<smem>>
    %263 = vector.extract_strided_slice %246 {offsets = [3, 0], sizes = [16, 16], strides = [1, 1]} : vector<22x16xf32> to vector<16x16xf32>
    %264 = vector.broadcast %262 : f32 to vector<16x16xf32>
    %265 = arith.mulf %264, %263 : vector<16x16xf32>
    %266 = arith.addf %261, %265 : vector<16x16xf32>
    %c30 = arith.constant 30 : index
    %267 = memref.load %arg1[%c30] : memref<98xf32, #tpu.memory_space<smem>>
    %268 = vector.extract_strided_slice %246 {offsets = [4, 0], sizes = [16, 16], strides = [1, 1]} : vector<22x16xf32> to vector<16x16xf32>
    %269 = vector.broadcast %267 : f32 to vector<16x16xf32>
    %270 = arith.mulf %269, %268 : vector<16x16xf32>
    %271 = arith.addf %266, %270 : vector<16x16xf32>
    %c37 = arith.constant 37 : index
    %272 = memref.load %arg1[%c37] : memref<98xf32, #tpu.memory_space<smem>>
    %273 = vector.extract_strided_slice %246 {offsets = [5, 0], sizes = [16, 16], strides = [1, 1]} : vector<22x16xf32> to vector<16x16xf32>
    %274 = vector.broadcast %272 : f32 to vector<16x16xf32>
    %275 = arith.mulf %274, %273 : vector<16x16xf32>
    %276 = arith.addf %271, %275 : vector<16x16xf32>
    %c44 = arith.constant 44 : index
    %277 = memref.load %arg1[%c44] : memref<98xf32, #tpu.memory_space<smem>>
    %278 = vector.extract_strided_slice %246 {offsets = [6, 0], sizes = [16, 16], strides = [1, 1]} : vector<22x16xf32> to vector<16x16xf32>
    %279 = vector.broadcast %277 : f32 to vector<16x16xf32>
    %280 = arith.mulf %279, %278 : vector<16x16xf32>
    %281 = arith.addf %276, %280 : vector<16x16xf32>
    %c0_105 = arith.constant 0 : index
    %c0_106 = arith.constant 0 : index
    %c3_107 = arith.constant 3 : index
    %282 = vector.load %arg5[%c0_105, %c0_106, %c3_107] : memref<2x22x22xf32, #tpu.memory_space<vmem>>, vector<1x22x16xf32>
    %283 = vector.shape_cast %282 : vector<1x22x16xf32> to vector<22x16xf32>
    %c3_108 = arith.constant 3 : index
    %284 = memref.load %arg1[%c3_108] : memref<98xf32, #tpu.memory_space<smem>>
    %285 = vector.extract_strided_slice %283 {offsets = [0, 0], sizes = [16, 16], strides = [1, 1]} : vector<22x16xf32> to vector<16x16xf32>
    %286 = vector.broadcast %284 : f32 to vector<16x16xf32>
    %287 = arith.mulf %286, %285 : vector<16x16xf32>
    %288 = arith.addf %281, %287 : vector<16x16xf32>
    %c10_109 = arith.constant 10 : index
    %289 = memref.load %arg1[%c10_109] : memref<98xf32, #tpu.memory_space<smem>>
    %290 = vector.extract_strided_slice %283 {offsets = [1, 0], sizes = [16, 16], strides = [1, 1]} : vector<22x16xf32> to vector<16x16xf32>
    %291 = vector.broadcast %289 : f32 to vector<16x16xf32>
    %292 = arith.mulf %291, %290 : vector<16x16xf32>
    %293 = arith.addf %288, %292 : vector<16x16xf32>
    %c17_110 = arith.constant 17 : index
    %294 = memref.load %arg1[%c17_110] : memref<98xf32, #tpu.memory_space<smem>>
    %295 = vector.extract_strided_slice %283 {offsets = [2, 0], sizes = [16, 16], strides = [1, 1]} : vector<22x16xf32> to vector<16x16xf32>
    %296 = vector.broadcast %294 : f32 to vector<16x16xf32>
    %297 = arith.mulf %296, %295 : vector<16x16xf32>
    %298 = arith.addf %293, %297 : vector<16x16xf32>
    %c24 = arith.constant 24 : index
    %299 = memref.load %arg1[%c24] : memref<98xf32, #tpu.memory_space<smem>>
    %300 = vector.extract_strided_slice %283 {offsets = [3, 0], sizes = [16, 16], strides = [1, 1]} : vector<22x16xf32> to vector<16x16xf32>
    %301 = vector.broadcast %299 : f32 to vector<16x16xf32>
    %302 = arith.mulf %301, %300 : vector<16x16xf32>
    %303 = arith.addf %298, %302 : vector<16x16xf32>
    %c31 = arith.constant 31 : index
    %304 = memref.load %arg1[%c31] : memref<98xf32, #tpu.memory_space<smem>>
    %305 = vector.extract_strided_slice %283 {offsets = [4, 0], sizes = [16, 16], strides = [1, 1]} : vector<22x16xf32> to vector<16x16xf32>
    %306 = vector.broadcast %304 : f32 to vector<16x16xf32>
    %307 = arith.mulf %306, %305 : vector<16x16xf32>
    %308 = arith.addf %303, %307 : vector<16x16xf32>
    %c38 = arith.constant 38 : index
    %309 = memref.load %arg1[%c38] : memref<98xf32, #tpu.memory_space<smem>>
    %310 = vector.extract_strided_slice %283 {offsets = [5, 0], sizes = [16, 16], strides = [1, 1]} : vector<22x16xf32> to vector<16x16xf32>
    %311 = vector.broadcast %309 : f32 to vector<16x16xf32>
    %312 = arith.mulf %311, %310 : vector<16x16xf32>
    %313 = arith.addf %308, %312 : vector<16x16xf32>
    %c45 = arith.constant 45 : index
    %314 = memref.load %arg1[%c45] : memref<98xf32, #tpu.memory_space<smem>>
    %315 = vector.extract_strided_slice %283 {offsets = [6, 0], sizes = [16, 16], strides = [1, 1]} : vector<22x16xf32> to vector<16x16xf32>
    %316 = vector.broadcast %314 : f32 to vector<16x16xf32>
    %317 = arith.mulf %316, %315 : vector<16x16xf32>
    %318 = arith.addf %313, %317 : vector<16x16xf32>
    %c0_111 = arith.constant 0 : index
    %c0_112 = arith.constant 0 : index
    %c4_113 = arith.constant 4 : index
    %319 = vector.load %arg5[%c0_111, %c0_112, %c4_113] : memref<2x22x22xf32, #tpu.memory_space<vmem>>, vector<1x22x16xf32>
    %320 = vector.shape_cast %319 : vector<1x22x16xf32> to vector<22x16xf32>
    %c4_114 = arith.constant 4 : index
    %321 = memref.load %arg1[%c4_114] : memref<98xf32, #tpu.memory_space<smem>>
    %322 = vector.extract_strided_slice %320 {offsets = [0, 0], sizes = [16, 16], strides = [1, 1]} : vector<22x16xf32> to vector<16x16xf32>
    %323 = vector.broadcast %321 : f32 to vector<16x16xf32>
    %324 = arith.mulf %323, %322 : vector<16x16xf32>
    %325 = arith.addf %318, %324 : vector<16x16xf32>
    %c11_115 = arith.constant 11 : index
    %326 = memref.load %arg1[%c11_115] : memref<98xf32, #tpu.memory_space<smem>>
    %327 = vector.extract_strided_slice %320 {offsets = [1, 0], sizes = [16, 16], strides = [1, 1]} : vector<22x16xf32> to vector<16x16xf32>
    %328 = vector.broadcast %326 : f32 to vector<16x16xf32>
    %329 = arith.mulf %328, %327 : vector<16x16xf32>
    %330 = arith.addf %325, %329 : vector<16x16xf32>
    %c18_116 = arith.constant 18 : index
    %331 = memref.load %arg1[%c18_116] : memref<98xf32, #tpu.memory_space<smem>>
    %332 = vector.extract_strided_slice %320 {offsets = [2, 0], sizes = [16, 16], strides = [1, 1]} : vector<22x16xf32> to vector<16x16xf32>
    %333 = vector.broadcast %331 : f32 to vector<16x16xf32>
    %334 = arith.mulf %333, %332 : vector<16x16xf32>
    %335 = arith.addf %330, %334 : vector<16x16xf32>
    %c25 = arith.constant 25 : index
    %336 = memref.load %arg1[%c25] : memref<98xf32, #tpu.memory_space<smem>>
    %337 = vector.extract_strided_slice %320 {offsets = [3, 0], sizes = [16, 16], strides = [1, 1]} : vector<22x16xf32> to vector<16x16xf32>
    %338 = vector.broadcast %336 : f32 to vector<16x16xf32>
    %339 = arith.mulf %338, %337 : vector<16x16xf32>
    %340 = arith.addf %335, %339 : vector<16x16xf32>
    %c32 = arith.constant 32 : index
    %341 = memref.load %arg1[%c32] : memref<98xf32, #tpu.memory_space<smem>>
    %342 = vector.extract_strided_slice %320 {offsets = [4, 0], sizes = [16, 16], strides = [1, 1]} : vector<22x16xf32> to vector<16x16xf32>
    %343 = vector.broadcast %341 : f32 to vector<16x16xf32>
    %344 = arith.mulf %343, %342 : vector<16x16xf32>
    %345 = arith.addf %340, %344 : vector<16x16xf32>
    %c39 = arith.constant 39 : index
    %346 = memref.load %arg1[%c39] : memref<98xf32, #tpu.memory_space<smem>>
    %347 = vector.extract_strided_slice %320 {offsets = [5, 0], sizes = [16, 16], strides = [1, 1]} : vector<22x16xf32> to vector<16x16xf32>
    %348 = vector.broadcast %346 : f32 to vector<16x16xf32>
    %349 = arith.mulf %348, %347 : vector<16x16xf32>
    %350 = arith.addf %345, %349 : vector<16x16xf32>
    %c46 = arith.constant 46 : index
    %351 = memref.load %arg1[%c46] : memref<98xf32, #tpu.memory_space<smem>>
    %352 = vector.extract_strided_slice %320 {offsets = [6, 0], sizes = [16, 16], strides = [1, 1]} : vector<22x16xf32> to vector<16x16xf32>
    %353 = vector.broadcast %351 : f32 to vector<16x16xf32>
    %354 = arith.mulf %353, %352 : vector<16x16xf32>
    %355 = arith.addf %350, %354 : vector<16x16xf32>
    %c0_117 = arith.constant 0 : index
    %c0_118 = arith.constant 0 : index
    %c5_119 = arith.constant 5 : index
    %356 = vector.load %arg5[%c0_117, %c0_118, %c5_119] : memref<2x22x22xf32, #tpu.memory_space<vmem>>, vector<1x22x16xf32>
    %357 = vector.shape_cast %356 : vector<1x22x16xf32> to vector<22x16xf32>
    %c5_120 = arith.constant 5 : index
    %358 = memref.load %arg1[%c5_120] : memref<98xf32, #tpu.memory_space<smem>>
    %359 = vector.extract_strided_slice %357 {offsets = [0, 0], sizes = [16, 16], strides = [1, 1]} : vector<22x16xf32> to vector<16x16xf32>
    %360 = vector.broadcast %358 : f32 to vector<16x16xf32>
    %361 = arith.mulf %360, %359 : vector<16x16xf32>
    %362 = arith.addf %355, %361 : vector<16x16xf32>
    %c12_121 = arith.constant 12 : index
    %363 = memref.load %arg1[%c12_121] : memref<98xf32, #tpu.memory_space<smem>>
    %364 = vector.extract_strided_slice %357 {offsets = [1, 0], sizes = [16, 16], strides = [1, 1]} : vector<22x16xf32> to vector<16x16xf32>
    %365 = vector.broadcast %363 : f32 to vector<16x16xf32>
    %366 = arith.mulf %365, %364 : vector<16x16xf32>
    %367 = arith.addf %362, %366 : vector<16x16xf32>
    %c19 = arith.constant 19 : index
    %368 = memref.load %arg1[%c19] : memref<98xf32, #tpu.memory_space<smem>>
    %369 = vector.extract_strided_slice %357 {offsets = [2, 0], sizes = [16, 16], strides = [1, 1]} : vector<22x16xf32> to vector<16x16xf32>
    %370 = vector.broadcast %368 : f32 to vector<16x16xf32>
    %371 = arith.mulf %370, %369 : vector<16x16xf32>
    %372 = arith.addf %367, %371 : vector<16x16xf32>
    %c26 = arith.constant 26 : index
    %373 = memref.load %arg1[%c26] : memref<98xf32, #tpu.memory_space<smem>>
    %374 = vector.extract_strided_slice %357 {offsets = [3, 0], sizes = [16, 16], strides = [1, 1]} : vector<22x16xf32> to vector<16x16xf32>
    %375 = vector.broadcast %373 : f32 to vector<16x16xf32>
    %376 = arith.mulf %375, %374 : vector<16x16xf32>
    %377 = arith.addf %372, %376 : vector<16x16xf32>
    %c33 = arith.constant 33 : index
    %378 = memref.load %arg1[%c33] : memref<98xf32, #tpu.memory_space<smem>>
    %379 = vector.extract_strided_slice %357 {offsets = [4, 0], sizes = [16, 16], strides = [1, 1]} : vector<22x16xf32> to vector<16x16xf32>
    %380 = vector.broadcast %378 : f32 to vector<16x16xf32>
    %381 = arith.mulf %380, %379 : vector<16x16xf32>
    %382 = arith.addf %377, %381 : vector<16x16xf32>
    %c40 = arith.constant 40 : index
    %383 = memref.load %arg1[%c40] : memref<98xf32, #tpu.memory_space<smem>>
    %384 = vector.extract_strided_slice %357 {offsets = [5, 0], sizes = [16, 16], strides = [1, 1]} : vector<22x16xf32> to vector<16x16xf32>
    %385 = vector.broadcast %383 : f32 to vector<16x16xf32>
    %386 = arith.mulf %385, %384 : vector<16x16xf32>
    %387 = arith.addf %382, %386 : vector<16x16xf32>
    %c47 = arith.constant 47 : index
    %388 = memref.load %arg1[%c47] : memref<98xf32, #tpu.memory_space<smem>>
    %389 = vector.extract_strided_slice %357 {offsets = [6, 0], sizes = [16, 16], strides = [1, 1]} : vector<22x16xf32> to vector<16x16xf32>
    %390 = vector.broadcast %388 : f32 to vector<16x16xf32>
    %391 = arith.mulf %390, %389 : vector<16x16xf32>
    %392 = arith.addf %387, %391 : vector<16x16xf32>
    %c0_122 = arith.constant 0 : index
    %c0_123 = arith.constant 0 : index
    %c6_124 = arith.constant 6 : index
    %393 = vector.load %arg5[%c0_122, %c0_123, %c6_124] : memref<2x22x22xf32, #tpu.memory_space<vmem>>, vector<1x22x16xf32>
    %394 = vector.shape_cast %393 : vector<1x22x16xf32> to vector<22x16xf32>
    %c6_125 = arith.constant 6 : index
    %395 = memref.load %arg1[%c6_125] : memref<98xf32, #tpu.memory_space<smem>>
    %396 = vector.extract_strided_slice %394 {offsets = [0, 0], sizes = [16, 16], strides = [1, 1]} : vector<22x16xf32> to vector<16x16xf32>
    %397 = vector.broadcast %395 : f32 to vector<16x16xf32>
    %398 = arith.mulf %397, %396 : vector<16x16xf32>
    %399 = arith.addf %392, %398 : vector<16x16xf32>
    %c13_126 = arith.constant 13 : index
    %400 = memref.load %arg1[%c13_126] : memref<98xf32, #tpu.memory_space<smem>>
    %401 = vector.extract_strided_slice %394 {offsets = [1, 0], sizes = [16, 16], strides = [1, 1]} : vector<22x16xf32> to vector<16x16xf32>
    %402 = vector.broadcast %400 : f32 to vector<16x16xf32>
    %403 = arith.mulf %402, %401 : vector<16x16xf32>
    %404 = arith.addf %399, %403 : vector<16x16xf32>
    %c20 = arith.constant 20 : index
    %405 = memref.load %arg1[%c20] : memref<98xf32, #tpu.memory_space<smem>>
    %406 = vector.extract_strided_slice %394 {offsets = [2, 0], sizes = [16, 16], strides = [1, 1]} : vector<22x16xf32> to vector<16x16xf32>
    %407 = vector.broadcast %405 : f32 to vector<16x16xf32>
    %408 = arith.mulf %407, %406 : vector<16x16xf32>
    %409 = arith.addf %404, %408 : vector<16x16xf32>
    %c27 = arith.constant 27 : index
    %410 = memref.load %arg1[%c27] : memref<98xf32, #tpu.memory_space<smem>>
    %411 = vector.extract_strided_slice %394 {offsets = [3, 0], sizes = [16, 16], strides = [1, 1]} : vector<22x16xf32> to vector<16x16xf32>
    %412 = vector.broadcast %410 : f32 to vector<16x16xf32>
    %413 = arith.mulf %412, %411 : vector<16x16xf32>
    %414 = arith.addf %409, %413 : vector<16x16xf32>
    %c34 = arith.constant 34 : index
    %415 = memref.load %arg1[%c34] : memref<98xf32, #tpu.memory_space<smem>>
    %416 = vector.extract_strided_slice %394 {offsets = [4, 0], sizes = [16, 16], strides = [1, 1]} : vector<22x16xf32> to vector<16x16xf32>
    %417 = vector.broadcast %415 : f32 to vector<16x16xf32>
    %418 = arith.mulf %417, %416 : vector<16x16xf32>
    %419 = arith.addf %414, %418 : vector<16x16xf32>
    %c41 = arith.constant 41 : index
    %420 = memref.load %arg1[%c41] : memref<98xf32, #tpu.memory_space<smem>>
    %421 = vector.extract_strided_slice %394 {offsets = [5, 0], sizes = [16, 16], strides = [1, 1]} : vector<22x16xf32> to vector<16x16xf32>
    %422 = vector.broadcast %420 : f32 to vector<16x16xf32>
    %423 = arith.mulf %422, %421 : vector<16x16xf32>
    %424 = arith.addf %419, %423 : vector<16x16xf32>
    %c48 = arith.constant 48 : index
    %425 = memref.load %arg1[%c48] : memref<98xf32, #tpu.memory_space<smem>>
    %426 = vector.extract_strided_slice %394 {offsets = [6, 0], sizes = [16, 16], strides = [1, 1]} : vector<22x16xf32> to vector<16x16xf32>
    %427 = vector.broadcast %425 : f32 to vector<16x16xf32>
    %428 = arith.mulf %427, %426 : vector<16x16xf32>
    %429 = arith.addf %424, %428 : vector<16x16xf32>
    %c1_127 = arith.constant 1 : index
    %c0_128 = arith.constant 0 : index
    %c0_129 = arith.constant 0 : index
    %430 = vector.load %arg5[%c1_127, %c0_128, %c0_129] : memref<2x22x22xf32, #tpu.memory_space<vmem>>, vector<1x22x16xf32>
    %431 = vector.shape_cast %430 : vector<1x22x16xf32> to vector<22x16xf32>
    %c49 = arith.constant 49 : index
    %432 = memref.load %arg1[%c49] : memref<98xf32, #tpu.memory_space<smem>>
    %433 = vector.extract_strided_slice %431 {offsets = [0, 0], sizes = [16, 16], strides = [1, 1]} : vector<22x16xf32> to vector<16x16xf32>
    %434 = vector.broadcast %432 : f32 to vector<16x16xf32>
    %435 = arith.mulf %434, %433 : vector<16x16xf32>
    %436 = arith.addf %429, %435 : vector<16x16xf32>
    %c56 = arith.constant 56 : index
    %437 = memref.load %arg1[%c56] : memref<98xf32, #tpu.memory_space<smem>>
    %438 = vector.extract_strided_slice %431 {offsets = [1, 0], sizes = [16, 16], strides = [1, 1]} : vector<22x16xf32> to vector<16x16xf32>
    %439 = vector.broadcast %437 : f32 to vector<16x16xf32>
    %440 = arith.mulf %439, %438 : vector<16x16xf32>
    %441 = arith.addf %436, %440 : vector<16x16xf32>
    %c63 = arith.constant 63 : index
    %442 = memref.load %arg1[%c63] : memref<98xf32, #tpu.memory_space<smem>>
    %443 = vector.extract_strided_slice %431 {offsets = [2, 0], sizes = [16, 16], strides = [1, 1]} : vector<22x16xf32> to vector<16x16xf32>
    %444 = vector.broadcast %442 : f32 to vector<16x16xf32>
    %445 = arith.mulf %444, %443 : vector<16x16xf32>
    %446 = arith.addf %441, %445 : vector<16x16xf32>
    %c70 = arith.constant 70 : index
    %447 = memref.load %arg1[%c70] : memref<98xf32, #tpu.memory_space<smem>>
    %448 = vector.extract_strided_slice %431 {offsets = [3, 0], sizes = [16, 16], strides = [1, 1]} : vector<22x16xf32> to vector<16x16xf32>
    %449 = vector.broadcast %447 : f32 to vector<16x16xf32>
    %450 = arith.mulf %449, %448 : vector<16x16xf32>
    %451 = arith.addf %446, %450 : vector<16x16xf32>
    %c77 = arith.constant 77 : index
    %452 = memref.load %arg1[%c77] : memref<98xf32, #tpu.memory_space<smem>>
    %453 = vector.extract_strided_slice %431 {offsets = [4, 0], sizes = [16, 16], strides = [1, 1]} : vector<22x16xf32> to vector<16x16xf32>
    %454 = vector.broadcast %452 : f32 to vector<16x16xf32>
    %455 = arith.mulf %454, %453 : vector<16x16xf32>
    %456 = arith.addf %451, %455 : vector<16x16xf32>
    %c84 = arith.constant 84 : index
    %457 = memref.load %arg1[%c84] : memref<98xf32, #tpu.memory_space<smem>>
    %458 = vector.extract_strided_slice %431 {offsets = [5, 0], sizes = [16, 16], strides = [1, 1]} : vector<22x16xf32> to vector<16x16xf32>
    %459 = vector.broadcast %457 : f32 to vector<16x16xf32>
    %460 = arith.mulf %459, %458 : vector<16x16xf32>
    %461 = arith.addf %456, %460 : vector<16x16xf32>
    %c91 = arith.constant 91 : index
    %462 = memref.load %arg1[%c91] : memref<98xf32, #tpu.memory_space<smem>>
    %463 = vector.extract_strided_slice %431 {offsets = [6, 0], sizes = [16, 16], strides = [1, 1]} : vector<22x16xf32> to vector<16x16xf32>
    %464 = vector.broadcast %462 : f32 to vector<16x16xf32>
    %465 = arith.mulf %464, %463 : vector<16x16xf32>
    %466 = arith.addf %461, %465 : vector<16x16xf32>
    %c1_130 = arith.constant 1 : index
    %c0_131 = arith.constant 0 : index
    %c1_132 = arith.constant 1 : index
    %467 = vector.load %arg5[%c1_130, %c0_131, %c1_132] : memref<2x22x22xf32, #tpu.memory_space<vmem>>, vector<1x22x16xf32>
    %468 = vector.shape_cast %467 : vector<1x22x16xf32> to vector<22x16xf32>
    %c50 = arith.constant 50 : index
    %469 = memref.load %arg1[%c50] : memref<98xf32, #tpu.memory_space<smem>>
    %470 = vector.extract_strided_slice %468 {offsets = [0, 0], sizes = [16, 16], strides = [1, 1]} : vector<22x16xf32> to vector<16x16xf32>
    %471 = vector.broadcast %469 : f32 to vector<16x16xf32>
    %472 = arith.mulf %471, %470 : vector<16x16xf32>
    %473 = arith.addf %466, %472 : vector<16x16xf32>
    %c57 = arith.constant 57 : index
    %474 = memref.load %arg1[%c57] : memref<98xf32, #tpu.memory_space<smem>>
    %475 = vector.extract_strided_slice %468 {offsets = [1, 0], sizes = [16, 16], strides = [1, 1]} : vector<22x16xf32> to vector<16x16xf32>
    %476 = vector.broadcast %474 : f32 to vector<16x16xf32>
    %477 = arith.mulf %476, %475 : vector<16x16xf32>
    %478 = arith.addf %473, %477 : vector<16x16xf32>
    %c64 = arith.constant 64 : index
    %479 = memref.load %arg1[%c64] : memref<98xf32, #tpu.memory_space<smem>>
    %480 = vector.extract_strided_slice %468 {offsets = [2, 0], sizes = [16, 16], strides = [1, 1]} : vector<22x16xf32> to vector<16x16xf32>
    %481 = vector.broadcast %479 : f32 to vector<16x16xf32>
    %482 = arith.mulf %481, %480 : vector<16x16xf32>
    %483 = arith.addf %478, %482 : vector<16x16xf32>
    %c71 = arith.constant 71 : index
    %484 = memref.load %arg1[%c71] : memref<98xf32, #tpu.memory_space<smem>>
    %485 = vector.extract_strided_slice %468 {offsets = [3, 0], sizes = [16, 16], strides = [1, 1]} : vector<22x16xf32> to vector<16x16xf32>
    %486 = vector.broadcast %484 : f32 to vector<16x16xf32>
    %487 = arith.mulf %486, %485 : vector<16x16xf32>
    %488 = arith.addf %483, %487 : vector<16x16xf32>
    %c78 = arith.constant 78 : index
    %489 = memref.load %arg1[%c78] : memref<98xf32, #tpu.memory_space<smem>>
    %490 = vector.extract_strided_slice %468 {offsets = [4, 0], sizes = [16, 16], strides = [1, 1]} : vector<22x16xf32> to vector<16x16xf32>
    %491 = vector.broadcast %489 : f32 to vector<16x16xf32>
    %492 = arith.mulf %491, %490 : vector<16x16xf32>
    %493 = arith.addf %488, %492 : vector<16x16xf32>
    %c85 = arith.constant 85 : index
    %494 = memref.load %arg1[%c85] : memref<98xf32, #tpu.memory_space<smem>>
    %495 = vector.extract_strided_slice %468 {offsets = [5, 0], sizes = [16, 16], strides = [1, 1]} : vector<22x16xf32> to vector<16x16xf32>
    %496 = vector.broadcast %494 : f32 to vector<16x16xf32>
    %497 = arith.mulf %496, %495 : vector<16x16xf32>
    %498 = arith.addf %493, %497 : vector<16x16xf32>
    %c92 = arith.constant 92 : index
    %499 = memref.load %arg1[%c92] : memref<98xf32, #tpu.memory_space<smem>>
    %500 = vector.extract_strided_slice %468 {offsets = [6, 0], sizes = [16, 16], strides = [1, 1]} : vector<22x16xf32> to vector<16x16xf32>
    %501 = vector.broadcast %499 : f32 to vector<16x16xf32>
    %502 = arith.mulf %501, %500 : vector<16x16xf32>
    %503 = arith.addf %498, %502 : vector<16x16xf32>
    %c1_133 = arith.constant 1 : index
    %c0_134 = arith.constant 0 : index
    %c2_135 = arith.constant 2 : index
    %504 = vector.load %arg5[%c1_133, %c0_134, %c2_135] : memref<2x22x22xf32, #tpu.memory_space<vmem>>, vector<1x22x16xf32>
    %505 = vector.shape_cast %504 : vector<1x22x16xf32> to vector<22x16xf32>
    %c51 = arith.constant 51 : index
    %506 = memref.load %arg1[%c51] : memref<98xf32, #tpu.memory_space<smem>>
    %507 = vector.extract_strided_slice %505 {offsets = [0, 0], sizes = [16, 16], strides = [1, 1]} : vector<22x16xf32> to vector<16x16xf32>
    %508 = vector.broadcast %506 : f32 to vector<16x16xf32>
    %509 = arith.mulf %508, %507 : vector<16x16xf32>
    %510 = arith.addf %503, %509 : vector<16x16xf32>
    %c58 = arith.constant 58 : index
    %511 = memref.load %arg1[%c58] : memref<98xf32, #tpu.memory_space<smem>>
    %512 = vector.extract_strided_slice %505 {offsets = [1, 0], sizes = [16, 16], strides = [1, 1]} : vector<22x16xf32> to vector<16x16xf32>
    %513 = vector.broadcast %511 : f32 to vector<16x16xf32>
    %514 = arith.mulf %513, %512 : vector<16x16xf32>
    %515 = arith.addf %510, %514 : vector<16x16xf32>
    %c65 = arith.constant 65 : index
    %516 = memref.load %arg1[%c65] : memref<98xf32, #tpu.memory_space<smem>>
    %517 = vector.extract_strided_slice %505 {offsets = [2, 0], sizes = [16, 16], strides = [1, 1]} : vector<22x16xf32> to vector<16x16xf32>
    %518 = vector.broadcast %516 : f32 to vector<16x16xf32>
    %519 = arith.mulf %518, %517 : vector<16x16xf32>
    %520 = arith.addf %515, %519 : vector<16x16xf32>
    %c72 = arith.constant 72 : index
    %521 = memref.load %arg1[%c72] : memref<98xf32, #tpu.memory_space<smem>>
    %522 = vector.extract_strided_slice %505 {offsets = [3, 0], sizes = [16, 16], strides = [1, 1]} : vector<22x16xf32> to vector<16x16xf32>
    %523 = vector.broadcast %521 : f32 to vector<16x16xf32>
    %524 = arith.mulf %523, %522 : vector<16x16xf32>
    %525 = arith.addf %520, %524 : vector<16x16xf32>
    %c79 = arith.constant 79 : index
    %526 = memref.load %arg1[%c79] : memref<98xf32, #tpu.memory_space<smem>>
    %527 = vector.extract_strided_slice %505 {offsets = [4, 0], sizes = [16, 16], strides = [1, 1]} : vector<22x16xf32> to vector<16x16xf32>
    %528 = vector.broadcast %526 : f32 to vector<16x16xf32>
    %529 = arith.mulf %528, %527 : vector<16x16xf32>
    %530 = arith.addf %525, %529 : vector<16x16xf32>
    %c86 = arith.constant 86 : index
    %531 = memref.load %arg1[%c86] : memref<98xf32, #tpu.memory_space<smem>>
    %532 = vector.extract_strided_slice %505 {offsets = [5, 0], sizes = [16, 16], strides = [1, 1]} : vector<22x16xf32> to vector<16x16xf32>
    %533 = vector.broadcast %531 : f32 to vector<16x16xf32>
    %534 = arith.mulf %533, %532 : vector<16x16xf32>
    %535 = arith.addf %530, %534 : vector<16x16xf32>
    %c93 = arith.constant 93 : index
    %536 = memref.load %arg1[%c93] : memref<98xf32, #tpu.memory_space<smem>>
    %537 = vector.extract_strided_slice %505 {offsets = [6, 0], sizes = [16, 16], strides = [1, 1]} : vector<22x16xf32> to vector<16x16xf32>
    %538 = vector.broadcast %536 : f32 to vector<16x16xf32>
    %539 = arith.mulf %538, %537 : vector<16x16xf32>
    %540 = arith.addf %535, %539 : vector<16x16xf32>
    %c1_136 = arith.constant 1 : index
    %c0_137 = arith.constant 0 : index
    %c3_138 = arith.constant 3 : index
    %541 = vector.load %arg5[%c1_136, %c0_137, %c3_138] : memref<2x22x22xf32, #tpu.memory_space<vmem>>, vector<1x22x16xf32>
    %542 = vector.shape_cast %541 : vector<1x22x16xf32> to vector<22x16xf32>
    %c52 = arith.constant 52 : index
    %543 = memref.load %arg1[%c52] : memref<98xf32, #tpu.memory_space<smem>>
    %544 = vector.extract_strided_slice %542 {offsets = [0, 0], sizes = [16, 16], strides = [1, 1]} : vector<22x16xf32> to vector<16x16xf32>
    %545 = vector.broadcast %543 : f32 to vector<16x16xf32>
    %546 = arith.mulf %545, %544 : vector<16x16xf32>
    %547 = arith.addf %540, %546 : vector<16x16xf32>
    %c59 = arith.constant 59 : index
    %548 = memref.load %arg1[%c59] : memref<98xf32, #tpu.memory_space<smem>>
    %549 = vector.extract_strided_slice %542 {offsets = [1, 0], sizes = [16, 16], strides = [1, 1]} : vector<22x16xf32> to vector<16x16xf32>
    %550 = vector.broadcast %548 : f32 to vector<16x16xf32>
    %551 = arith.mulf %550, %549 : vector<16x16xf32>
    %552 = arith.addf %547, %551 : vector<16x16xf32>
    %c66 = arith.constant 66 : index
    %553 = memref.load %arg1[%c66] : memref<98xf32, #tpu.memory_space<smem>>
    %554 = vector.extract_strided_slice %542 {offsets = [2, 0], sizes = [16, 16], strides = [1, 1]} : vector<22x16xf32> to vector<16x16xf32>
    %555 = vector.broadcast %553 : f32 to vector<16x16xf32>
    %556 = arith.mulf %555, %554 : vector<16x16xf32>
    %557 = arith.addf %552, %556 : vector<16x16xf32>
    %c73 = arith.constant 73 : index
    %558 = memref.load %arg1[%c73] : memref<98xf32, #tpu.memory_space<smem>>
    %559 = vector.extract_strided_slice %542 {offsets = [3, 0], sizes = [16, 16], strides = [1, 1]} : vector<22x16xf32> to vector<16x16xf32>
    %560 = vector.broadcast %558 : f32 to vector<16x16xf32>
    %561 = arith.mulf %560, %559 : vector<16x16xf32>
    %562 = arith.addf %557, %561 : vector<16x16xf32>
    %c80 = arith.constant 80 : index
    %563 = memref.load %arg1[%c80] : memref<98xf32, #tpu.memory_space<smem>>
    %564 = vector.extract_strided_slice %542 {offsets = [4, 0], sizes = [16, 16], strides = [1, 1]} : vector<22x16xf32> to vector<16x16xf32>
    %565 = vector.broadcast %563 : f32 to vector<16x16xf32>
    %566 = arith.mulf %565, %564 : vector<16x16xf32>
    %567 = arith.addf %562, %566 : vector<16x16xf32>
    %c87 = arith.constant 87 : index
    %568 = memref.load %arg1[%c87] : memref<98xf32, #tpu.memory_space<smem>>
    %569 = vector.extract_strided_slice %542 {offsets = [5, 0], sizes = [16, 16], strides = [1, 1]} : vector<22x16xf32> to vector<16x16xf32>
    %570 = vector.broadcast %568 : f32 to vector<16x16xf32>
    %571 = arith.mulf %570, %569 : vector<16x16xf32>
    %572 = arith.addf %567, %571 : vector<16x16xf32>
    %c94 = arith.constant 94 : index
    %573 = memref.load %arg1[%c94] : memref<98xf32, #tpu.memory_space<smem>>
    %574 = vector.extract_strided_slice %542 {offsets = [6, 0], sizes = [16, 16], strides = [1, 1]} : vector<22x16xf32> to vector<16x16xf32>
    %575 = vector.broadcast %573 : f32 to vector<16x16xf32>
    %576 = arith.mulf %575, %574 : vector<16x16xf32>
    %577 = arith.addf %572, %576 : vector<16x16xf32>
    %c1_139 = arith.constant 1 : index
    %c0_140 = arith.constant 0 : index
    %c4_141 = arith.constant 4 : index
    %578 = vector.load %arg5[%c1_139, %c0_140, %c4_141] : memref<2x22x22xf32, #tpu.memory_space<vmem>>, vector<1x22x16xf32>
    %579 = vector.shape_cast %578 : vector<1x22x16xf32> to vector<22x16xf32>
    %c53 = arith.constant 53 : index
    %580 = memref.load %arg1[%c53] : memref<98xf32, #tpu.memory_space<smem>>
    %581 = vector.extract_strided_slice %579 {offsets = [0, 0], sizes = [16, 16], strides = [1, 1]} : vector<22x16xf32> to vector<16x16xf32>
    %582 = vector.broadcast %580 : f32 to vector<16x16xf32>
    %583 = arith.mulf %582, %581 : vector<16x16xf32>
    %584 = arith.addf %577, %583 : vector<16x16xf32>
    %c60 = arith.constant 60 : index
    %585 = memref.load %arg1[%c60] : memref<98xf32, #tpu.memory_space<smem>>
    %586 = vector.extract_strided_slice %579 {offsets = [1, 0], sizes = [16, 16], strides = [1, 1]} : vector<22x16xf32> to vector<16x16xf32>
    %587 = vector.broadcast %585 : f32 to vector<16x16xf32>
    %588 = arith.mulf %587, %586 : vector<16x16xf32>
    %589 = arith.addf %584, %588 : vector<16x16xf32>
    %c67 = arith.constant 67 : index
    %590 = memref.load %arg1[%c67] : memref<98xf32, #tpu.memory_space<smem>>
    %591 = vector.extract_strided_slice %579 {offsets = [2, 0], sizes = [16, 16], strides = [1, 1]} : vector<22x16xf32> to vector<16x16xf32>
    %592 = vector.broadcast %590 : f32 to vector<16x16xf32>
    %593 = arith.mulf %592, %591 : vector<16x16xf32>
    %594 = arith.addf %589, %593 : vector<16x16xf32>
    %c74 = arith.constant 74 : index
    %595 = memref.load %arg1[%c74] : memref<98xf32, #tpu.memory_space<smem>>
    %596 = vector.extract_strided_slice %579 {offsets = [3, 0], sizes = [16, 16], strides = [1, 1]} : vector<22x16xf32> to vector<16x16xf32>
    %597 = vector.broadcast %595 : f32 to vector<16x16xf32>
    %598 = arith.mulf %597, %596 : vector<16x16xf32>
    %599 = arith.addf %594, %598 : vector<16x16xf32>
    %c81 = arith.constant 81 : index
    %600 = memref.load %arg1[%c81] : memref<98xf32, #tpu.memory_space<smem>>
    %601 = vector.extract_strided_slice %579 {offsets = [4, 0], sizes = [16, 16], strides = [1, 1]} : vector<22x16xf32> to vector<16x16xf32>
    %602 = vector.broadcast %600 : f32 to vector<16x16xf32>
    %603 = arith.mulf %602, %601 : vector<16x16xf32>
    %604 = arith.addf %599, %603 : vector<16x16xf32>
    %c88 = arith.constant 88 : index
    %605 = memref.load %arg1[%c88] : memref<98xf32, #tpu.memory_space<smem>>
    %606 = vector.extract_strided_slice %579 {offsets = [5, 0], sizes = [16, 16], strides = [1, 1]} : vector<22x16xf32> to vector<16x16xf32>
    %607 = vector.broadcast %605 : f32 to vector<16x16xf32>
    %608 = arith.mulf %607, %606 : vector<16x16xf32>
    %609 = arith.addf %604, %608 : vector<16x16xf32>
    %c95 = arith.constant 95 : index
    %610 = memref.load %arg1[%c95] : memref<98xf32, #tpu.memory_space<smem>>
    %611 = vector.extract_strided_slice %579 {offsets = [6, 0], sizes = [16, 16], strides = [1, 1]} : vector<22x16xf32> to vector<16x16xf32>
    %612 = vector.broadcast %610 : f32 to vector<16x16xf32>
    %613 = arith.mulf %612, %611 : vector<16x16xf32>
    %614 = arith.addf %609, %613 : vector<16x16xf32>
    %c1_142 = arith.constant 1 : index
    %c0_143 = arith.constant 0 : index
    %c5_144 = arith.constant 5 : index
    %615 = vector.load %arg5[%c1_142, %c0_143, %c5_144] : memref<2x22x22xf32, #tpu.memory_space<vmem>>, vector<1x22x16xf32>
    %616 = vector.shape_cast %615 : vector<1x22x16xf32> to vector<22x16xf32>
    %c54 = arith.constant 54 : index
    %617 = memref.load %arg1[%c54] : memref<98xf32, #tpu.memory_space<smem>>
    %618 = vector.extract_strided_slice %616 {offsets = [0, 0], sizes = [16, 16], strides = [1, 1]} : vector<22x16xf32> to vector<16x16xf32>
    %619 = vector.broadcast %617 : f32 to vector<16x16xf32>
    %620 = arith.mulf %619, %618 : vector<16x16xf32>
    %621 = arith.addf %614, %620 : vector<16x16xf32>
    %c61 = arith.constant 61 : index
    %622 = memref.load %arg1[%c61] : memref<98xf32, #tpu.memory_space<smem>>
    %623 = vector.extract_strided_slice %616 {offsets = [1, 0], sizes = [16, 16], strides = [1, 1]} : vector<22x16xf32> to vector<16x16xf32>
    %624 = vector.broadcast %622 : f32 to vector<16x16xf32>
    %625 = arith.mulf %624, %623 : vector<16x16xf32>
    %626 = arith.addf %621, %625 : vector<16x16xf32>
    %c68 = arith.constant 68 : index
    %627 = memref.load %arg1[%c68] : memref<98xf32, #tpu.memory_space<smem>>
    %628 = vector.extract_strided_slice %616 {offsets = [2, 0], sizes = [16, 16], strides = [1, 1]} : vector<22x16xf32> to vector<16x16xf32>
    %629 = vector.broadcast %627 : f32 to vector<16x16xf32>
    %630 = arith.mulf %629, %628 : vector<16x16xf32>
    %631 = arith.addf %626, %630 : vector<16x16xf32>
    %c75 = arith.constant 75 : index
    %632 = memref.load %arg1[%c75] : memref<98xf32, #tpu.memory_space<smem>>
    %633 = vector.extract_strided_slice %616 {offsets = [3, 0], sizes = [16, 16], strides = [1, 1]} : vector<22x16xf32> to vector<16x16xf32>
    %634 = vector.broadcast %632 : f32 to vector<16x16xf32>
    %635 = arith.mulf %634, %633 : vector<16x16xf32>
    %636 = arith.addf %631, %635 : vector<16x16xf32>
    %c82 = arith.constant 82 : index
    %637 = memref.load %arg1[%c82] : memref<98xf32, #tpu.memory_space<smem>>
    %638 = vector.extract_strided_slice %616 {offsets = [4, 0], sizes = [16, 16], strides = [1, 1]} : vector<22x16xf32> to vector<16x16xf32>
    %639 = vector.broadcast %637 : f32 to vector<16x16xf32>
    %640 = arith.mulf %639, %638 : vector<16x16xf32>
    %641 = arith.addf %636, %640 : vector<16x16xf32>
    %c89 = arith.constant 89 : index
    %642 = memref.load %arg1[%c89] : memref<98xf32, #tpu.memory_space<smem>>
    %643 = vector.extract_strided_slice %616 {offsets = [5, 0], sizes = [16, 16], strides = [1, 1]} : vector<22x16xf32> to vector<16x16xf32>
    %644 = vector.broadcast %642 : f32 to vector<16x16xf32>
    %645 = arith.mulf %644, %643 : vector<16x16xf32>
    %646 = arith.addf %641, %645 : vector<16x16xf32>
    %c96 = arith.constant 96 : index
    %647 = memref.load %arg1[%c96] : memref<98xf32, #tpu.memory_space<smem>>
    %648 = vector.extract_strided_slice %616 {offsets = [6, 0], sizes = [16, 16], strides = [1, 1]} : vector<22x16xf32> to vector<16x16xf32>
    %649 = vector.broadcast %647 : f32 to vector<16x16xf32>
    %650 = arith.mulf %649, %648 : vector<16x16xf32>
    %651 = arith.addf %646, %650 : vector<16x16xf32>
    %c1_145 = arith.constant 1 : index
    %c0_146 = arith.constant 0 : index
    %c6_147 = arith.constant 6 : index
    %652 = vector.load %arg5[%c1_145, %c0_146, %c6_147] : memref<2x22x22xf32, #tpu.memory_space<vmem>>, vector<1x22x16xf32>
    %653 = vector.shape_cast %652 : vector<1x22x16xf32> to vector<22x16xf32>
    %c55 = arith.constant 55 : index
    %654 = memref.load %arg1[%c55] : memref<98xf32, #tpu.memory_space<smem>>
    %655 = vector.extract_strided_slice %653 {offsets = [0, 0], sizes = [16, 16], strides = [1, 1]} : vector<22x16xf32> to vector<16x16xf32>
    %656 = vector.broadcast %654 : f32 to vector<16x16xf32>
    %657 = arith.mulf %656, %655 : vector<16x16xf32>
    %658 = arith.addf %651, %657 : vector<16x16xf32>
    %c62 = arith.constant 62 : index
    %659 = memref.load %arg1[%c62] : memref<98xf32, #tpu.memory_space<smem>>
    %660 = vector.extract_strided_slice %653 {offsets = [1, 0], sizes = [16, 16], strides = [1, 1]} : vector<22x16xf32> to vector<16x16xf32>
    %661 = vector.broadcast %659 : f32 to vector<16x16xf32>
    %662 = arith.mulf %661, %660 : vector<16x16xf32>
    %663 = arith.addf %658, %662 : vector<16x16xf32>
    %c69 = arith.constant 69 : index
    %664 = memref.load %arg1[%c69] : memref<98xf32, #tpu.memory_space<smem>>
    %665 = vector.extract_strided_slice %653 {offsets = [2, 0], sizes = [16, 16], strides = [1, 1]} : vector<22x16xf32> to vector<16x16xf32>
    %666 = vector.broadcast %664 : f32 to vector<16x16xf32>
    %667 = arith.mulf %666, %665 : vector<16x16xf32>
    %668 = arith.addf %663, %667 : vector<16x16xf32>
    %c76 = arith.constant 76 : index
    %669 = memref.load %arg1[%c76] : memref<98xf32, #tpu.memory_space<smem>>
    %670 = vector.extract_strided_slice %653 {offsets = [3, 0], sizes = [16, 16], strides = [1, 1]} : vector<22x16xf32> to vector<16x16xf32>
    %671 = vector.broadcast %669 : f32 to vector<16x16xf32>
    %672 = arith.mulf %671, %670 : vector<16x16xf32>
    %673 = arith.addf %668, %672 : vector<16x16xf32>
    %c83 = arith.constant 83 : index
    %674 = memref.load %arg1[%c83] : memref<98xf32, #tpu.memory_space<smem>>
    %675 = vector.extract_strided_slice %653 {offsets = [4, 0], sizes = [16, 16], strides = [1, 1]} : vector<22x16xf32> to vector<16x16xf32>
    %676 = vector.broadcast %674 : f32 to vector<16x16xf32>
    %677 = arith.mulf %676, %675 : vector<16x16xf32>
    %678 = arith.addf %673, %677 : vector<16x16xf32>
    %c90 = arith.constant 90 : index
    %679 = memref.load %arg1[%c90] : memref<98xf32, #tpu.memory_space<smem>>
    %680 = vector.extract_strided_slice %653 {offsets = [5, 0], sizes = [16, 16], strides = [1, 1]} : vector<22x16xf32> to vector<16x16xf32>
    %681 = vector.broadcast %679 : f32 to vector<16x16xf32>
    %682 = arith.mulf %681, %680 : vector<16x16xf32>
    %683 = arith.addf %678, %682 : vector<16x16xf32>
    %c97 = arith.constant 97 : index
    %684 = memref.load %arg1[%c97] : memref<98xf32, #tpu.memory_space<smem>>
    %685 = vector.extract_strided_slice %653 {offsets = [6, 0], sizes = [16, 16], strides = [1, 1]} : vector<22x16xf32> to vector<16x16xf32>
    %686 = vector.broadcast %684 : f32 to vector<16x16xf32>
    %687 = arith.mulf %686, %685 : vector<16x16xf32>
    %688 = arith.addf %683, %687 : vector<16x16xf32>
    %689 = arith.negf %688 : vector<16x16xf32>
    %690 = math.exp %689 : vector<16x16xf32>
    %cst_148 = arith.constant 1.000000e+00 : f32
    %691 = vector.broadcast %cst_148 : f32 to vector<16x16xf32>
    %692 = arith.addf %691, %690 : vector<16x16xf32>
    %693 = arith.divf %691, %692 : vector<16x16xf32>
    %694 = vector.extract_strided_slice %693 {offsets = [0, 0], sizes = [1, 16], strides = [1, 1]} : vector<16x16xf32> to vector<1x16xf32>
    %695 = vector.shape_cast %694 : vector<1x16xf32> to vector<16xf32>
    %c0_149 = arith.constant 0 : index
    %c0_150 = arith.constant 0 : index
    %696 = vector.load %arg4[%c0_149, %c0_150] : memref<1x256xf32, #tpu.memory_space<vmem>>, vector<1x16xf32>
    %697 = vector.shape_cast %696 : vector<1x16xf32> to vector<16xf32>
    %698 = vector.shape_cast %695 : vector<16xf32> to vector<1x16xf32>
    tpu.vector_store %arg4[%c0_149, %c0_150], %698 {strides = array<i32>} : memref<1x256xf32, #tpu.memory_space<vmem>>, vector<1x16xf32>,
    %699 = vector.extract_strided_slice %693 {offsets = [1, 0], sizes = [1, 16], strides = [1, 1]} : vector<16x16xf32> to vector<1x16xf32>
    %700 = vector.shape_cast %699 : vector<1x16xf32> to vector<16xf32>
    %c0_151 = arith.constant 0 : index
    %c16_152 = arith.constant 16 : index
    %701 = vector.load %arg4[%c0_151, %c16_152] : memref<1x256xf32, #tpu.memory_space<vmem>>, vector<1x16xf32>
    %702 = vector.shape_cast %701 : vector<1x16xf32> to vector<16xf32>
    %703 = vector.shape_cast %700 : vector<16xf32> to vector<1x16xf32>
    tpu.vector_store %arg4[%c0_151, %c16_152], %703 {strides = array<i32>} : memref<1x256xf32, #tpu.memory_space<vmem>>, vector<1x16xf32>,
    %704 = vector.extract_strided_slice %693 {offsets = [2, 0], sizes = [1, 16], strides = [1, 1]} : vector<16x16xf32> to vector<1x16xf32>
    %705 = vector.shape_cast %704 : vector<1x16xf32> to vector<16xf32>
    %c0_153 = arith.constant 0 : index
    %c32_154 = arith.constant 32 : index
    %706 = vector.load %arg4[%c0_153, %c32_154] : memref<1x256xf32, #tpu.memory_space<vmem>>, vector<1x16xf32>
    %707 = vector.shape_cast %706 : vector<1x16xf32> to vector<16xf32>
    %708 = vector.shape_cast %705 : vector<16xf32> to vector<1x16xf32>
    tpu.vector_store %arg4[%c0_153, %c32_154], %708 {strides = array<i32>} : memref<1x256xf32, #tpu.memory_space<vmem>>, vector<1x16xf32>,
    %709 = vector.extract_strided_slice %693 {offsets = [3, 0], sizes = [1, 16], strides = [1, 1]} : vector<16x16xf32> to vector<1x16xf32>
    %710 = vector.shape_cast %709 : vector<1x16xf32> to vector<16xf32>
    %c0_155 = arith.constant 0 : index
    %c48_156 = arith.constant 48 : index
    %711 = vector.load %arg4[%c0_155, %c48_156] : memref<1x256xf32, #tpu.memory_space<vmem>>, vector<1x16xf32>
    %712 = vector.shape_cast %711 : vector<1x16xf32> to vector<16xf32>
    %713 = vector.shape_cast %710 : vector<16xf32> to vector<1x16xf32>
    tpu.vector_store %arg4[%c0_155, %c48_156], %713 {strides = array<i32>} : memref<1x256xf32, #tpu.memory_space<vmem>>, vector<1x16xf32>,
    %714 = vector.extract_strided_slice %693 {offsets = [4, 0], sizes = [1, 16], strides = [1, 1]} : vector<16x16xf32> to vector<1x16xf32>
    %715 = vector.shape_cast %714 : vector<1x16xf32> to vector<16xf32>
    %c0_157 = arith.constant 0 : index
    %c64_158 = arith.constant 64 : index
    %716 = vector.load %arg4[%c0_157, %c64_158] : memref<1x256xf32, #tpu.memory_space<vmem>>, vector<1x16xf32>
    %717 = vector.shape_cast %716 : vector<1x16xf32> to vector<16xf32>
    %718 = vector.shape_cast %715 : vector<16xf32> to vector<1x16xf32>
    tpu.vector_store %arg4[%c0_157, %c64_158], %718 {strides = array<i32>} : memref<1x256xf32, #tpu.memory_space<vmem>>, vector<1x16xf32>,
    %719 = vector.extract_strided_slice %693 {offsets = [5, 0], sizes = [1, 16], strides = [1, 1]} : vector<16x16xf32> to vector<1x16xf32>
    %720 = vector.shape_cast %719 : vector<1x16xf32> to vector<16xf32>
    %c0_159 = arith.constant 0 : index
    %c80_160 = arith.constant 80 : index
    %721 = vector.load %arg4[%c0_159, %c80_160] : memref<1x256xf32, #tpu.memory_space<vmem>>, vector<1x16xf32>
    %722 = vector.shape_cast %721 : vector<1x16xf32> to vector<16xf32>
    %723 = vector.shape_cast %720 : vector<16xf32> to vector<1x16xf32>
    tpu.vector_store %arg4[%c0_159, %c80_160], %723 {strides = array<i32>} : memref<1x256xf32, #tpu.memory_space<vmem>>, vector<1x16xf32>,
    %724 = vector.extract_strided_slice %693 {offsets = [6, 0], sizes = [1, 16], strides = [1, 1]} : vector<16x16xf32> to vector<1x16xf32>
    %725 = vector.shape_cast %724 : vector<1x16xf32> to vector<16xf32>
    %c0_161 = arith.constant 0 : index
    %c96_162 = arith.constant 96 : index
    %726 = vector.load %arg4[%c0_161, %c96_162] : memref<1x256xf32, #tpu.memory_space<vmem>>, vector<1x16xf32>
    %727 = vector.shape_cast %726 : vector<1x16xf32> to vector<16xf32>
    %728 = vector.shape_cast %725 : vector<16xf32> to vector<1x16xf32>
    tpu.vector_store %arg4[%c0_161, %c96_162], %728 {strides = array<i32>} : memref<1x256xf32, #tpu.memory_space<vmem>>, vector<1x16xf32>,
    %729 = vector.extract_strided_slice %693 {offsets = [7, 0], sizes = [1, 16], strides = [1, 1]} : vector<16x16xf32> to vector<1x16xf32>
    %730 = vector.shape_cast %729 : vector<1x16xf32> to vector<16xf32>
    %c0_163 = arith.constant 0 : index
    %c112 = arith.constant 112 : index
    %731 = vector.load %arg4[%c0_163, %c112] : memref<1x256xf32, #tpu.memory_space<vmem>>, vector<1x16xf32>
    %732 = vector.shape_cast %731 : vector<1x16xf32> to vector<16xf32>
    %733 = vector.shape_cast %730 : vector<16xf32> to vector<1x16xf32>
    tpu.vector_store %arg4[%c0_163, %c112], %733 {strides = array<i32>} : memref<1x256xf32, #tpu.memory_space<vmem>>, vector<1x16xf32>,
    %734 = vector.extract_strided_slice %693 {offsets = [8, 0], sizes = [1, 16], strides = [1, 1]} : vector<16x16xf32> to vector<1x16xf32>
    %735 = vector.shape_cast %734 : vector<1x16xf32> to vector<16xf32>
    %c0_164 = arith.constant 0 : index
    %c128 = arith.constant 128 : index
    %736 = vector.load %arg4[%c0_164, %c128] : memref<1x256xf32, #tpu.memory_space<vmem>>, vector<1x16xf32>
    %737 = vector.shape_cast %736 : vector<1x16xf32> to vector<16xf32>
    %738 = vector.shape_cast %735 : vector<16xf32> to vector<1x16xf32>
    tpu.vector_store %arg4[%c0_164, %c128], %738 {strides = array<i32>} : memref<1x256xf32, #tpu.memory_space<vmem>>, vector<1x16xf32>,
    %739 = vector.extract_strided_slice %693 {offsets = [9, 0], sizes = [1, 16], strides = [1, 1]} : vector<16x16xf32> to vector<1x16xf32>
    %740 = vector.shape_cast %739 : vector<1x16xf32> to vector<16xf32>
    %c0_165 = arith.constant 0 : index
    %c144 = arith.constant 144 : index
    %741 = vector.load %arg4[%c0_165, %c144] : memref<1x256xf32, #tpu.memory_space<vmem>>, vector<1x16xf32>
    %742 = vector.shape_cast %741 : vector<1x16xf32> to vector<16xf32>
    %743 = vector.shape_cast %740 : vector<16xf32> to vector<1x16xf32>
    tpu.vector_store %arg4[%c0_165, %c144], %743 {strides = array<i32>} : memref<1x256xf32, #tpu.memory_space<vmem>>, vector<1x16xf32>,
    %744 = vector.extract_strided_slice %693 {offsets = [10, 0], sizes = [1, 16], strides = [1, 1]} : vector<16x16xf32> to vector<1x16xf32>
    %745 = vector.shape_cast %744 : vector<1x16xf32> to vector<16xf32>
    %c0_166 = arith.constant 0 : index
    %c160 = arith.constant 160 : index
    %746 = vector.load %arg4[%c0_166, %c160] : memref<1x256xf32, #tpu.memory_space<vmem>>, vector<1x16xf32>
    %747 = vector.shape_cast %746 : vector<1x16xf32> to vector<16xf32>
    %748 = vector.shape_cast %745 : vector<16xf32> to vector<1x16xf32>
    tpu.vector_store %arg4[%c0_166, %c160], %748 {strides = array<i32>} : memref<1x256xf32, #tpu.memory_space<vmem>>, vector<1x16xf32>,
    %749 = vector.extract_strided_slice %693 {offsets = [11, 0], sizes = [1, 16], strides = [1, 1]} : vector<16x16xf32> to vector<1x16xf32>
    %750 = vector.shape_cast %749 : vector<1x16xf32> to vector<16xf32>
    %c0_167 = arith.constant 0 : index
    %c176 = arith.constant 176 : index
    %751 = vector.load %arg4[%c0_167, %c176] : memref<1x256xf32, #tpu.memory_space<vmem>>, vector<1x16xf32>
    %752 = vector.shape_cast %751 : vector<1x16xf32> to vector<16xf32>
    %753 = vector.shape_cast %750 : vector<16xf32> to vector<1x16xf32>
    tpu.vector_store %arg4[%c0_167, %c176], %753 {strides = array<i32>} : memref<1x256xf32, #tpu.memory_space<vmem>>, vector<1x16xf32>,
    %754 = vector.extract_strided_slice %693 {offsets = [12, 0], sizes = [1, 16], strides = [1, 1]} : vector<16x16xf32> to vector<1x16xf32>
    %755 = vector.shape_cast %754 : vector<1x16xf32> to vector<16xf32>
    %c0_168 = arith.constant 0 : index
    %c192 = arith.constant 192 : index
    %756 = vector.load %arg4[%c0_168, %c192] : memref<1x256xf32, #tpu.memory_space<vmem>>, vector<1x16xf32>
    %757 = vector.shape_cast %756 : vector<1x16xf32> to vector<16xf32>
    %758 = vector.shape_cast %755 : vector<16xf32> to vector<1x16xf32>
    tpu.vector_store %arg4[%c0_168, %c192], %758 {strides = array<i32>} : memref<1x256xf32, #tpu.memory_space<vmem>>, vector<1x16xf32>,
    %759 = vector.extract_strided_slice %693 {offsets = [13, 0], sizes = [1, 16], strides = [1, 1]} : vector<16x16xf32> to vector<1x16xf32>
    %760 = vector.shape_cast %759 : vector<1x16xf32> to vector<16xf32>
    %c0_169 = arith.constant 0 : index
    %c208 = arith.constant 208 : index
    %761 = vector.load %arg4[%c0_169, %c208] : memref<1x256xf32, #tpu.memory_space<vmem>>, vector<1x16xf32>
    %762 = vector.shape_cast %761 : vector<1x16xf32> to vector<16xf32>
    %763 = vector.shape_cast %760 : vector<16xf32> to vector<1x16xf32>
    tpu.vector_store %arg4[%c0_169, %c208], %763 {strides = array<i32>} : memref<1x256xf32, #tpu.memory_space<vmem>>, vector<1x16xf32>,
    %764 = vector.extract_strided_slice %693 {offsets = [14, 0], sizes = [1, 16], strides = [1, 1]} : vector<16x16xf32> to vector<1x16xf32>
    %765 = vector.shape_cast %764 : vector<1x16xf32> to vector<16xf32>
    %c0_170 = arith.constant 0 : index
    %c224 = arith.constant 224 : index
    %766 = vector.load %arg4[%c0_170, %c224] : memref<1x256xf32, #tpu.memory_space<vmem>>, vector<1x16xf32>
    %767 = vector.shape_cast %766 : vector<1x16xf32> to vector<16xf32>
    %768 = vector.shape_cast %765 : vector<16xf32> to vector<1x16xf32>
    tpu.vector_store %arg4[%c0_170, %c224], %768 {strides = array<i32>} : memref<1x256xf32, #tpu.memory_space<vmem>>, vector<1x16xf32>,
    %769 = vector.extract_strided_slice %693 {offsets = [15, 0], sizes = [1, 16], strides = [1, 1]} : vector<16x16xf32> to vector<1x16xf32>
    %770 = vector.shape_cast %769 : vector<1x16xf32> to vector<16xf32>
    %c0_171 = arith.constant 0 : index
    %c240 = arith.constant 240 : index
    %771 = vector.load %arg4[%c0_171, %c240] : memref<1x256xf32, #tpu.memory_space<vmem>>, vector<1x16xf32>
    %772 = vector.shape_cast %771 : vector<1x16xf32> to vector<16xf32>
    %773 = vector.shape_cast %770 : vector<16xf32> to vector<1x16xf32>
    tpu.vector_store %arg4[%c0_171, %c240], %773 {strides = array<i32>} : memref<1x256xf32, #tpu.memory_space<vmem>>, vector<1x16xf32>,
    %c0_172 = arith.constant 0 : index
    %c0_173 = arith.constant 0 : index
    %774 = vector.load %arg4[%c0_172, %c0_173] : memref<1x256xf32, #tpu.memory_space<vmem>>, vector<1x256xf32>
    %775 = vector.broadcast %774 : vector<1x256xf32> to vector<4x256xf32>
    %776 = arith.mulf %1, %775 : vector<4x256xf32>
    %c0_174 = arith.constant 0 : index
    %c0_175 = arith.constant 0 : index
    %c0_176 = arith.constant 0 : index
    %777 = vector.load %arg3[%c0_174, %c0_175, %c0_176] : memref<1x4x256xf32, #tpu.memory_space<vmem>>, vector<1x4x256xf32>
    %778 = vector.shape_cast %777 : vector<1x4x256xf32> to vector<4x256xf32>
    %779 = vector.shape_cast %776 : vector<4x256xf32> to vector<1x4x256xf32>
    tpu.vector_store %arg3[%c0_174, %c0_175, %c0_176], %779 {strides = array<i32>} : memref<1x4x256xf32, #tpu.memory_space<vmem>>, vector<1x4x256xf32>,
    return
  }
  func.func @transform_0(%arg0: i32) -> i32 {
    %c0_i32 = arith.constant 0 : i32
    %c0_i32_0 = arith.constant 0 : i32
    return %c0_i32 : i32
  }
  func.func @transform_1(%arg0: i32) -> (i32, i32, i32) {
    %c0_i32 = arith.constant 0 : i32
    %c0_i32_0 = arith.constant 0 : i32
    %c0_i32_1 = arith.constant 0 : i32
    return %arg0, %c0_i32, %c0_i32_0 : i32, i32, i32
  }
  func.func @transform_2(%arg0: i32) -> (i32, i32, i32) {
    %c0_i32 = arith.constant 0 : i32
    %c0_i32_0 = arith.constant 0 : i32
    %c0_i32_1 = arith.constant 0 : i32
    return %arg0, %c0_i32, %c0_i32_0 : i32, i32, i32
  }
}

</mosaic_0001>

<llo_original>
// kernel: tpu_custom_call.1
$region0: #{tpu_custom_call.1}
  #allocation0 [shape = 'u32[]', space=smem, size = 0x4, offset = 0x4, fixed_abs, tag = 'smem constant byte address 0x4 - core index']
  #allocation1 [shape = 'u32[144,128]{1,0:T(1,128)}', space=vmem, size = 0x12000, scoped, tag = 'internal scratch']
  #allocation2 [shape = 'f32[1,256]{1,0:T(1,128)}', space=vmem, size = 0x400, scoped, tag = 'scratch operand']
  #allocation3 [shape = 'f32[2,22,22]{2,1,0:T(8,128)}', space=vmem, size = 0x6000, scoped, tag = 'scratch operand']
  %s0 = inlined_call_operand.hbm [shape: f32[98], index: 0, kind: input, shape index: {}]
  %s1 = inlined_call_operand.hbm [shape: f32[2,4,256], index: 1, kind: input, shape index: {}]
  %s2 = inlined_call_operand.hbm [shape: f32[2,4,256], index: 2, kind: output, shape index: {}]
  %s3 = sld [smem:[#allocation0]]
  $region49: #{tpu_custom_call.1} parent=0
    _
  %s5 = ssub.s32 1, %s3
  %s6 = scalar_select 0, %s5, %s3
  $region1: #{tpu_custom_call.1} parent=0
    #allocation4 [shape = 'u8[512]{0}', space=smem, size = 0x200, scoped, tag = 'input window, operand 0, single buffered']
    #allocation5 [shape = 's32[2]{0}', space=sflag, size = 0x8, scoped, tag = 'scoped memory for tpu_custom_call.1']
    #allocation6 [shape = 's32[2]{0}', space=sflag, size = 0x8, scoped, tag = 'scoped memory for tpu_custom_call.1']
    #allocation7 [shape = 's32[2]{0}', space=sflag, size = 0x8, scoped, tag = 'scoped memory for tpu_custom_call.1']
    #allocation8 [shape = 'u8[8192]{0}', space=vmem, size = 0x2000, scoped, tag = 'input window, operand 1']
    #allocation9 [shape = 'u8[8192]{0}', space=vmem, size = 0x2000, scoped, tag = 'output window, operand 0']
    %7 = vsyncpa [#allocation7], 0
    %8 = vsyncpa [#allocation5], 0
    %s9 = scalar_lea.sflag [#allocation5], 1
    %10 = vsyncpa %s9, 0
    %11 = vsyncpa [#allocation6], 0
    %s12 = scalar_lea.sflag [#allocation6], 1
    %13 = vsyncpa %s12, 0
    loop: start=0, step=1, limit=4
    $region2: #{tpu_custom_call.1} parent=1 // loop_pre_header
      _
    $region3: #{tpu_custom_call.1} parent=1 // loop_header
      %s15 = sphi 0, %s19
      %p16 = scmp.ge.s32.totalorder %s15, 4
      %s23 = sphi 0, %s23
      %s25 = sphi 0, %s23
      %s26 = sphi 0, %s25
      %s40 = sphi 0, %s26
      %s46 = sphi 0, %s48
      %s49 = sphi 0, %s46
      %s50 = sphi 0, %s49
      %s66 = sphi 0, %s50
      %s72 = sphi 0, %s74
      %s75 = sphi 0, %s72
      %s76 = sphi 0, %s75
      %s92 = sphi 0, %s76
    $region4: #{tpu_custom_call.1} parent=1 // loop_header_branch
      %18 = sbr.rel (%p16) target = $region8
    $region5: #{tpu_custom_call.1} parent=1 // loop_body
      %s20 = ssub.s32 %s15, 1
      %s21 = ssub.s32 %s15, 2
      %s22 = sadd.s32 %s15, 1
      %s24 = sadd.s32 %s23, 1
      %p27 = scmp.eq.s32.totalorder %s15, 1
      %p28 = scmp.ne.s32.totalorder %s23, %s25
      %p29 = scmp.eq.s32.totalorder %s15, 0
      %p30 = por %p28, %p29
      %p31 = scmp.ne.s32.totalorder %s23, %s25
      %p32 = scmp.eq.s32.totalorder %s20, 1
      %p33 = por %p31, %p32
      %p34 = scmp.ne.s32.totalorder %s25, %s26
      %p35 = scmp.eq.s32.totalorder %s20, 0
      %p36 = por %p34, %p35
      %p37 = scmp.ne.s32.totalorder %s25, %s26
      %p38 = scmp.eq.s32.totalorder %s21, 1
      %p39 = por %p37, %p38
      %p41 = scmp.ne.s32.totalorder %s26, %s40
      %p42 = scmp.eq.s32.totalorder %s21, 0
      %p43 = por %p41, %p42
      %s44 = ssub.s32 %s15, %s22
      %p45 = scmp.eq.s32.totalorder %s44, 0
      %s47 = sadd.s32 %s46, 1
      %s48 = scalar_select %p45, %s46, %s47
      %p51 = pneg %p45
      %p52 = scmp.eq.s32.totalorder %s15, 1
      %p53 = por %p51, %p52
      %p54 = scmp.ne.s32.totalorder %s46, %s49
      %p55 = scmp.eq.s32.totalorder %s15, 0
      %p56 = por %p54, %p55
      %p57 = scmp.ne.s32.totalorder %s46, %s49
      %p58 = scmp.eq.s32.totalorder %s20, 1
      %p59 = por %p57, %p58
      %p60 = scmp.ne.s32.totalorder %s49, %s50
      %p61 = scmp.eq.s32.totalorder %s20, 0
      %p62 = por %p60, %p61
      %p63 = scmp.ne.s32.totalorder %s49, %s50
      %p64 = scmp.eq.s32.totalorder %s21, 1
      %p65 = por %p63, %p64
      %p67 = scmp.ne.s32.totalorder %s50, %s66
      %p68 = scmp.eq.s32.totalorder %s21, 0
      %p69 = por %p67, %p68
      %s70 = ssub.s32 %s15, %s22
      %p71 = scmp.eq.s32.totalorder %s70, 0
      %s73 = sadd.s32 %s72, 1
      %s74 = scalar_select %p71, %s72, %s73
      %p77 = pneg %p71
      %p78 = scmp.eq.s32.totalorder %s15, 1
      %p79 = por %p77, %p78
      %p80 = scmp.ne.s32.totalorder %s72, %s75
      %p81 = scmp.eq.s32.totalorder %s15, 0
      %p82 = por %p80, %p81
      %p83 = scmp.ne.s32.totalorder %s72, %s75
      %p84 = scmp.eq.s32.totalorder %s20, 1
      %p85 = por %p83, %p84
      %p86 = scmp.ne.s32.totalorder %s75, %s76
      %p87 = scmp.eq.s32.totalorder %s20, 0
      %p88 = por %p86, %p87
      %p89 = scmp.ne.s32.totalorder %s75, %s76
      %p90 = scmp.eq.s32.totalorder %s21, 1
      %p91 = por %p89, %p90
      %p93 = scmp.ne.s32.totalorder %s76, %s92
      %p94 = scmp.eq.s32.totalorder %s21, 0
      %p95 = por %p93, %p94
      %p96 = scmp.le.s32.totalorder 1, %s15
      %p97 = scmp.lt.s32.totalorder %s15, 3
      %p98 = pnand %p96, %p97
      %p99 = pneg %p98
      // Predicated region
      $region9: #{tpu_custom_call.1} parent=5 // pred_check
        _
      $region10: #{tpu_custom_call.1} parent=5 // pred_check_branch
        %101 = sbr.rel (%p98) target = $region12
      $region11: #{tpu_custom_call.1} parent=5 // pred_region
        %s102 = ssub.s32 %s15, 1
        // Predicated region
        $region13: #{tpu_custom_call.1} parent=11 // pred_check
          %p103 = pneg %p36
        $region14: #{tpu_custom_call.1} parent=11 // pred_check_branch
          %105 = sbr.rel (%p103) target = $region16
        $region15: #{tpu_custom_call.1} parent=11 // pred_region
          %s107 = ssub.s32 16, 16
          %108 = vsyncadd [#allocation7], %s107
          %111 = dma.hbm_to_smem %s0, 16, [#allocation4], [#allocation7]
        $region16: #{tpu_custom_call.1} parent=11 // pred_fallthru
          _
      $region12: #{tpu_custom_call.1} parent=5 // pred_fallthru
        _
      %p112 = scmp.lt.s32.totalorder %s15, 2
      // Predicated region
      $region17: #{tpu_custom_call.1} parent=5 // pred_check
        %p113 = pneg %p112
      $region18: #{tpu_custom_call.1} parent=5 // pred_check_branch
        %115 = sbr.rel (%p113) target = $region20
      $region19: #{tpu_custom_call.1} parent=5 // pred_region
        // Predicated region
        $region21: #{tpu_custom_call.1} parent=19 // pred_check
          %p116 = pneg %p56
        $region22: #{tpu_custom_call.1} parent=19 // pred_check_branch
          %118 = sbr.rel (%p116) target = $region24
        $region23: #{tpu_custom_call.1} parent=19 // pred_region
          %s119 = sand.u32 %s46, 1
          %s120 = scalar_lea.sflag [#allocation5], %s119
          %s121 = sand.u32 %s46, 1
          %s122 = smul.addr %s121, 8
          %s123 = scalar_lea.vmem [#allocation8], %s122
          %s125 = ssub.s32 128, 128
          %126 = vsyncadd %s120, %s125
          %s127 = smul.addr %s15, 2
          %s128 = smul.addr %s127, 64
          %s129 = scalar_lea.hbm %s1, %s128
          %s131 = sshll.u32 %s123, 4
          %s132 = int_to_ptr.vmem [resolvable:$true] %s131
          %134 = dma.hbm_to_vmem [thread:$0]  %s129, 128, %s132, %s120
        $region24: #{tpu_custom_call.1} parent=19 // pred_fallthru
          _
      $region20: #{tpu_custom_call.1} parent=5 // pred_fallthru
        _
      %p135 = scmp.le.s32.totalorder 1, %s15
      %p136 = scmp.lt.s32.totalorder %s15, 3
      %p137 = pnand %p135, %p136
      %p138 = pneg %p137
      // Predicated region
      $region25: #{tpu_custom_call.1} parent=5 // pred_check
        _
      $region26: #{tpu_custom_call.1} parent=5 // pred_check_branch
        %140 = sbr.rel (%p137) target = $region28
      $region27: #{tpu_custom_call.1} parent=5 // pred_region
        %s141 = ssub.s32 %s15, 1
        // Predicated region
        $region29: #{tpu_custom_call.1} parent=27 // pred_check
          %p142 = pneg %p36
        $region30: #{tpu_custom_call.1} parent=27 // pred_check_branch
          %144 = sbr.rel (%p142) target = $region32
        $region31: #{tpu_custom_call.1} parent=27 // pred_region
          %145 = dma.done [#allocation7], 16
        $region32: #{tpu_custom_call.1} parent=27 // pred_fallthru
          _
        %s146 = sand.u32 %s49, 1
        %s147 = scalar_lea.sflag [#allocation5], %s146
        %s148 = sand.u32 %s49, 1
        %s149 = smul.addr %s148, 8
        %s150 = scalar_lea.vmem [#allocation8], %s149
        // Predicated region
        $region33: #{tpu_custom_call.1} parent=27 // pred_check
          %p151 = pneg %p62
        $region34: #{tpu_custom_call.1} parent=27 // pred_check_branch
          %153 = sbr.rel (%p151) target = $region36
        $region35: #{tpu_custom_call.1} parent=27 // pred_region
          %154 = dma.done %s147, 128
        $region36: #{tpu_custom_call.1} parent=27 // pred_fallthru
          _
        %155 = sfence
        %p156 = pneg %p36
        %p157 = pneg %p33
        %s158 = sand.u32 %s49, 1
        %s159 = scalar_lea.sflag [#allocation5], %s158
        %s160 = sand.u32 %s49, 1
        %s161 = smul.addr %s160, 8
        %s162 = scalar_lea.vmem [#allocation8], %s161
        %p163 = pneg %p62
        %p164 = pneg %p59
        %p165 = pneg %p88
        %p166 = pneg %p85
        %s167 = sand.u32 %s75, 1
        %s168 = scalar_lea.sflag [#allocation6], %s167
        %s169 = sand.u32 %s75, 1
        %s170 = smul.addr %s169, 8
        %s171 = scalar_lea.vmem [#allocation9], %s170
        %v172 = vld [vmem:[%s150] sm:$0xff]
        %v174 = vcombine.high %v172, %v172
        %vm176 = vcmask 1043456
        %v177 = vsel %vm176, %v172, -inf
        %v178 = vrot.slane %v177, 4
        %v179 = vmax.f32 %v177, %v178
        %v180 = vrot.slane %v179, 2
        %v181 = vmax.f32 %v179, %v180
        %v182 = vrot.slane %v181, 1
        %v183 = vmax.f32 %v181, %v182
        %v184 = vsel %vm176, %v174, -inf
        %v185 = vrot.slane %v184, 4
        %v186 = vmax.f32 %v184, %v185
        %v187 = vrot.slane %v186, 2
        %v188 = vmax.f32 %v186, %v187
        %v189 = vrot.slane %v188, 1
        %v190 = vmax.f32 %v188, %v189
        %v191 = vsel %vm176, %v172, 0.0
        %v192 = vrot.slane %v191, 4
        %v193 = vadd.f32 %v191, %v192
        %v194 = vrot.slane %v193, 2
        %v195 = vadd.f32 %v193, %v194
        %v196 = vrot.slane %v195, 1
        %v197 = vadd.f32 %v195, %v196
        %v198 = vsel %vm176, %v174, 0.0
        %v199 = vrot.slane %v198, 4
        %v200 = vadd.f32 %v198, %v199
        %v201 = vrot.slane %v200, 2
        %v202 = vadd.f32 %v200, %v201
        %v203 = vrot.slane %v202, 1
        %v204 = vadd.f32 %v202, %v203
        %v205 = vmul.f32 %v197, 0.25
        %v206 = vmul.f32 %v204, 0.25
        %vm207 = vcmask 179200
        %208 = vst.msk [vmem:[#allocation3] sm:$0xff] %vm207, 0.0
        %209 = vst.msk [vmem:[#allocation3 + $0x8] sm:$0xff] %vm207, 0.0
        %vm210 = vcmask 177152
        %211 = vst.msk [vmem:[#allocation3 + $0x10] sm:$0x3f] %vm210, 0.0
        %212 = vst.msk [vmem:[#allocation3 + $0x18] sm:$0xff] %vm207, 0.0
        %213 = vst.msk [vmem:[#allocation3 + $0x20] sm:$0xff] %vm207, 0.0
        %214 = vst.msk [vmem:[#allocation3 + $0x28] sm:$0x3f] %vm210, 0.0
        %216 = vrot.lane.b32.xlu0 %v183, 3
        %v217 = vpop.permute.xlu0 %216
        %vm219 = vcmask 147480
        %220 = vst.msk [vmem:[#allocation3 + $0x3] sm:$0x1] %vm219, %v217
        %222 = vrot.lane.b32.xlu0 %v205, 3
        %v223 = vpop.permute.xlu0 %222
        %s225 = scalar_lea.vmem [#allocation3], 24
        %226 = vst.msk [vmem:[%s225 + $0x3] sm:$0x1] %vm219, %v223
        %227 = vrot.lane.b32.xlu0 %v183, 115
        %v228 = vpop.permute.xlu0 %227
        %230 = vst.msk [vmem:[#allocation3 + $0x4] sm:$0x1] %vm219, %v228
        %231 = vrot.lane.b32.xlu0 %v205, 115
        %v232 = vpop.permute.xlu0 %231
        %234 = vst.msk [vmem:[%s225 + $0x4] sm:$0x1] %vm219, %v232
        %235 = vrot.lane.b32.xlu0 %v183, 99
        %v236 = vpop.permute.xlu0 %235
        %238 = vst.msk [vmem:[#allocation3 + $0x5] sm:$0x1] %vm219, %v236
        %239 = vrot.lane.b32.xlu0 %v205, 99
        %v240 = vpop.permute.xlu0 %239
        %242 = vst.msk [vmem:[%s225 + $0x5] sm:$0x1] %vm219, %v240
        %243 = vrot.lane.b32.xlu0 %v183, 83
        %v244 = vpop.permute.xlu0 %243
        %246 = vst.msk [vmem:[#allocation3 + $0x6] sm:$0x1] %vm219, %v244
        %247 = vrot.lane.b32.xlu0 %v205, 83
        %v248 = vpop.permute.xlu0 %247
        %250 = vst.msk [vmem:[%s225 + $0x6] sm:$0x1] %vm219, %v248
        %251 = vrot.lane.b32.xlu0 %v183, 67
        %v252 = vpop.permute.xlu0 %251
        %254 = vst.msk [vmem:[#allocation3 + $0x7] sm:$0x1] %vm219, %v252
        %255 = vrot.lane.b32.xlu0 %v205, 67
        %v256 = vpop.permute.xlu0 %255
        %258 = vst.msk [vmem:[%s225 + $0x7] sm:$0x1] %vm219, %v256
        %259 = vrot.lane.b32.xlu0 %v183, 51
        %v260 = vpop.permute.xlu0 %259
        %262 = vst.msk [vmem:[#allocation3 + $0x8] sm:$0x1] %vm219, %v260
        %263 = vrot.lane.b32.xlu0 %v205, 51
        %v264 = vpop.permute.xlu0 %263
        %266 = vst.msk [vmem:[%s225 + $0x8] sm:$0x1] %vm219, %v264
        %267 = vrot.lane.b32.xlu0 %v183, 35
        %v268 = vpop.permute.xlu0 %267
        %270 = vst.msk [vmem:[#allocation3 + $0x9] sm:$0x1] %vm219, %v268
        %271 = vrot.lane.b32.xlu0 %v205, 35
        %v272 = vpop.permute.xlu0 %271
        %274 = vst.msk [vmem:[%s225 + $0x9] sm:$0x1] %vm219, %v272
        %275 = vrot.lane.b32.xlu0 %v183, 19
        %v276 = vpop.permute.xlu0 %275
        %278 = vst.msk [vmem:[#allocation3 + $0xa] sm:$0x1] %vm219, %v276
        %279 = vrot.lane.b32.xlu0 %v205, 19
        %v280 = vpop.permute.xlu0 %279
        %282 = vst.msk [vmem:[%s225 + $0xa] sm:$0x1] %vm219, %v280
        %284 = vrot.lane.b32.xlu0 %v190, 3
        %v285 = vpop.permute.xlu0 %284
        %287 = vst.msk [vmem:[#allocation3 + $0xb] sm:$0x1] %vm219, %v285
        %289 = vrot.lane.b32.xlu0 %v206, 3
        %v290 = vpop.permute.xlu0 %289
        %292 = vst.msk [vmem:[%s225 + $0xb] sm:$0x1] %vm219, %v290
        %293 = vrot.lane.b32.xlu0 %v190, 115
        %v294 = vpop.permute.xlu0 %293
        %296 = vst.msk [vmem:[#allocation3 + $0xc] sm:$0x1] %vm219, %v294
        %297 = vrot.lane.b32.xlu0 %v206, 115
        %v298 = vpop.permute.xlu0 %297
        %300 = vst.msk [vmem:[%s225 + $0xc] sm:$0x1] %vm219, %v298
        %301 = vrot.lane.b32.xlu0 %v190, 99
        %v302 = vpop.permute.xlu0 %301
        %304 = vst.msk [vmem:[#allocation3 + $0xd] sm:$0x1] %vm219, %v302
        %305 = vrot.lane.b32.xlu0 %v206, 99
        %v306 = vpop.permute.xlu0 %305
        %308 = vst.msk [vmem:[%s225 + $0xd] sm:$0x1] %vm219, %v306
        %309 = vrot.lane.b32.xlu0 %v190, 83
        %v310 = vpop.permute.xlu0 %309
        %312 = vst.msk [vmem:[#allocation3 + $0xe] sm:$0x1] %vm219, %v310
        %313 = vrot.lane.b32.xlu0 %v206, 83
        %v314 = vpop.permute.xlu0 %313
        %316 = vst.msk [vmem:[%s225 + $0xe] sm:$0x1] %vm219, %v314
        %317 = vrot.lane.b32.xlu0 %v190, 67
        %v318 = vpop.permute.xlu0 %317
        %320 = vst.msk [vmem:[#allocation3 + $0xf] sm:$0x1] %vm219, %v318
        %321 = vrot.lane.b32.xlu0 %v206, 67
        %v322 = vpop.permute.xlu0 %321
        %324 = vst.msk [vmem:[%s225 + $0xf] sm:$0x1] %vm219, %v322
        %325 = vrot.lane.b32.xlu0 %v190, 51
        %v326 = vpop.permute.xlu0 %325
        %328 = vst.msk [vmem:[#allocation3 + $0x10] sm:$0x1] %vm219, %v326
        %329 = vrot.lane.b32.xlu0 %v206, 51
        %v330 = vpop.permute.xlu0 %329
        %332 = vst.msk [vmem:[%s225 + $0x10] sm:$0x1] %vm219, %v330
        %333 = vrot.lane.b32.xlu0 %v190, 35
        %v334 = vpop.permute.xlu0 %333
        %336 = vst.msk [vmem:[#allocation3 + $0x11] sm:$0x1] %vm219, %v334
        %337 = vrot.lane.b32.xlu0 %v206, 35
        %v338 = vpop.permute.xlu0 %337
        %340 = vst.msk [vmem:[%s225 + $0x11] sm:$0x1] %vm219, %v338
        %341 = vrot.lane.b32.xlu0 %v190, 19
        %v342 = vpop.permute.xlu0 %341
        %344 = vst.msk [vmem:[#allocation3 + $0x12] sm:$0x1] %vm219, %v342
        %345 = vrot.lane.b32.xlu0 %v206, 19
        %v346 = vpop.permute.xlu0 %345
        %348 = vst.msk [vmem:[%s225 + $0x12] sm:$0x1] %vm219, %v346
        %v349 = vld [vmem:[#allocation3] sm:$0xff]
        %v350 = vld [vmem:[#allocation3 + $0x8] sm:$0xff]
        %v351 = vld [vmem:[#allocation3 + $0x10] sm:$0x3f]
        %s352 = sld [smem:[#allocation4]]
        %v353 = vstv %s352
        %v354 = vmul.f32 %v353, %v349
        %v355 = vmul.f32 %v353, %v350
        %v356 = vadd.f32 %v354, 0.0
        %v357 = vadd.f32 %v355, 0.0
        %s358 = sld [smem:[#allocation4 + $0x7]]
        %v359 = vstv %s358
        %v360 = vmul.f32 %v359, %v349
        %v361 = vmul.f32 %v359, %v350
        %v362 = vmul.f32 %v359, %v351
        %vm366 = vcmask 1046528
        %v367 = vrot.slane %v360, 1
        %v368 = vrot.slane %v361, 1
        %v369 = vsel %vm366, %v367, %v368
        %v370 = vrot.slane %v362, 1
        %v371 = vsel %vm366, %v368, %v370
        %v374 = vadd.f32 %v356, %v369
        %v375 = vadd.f32 %v357, %v371
        %s376 = sld [smem:[#allocation4 + $0xe]]
        %v377 = vstv %s376
        %v378 = vmul.f32 %v377, %v349
        %v379 = vmul.f32 %v377, %v350
        %v380 = vmul.f32 %v377, %v351
        %vm384 = vcmask 1045504
        %v385 = vrot.slane %v378, 2
        %v386 = vrot.slane %v379, 2
        %v387 = vsel %vm384, %v385, %v386
        %v388 = vrot.slane %v380, 2
        %v389 = vsel %vm384, %v386, %v388
        %v392 = vadd.f32 %v374, %v387
        %v393 = vadd.f32 %v375, %v389
        %s394 = sld [smem:[#allocation4 + $0x15]]
        %v395 = vstv %s394
        %v396 = vmul.f32 %v395, %v349
        %v397 = vmul.f32 %v395, %v350
        %v398 = vmul.f32 %v395, %v351
        %vm402 = vcmask 1044480
        %v403 = vrot.slane %v396, 3
        %v404 = vrot.slane %v397, 3
        %v405 = vsel %vm402, %v403, %v404
        %v406 = vrot.slane %v398, 3
        %v407 = vsel %vm402, %v404, %v406
        %v410 = vadd.f32 %v392, %v405
        %v411 = vadd.f32 %v393, %v407
        %s412 = sld [smem:[#allocation4 + $0x1c]]
        %v413 = vstv %s412
        %v414 = vmul.f32 %v413, %v349
        %v415 = vmul.f32 %v413, %v350
        %v416 = vmul.f32 %v413, %v351
        %v420 = vrot.slane %v414, 4
        %v421 = vrot.slane %v415, 4
        %v422 = vsel %vm176, %v420, %v421
        %v423 = vrot.slane %v416, 4
        %v424 = vsel %vm176, %v421, %v423
        %v427 = vadd.f32 %v410, %v422
        %v428 = vadd.f32 %v411, %v424
        %s429 = sld [smem:[#allocation4 + $0x23]]
        %v430 = vstv %s429
        %v431 = vmul.f32 %v430, %v349
        %v432 = vmul.f32 %v430, %v350
        %v433 = vmul.f32 %v430, %v351
        %vm437 = vcmask 1042432
        %v438 = vrot.slane %v431, 5
        %v439 = vrot.slane %v432, 5
        %v440 = vsel %vm437, %v438, %v439
        %v441 = vrot.slane %v433, 5
        %v442 = vsel %vm437, %v439, %v441
        %v445 = vadd.f32 %v427, %v440
        %v446 = vadd.f32 %v428, %v442
        %s447 = sld [smem:[#allocation4 + $0x2a]]
        %v448 = vstv %s447
        %v449 = vmul.f32 %v448, %v349
        %v450 = vmul.f32 %v448, %v350
        %v451 = vmul.f32 %v448, %v351
        %vm455 = vcmask 1041408
        %v456 = vrot.slane %v449, 6
        %v457 = vrot.slane %v450, 6
        %v458 = vsel %vm455, %v456, %v457
        %v459 = vrot.slane %v451, 6
        %v460 = vsel %vm455, %v457, %v459
        %v463 = vadd.f32 %v445, %v458
        %v464 = vadd.f32 %v446, %v460
        %s465 = sld [smem:[#allocation4 + $0x1]]
        %v466 = vstv %s465
        %v467 = vmul.f32 %v466, %v349
        %v468 = vmul.f32 %v466, %v350
        %471 = vrot.lane.b32.xlu0 %v467, 127
        %v472 = vpop.permute.xlu0 %471
        %473 = vrot.lane.b32.xlu0 %v468, 127
        %v474 = vpop.permute.xlu0 %473
        %v477 = vadd.f32 %v463, %v472
        %v478 = vadd.f32 %v464, %v474
        %s479 = sld [smem:[#allocation4 + $0x8]]
        %v480 = vstv %s479
        %v481 = vmul.f32 %v480, %v349
        %v482 = vmul.f32 %v480, %v350
        %v483 = vmul.f32 %v480, %v351
        %v487 = vrot.slane %v481, 1
        %v488 = vrot.slane %v482, 1
        %v489 = vsel %vm366, %v487, %v488
        %v490 = vrot.slane %v483, 1
        %v491 = vsel %vm366, %v488, %v490
        %492 = vrot.lane.b32.xlu0 %v489, 127
        %v493 = vpop.permute.xlu0 %492
        %494 = vrot.lane.b32.xlu0 %v491, 127
        %v495 = vpop.permute.xlu0 %494
        %v498 = vadd.f32 %v477, %v493
        %v499 = vadd.f32 %v478, %v495
        %s500 = sld [smem:[#allocation4 + $0xf]]
        %v501 = vstv %s500
        %v502 = vmul.f32 %v501, %v349
        %v503 = vmul.f32 %v501, %v350
        %v504 = vmul.f32 %v501, %v351
        %v508 = vrot.slane %v502, 2
        %v509 = vrot.slane %v503, 2
        %v510 = vsel %vm384, %v508, %v509
        %v511 = vrot.slane %v504, 2
        %v512 = vsel %vm384, %v509, %v511
        %513 = vrot.lane.b32.xlu0 %v510, 127
        %v514 = vpop.permute.xlu0 %513
        %515 = vrot.lane.b32.xlu0 %v512, 127
        %v516 = vpop.permute.xlu0 %515
        %v519 = vadd.f32 %v498, %v514
        %v520 = vadd.f32 %v499, %v516
        %s521 = sld [smem:[#allocation4 + $0x16]]
        %v522 = vstv %s521
        %v523 = vmul.f32 %v522, %v349
        %v524 = vmul.f32 %v522, %v350
        %v525 = vmul.f32 %v522, %v351
        %v529 = vrot.slane %v523, 3
        %v530 = vrot.slane %v524, 3
        %v531 = vsel %vm402, %v529, %v530
        %v532 = vrot.slane %v525, 3
        %v533 = vsel %vm402, %v530, %v532
        %534 = vrot.lane.b32.xlu0 %v531, 127
        %v535 = vpop.permute.xlu0 %534
        %536 = vrot.lane.b32.xlu0 %v533, 127
        %v537 = vpop.permute.xlu0 %536
        %v540 = vadd.f32 %v519, %v535
        %v541 = vadd.f32 %v520, %v537
        %s542 = sld [smem:[#allocation4 + $0x1d]]
        %v543 = vstv %s542
        %v544 = vmul.f32 %v543, %v349
        %v545 = vmul.f32 %v543, %v350
        %v546 = vmul.f32 %v543, %v351
        %v550 = vrot.slane %v544, 4
        %v551 = vrot.slane %v545, 4
        %v552 = vsel %vm176, %v550, %v551
        %v553 = vrot.slane %v546, 4
        %v554 = vsel %vm176, %v551, %v553
        %555 = vrot.lane.b32.xlu0 %v552, 127
        %v556 = vpop.permute.xlu0 %555
        %557 = vrot.lane.b32.xlu0 %v554, 127
        %v558 = vpop.permute.xlu0 %557
        %v561 = vadd.f32 %v540, %v556
        %v562 = vadd.f32 %v541, %v558
        %s563 = sld [smem:[#allocation4 + $0x24]]
        %v564 = vstv %s563
        %v565 = vmul.f32 %v564, %v349
        %v566 = vmul.f32 %v564, %v350
        %v567 = vmul.f32 %v564, %v351
        %v571 = vrot.slane %v565, 5
        %v572 = vrot.slane %v566, 5
        %v573 = vsel %vm437, %v571, %v572
        %v574 = vrot.slane %v567, 5
        %v575 = vsel %vm437, %v572, %v574
        %576 = vrot.lane.b32.xlu0 %v573, 127
        %v577 = vpop.permute.xlu0 %576
        %578 = vrot.lane.b32.xlu0 %v575, 127
        %v579 = vpop.permute.xlu0 %578
        %v582 = vadd.f32 %v561, %v577
        %v583 = vadd.f32 %v562, %v579
        %s584 = sld [smem:[#allocation4 + $0x2b]]
        %v585 = vstv %s584
        %v586 = vmul.f32 %v585, %v349
        %v587 = vmul.f32 %v585, %v350
        %v588 = vmul.f32 %v585, %v351
        %v592 = vrot.slane %v586, 6
        %v593 = vrot.slane %v587, 6
        %v594 = vsel %vm455, %v592, %v593
        %v595 = vrot.slane %v588, 6
        %v596 = vsel %vm455, %v593, %v595
        %597 = vrot.lane.b32.xlu0 %v594, 127
        %v598 = vpop.permute.xlu0 %597
        %599 = vrot.lane.b32.xlu0 %v596, 127
        %v600 = vpop.permute.xlu0 %599
        %v603 = vadd.f32 %v582, %v598
        %v604 = vadd.f32 %v583, %v600
        %s605 = sld [smem:[#allocation4 + $0x2]]
        %v606 = vstv %s605
        %v607 = vmul.f32 %v606, %v349
        %v608 = vmul.f32 %v606, %v350
        %611 = vrot.lane.b32.xlu0 %v607, 126
        %v612 = vpop.permute.xlu0 %611
        %613 = vrot.lane.b32.xlu0 %v608, 126
        %v614 = vpop.permute.xlu0 %613
        %v617 = vadd.f32 %v603, %v612
        %v618 = vadd.f32 %v604, %v614
        %s619 = sld [smem:[#allocation4 + $0x9]]
        %v620 = vstv %s619
        %v621 = vmul.f32 %v620, %v349
        %v622 = vmul.f32 %v620, %v350
        %v623 = vmul.f32 %v620, %v351
        %v627 = vrot.slane %v621, 1
        %v628 = vrot.slane %v622, 1
        %v629 = vsel %vm366, %v627, %v628
        %v630 = vrot.slane %v623, 1
        %v631 = vsel %vm366, %v628, %v630
        %632 = vrot.lane.b32.xlu0 %v629, 126
        %v633 = vpop.permute.xlu0 %632
        %634 = vrot.lane.b32.xlu0 %v631, 126
        %v635 = vpop.permute.xlu0 %634
        %v638 = vadd.f32 %v617, %v633
        %v639 = vadd.f32 %v618, %v635
        %s640 = sld [smem:[#allocation4 + $0x10]]
        %v641 = vstv %s640
        %v642 = vmul.f32 %v641, %v349
        %v643 = vmul.f32 %v641, %v350
        %v644 = vmul.f32 %v641, %v351
        %v648 = vrot.slane %v642, 2
        %v649 = vrot.slane %v643, 2
        %v650 = vsel %vm384, %v648, %v649
        %v651 = vrot.slane %v644, 2
        %v652 = vsel %vm384, %v649, %v651
        %653 = vrot.lane.b32.xlu0 %v650, 126
        %v654 = vpop.permute.xlu0 %653
        %655 = vrot.lane.b32.xlu0 %v652, 126
        %v656 = vpop.permute.xlu0 %655
        %v659 = vadd.f32 %v638, %v654
        %v660 = vadd.f32 %v639, %v656
        %s661 = sld [smem:[#allocation4 + $0x17]]
        %v662 = vstv %s661
        %v663 = vmul.f32 %v662, %v349
        %v664 = vmul.f32 %v662, %v350
        %v665 = vmul.f32 %v662, %v351
        %v669 = vrot.slane %v663, 3
        %v670 = vrot.slane %v664, 3
        %v671 = vsel %vm402, %v669, %v670
        %v672 = vrot.slane %v665, 3
        %v673 = vsel %vm402, %v670, %v672
        %674 = vrot.lane.b32.xlu0 %v671, 126
        %v675 = vpop.permute.xlu0 %674
        %676 = vrot.lane.b32.xlu0 %v673, 126
        %v677 = vpop.permute.xlu0 %676
        %v680 = vadd.f32 %v659, %v675
        %v681 = vadd.f32 %v660, %v677
        %s682 = sld [smem:[#allocation4 + $0x1e]]
        %v683 = vstv %s682
        %v684 = vmul.f32 %v683, %v349
        %v685 = vmul.f32 %v683, %v350
        %v686 = vmul.f32 %v683, %v351
        %v690 = vrot.slane %v684, 4
        %v691 = vrot.slane %v685, 4
        %v692 = vsel %vm176, %v690, %v691
        %v693 = vrot.slane %v686, 4
        %v694 = vsel %vm176, %v691, %v693
        %695 = vrot.lane.b32.xlu0 %v692, 126
        %v696 = vpop.permute.xlu0 %695
        %697 = vrot.lane.b32.xlu0 %v694, 126
        %v698 = vpop.permute.xlu0 %697
        %v701 = vadd.f32 %v680, %v696
        %v702 = vadd.f32 %v681, %v698
        %s703 = sld [smem:[#allocation4 + $0x25]]
        %v704 = vstv %s703
        %v705 = vmul.f32 %v704, %v349
        %v706 = vmul.f32 %v704, %v350
        %v707 = vmul.f32 %v704, %v351
        %v711 = vrot.slane %v705, 5
        %v712 = vrot.slane %v706, 5
        %v713 = vsel %vm437, %v711, %v712
        %v714 = vrot.slane %v707, 5
        %v715 = vsel %vm437, %v712, %v714
        %716 = vrot.lane.b32.xlu0 %v713, 126
        %v717 = vpop.permute.xlu0 %716
        %718 = vrot.lane.b32.xlu0 %v715, 126
        %v719 = vpop.permute.xlu0 %718
        %v722 = vadd.f32 %v701, %v717
        %v723 = vadd.f32 %v702, %v719
        %s724 = sld [smem:[#allocation4 + $0x2c]]
        %v725 = vstv %s724
        %v726 = vmul.f32 %v725, %v349
        %v727 = vmul.f32 %v725, %v350
        %v728 = vmul.f32 %v725, %v351
        %v732 = vrot.slane %v726, 6
        %v733 = vrot.slane %v727, 6
        %v734 = vsel %vm455, %v732, %v733
        %v735 = vrot.slane %v728, 6
        %v736 = vsel %vm455, %v733, %v735
        %737 = vrot.lane.b32.xlu0 %v734, 126
        %v738 = vpop.permute.xlu0 %737
        %739 = vrot.lane.b32.xlu0 %v736, 126
        %v740 = vpop.permute.xlu0 %739
        %v743 = vadd.f32 %v722, %v738
        %v744 = vadd.f32 %v723, %v740
        %s745 = sld [smem:[#allocation4 + $0x3]]
        %v746 = vstv %s745
        %v747 = vmul.f32 %v746, %v349
        %v748 = vmul.f32 %v746, %v350
        %751 = vrot.lane.b32.xlu0 %v747, 125
        %v752 = vpop.permute.xlu0 %751
        %753 = vrot.lane.b32.xlu0 %v748, 125
        %v754 = vpop.permute.xlu0 %753
        %v757 = vadd.f32 %v743, %v752
        %v758 = vadd.f32 %v744, %v754
        %s759 = sld [smem:[#allocation4 + $0xa]]
        %v760 = vstv %s759
        %v761 = vmul.f32 %v760, %v349
        %v762 = vmul.f32 %v760, %v350
        %v763 = vmul.f32 %v760, %v351
        %v767 = vrot.slane %v761, 1
        %v768 = vrot.slane %v762, 1
        %v769 = vsel %vm366, %v767, %v768
        %v770 = vrot.slane %v763, 1
        %v771 = vsel %vm366, %v768, %v770
        %772 = vrot.lane.b32.xlu0 %v769, 125
        %v773 = vpop.permute.xlu0 %772
        %774 = vrot.lane.b32.xlu0 %v771, 125
        %v775 = vpop.permute.xlu0 %774
        %v778 = vadd.f32 %v757, %v773
        %v779 = vadd.f32 %v758, %v775
        %s780 = sld [smem:[#allocation4 + $0x11]]
        %v781 = vstv %s780
        %v782 = vmul.f32 %v781, %v349
        %v783 = vmul.f32 %v781, %v350
        %v784 = vmul.f32 %v781, %v351
        %v788 = vrot.slane %v782, 2
        %v789 = vrot.slane %v783, 2
        %v790 = vsel %vm384, %v788, %v789
        %v791 = vrot.slane %v784, 2
        %v792 = vsel %vm384, %v789, %v791
        %793 = vrot.lane.b32.xlu0 %v790, 125
        %v794 = vpop.permute.xlu0 %793
        %795 = vrot.lane.b32.xlu0 %v792, 125
        %v796 = vpop.permute.xlu0 %795
        %v799 = vadd.f32 %v778, %v794
        %v800 = vadd.f32 %v779, %v796
        %s801 = sld [smem:[#allocation4 + $0x18]]
        %v802 = vstv %s801
        %v803 = vmul.f32 %v802, %v349
        %v804 = vmul.f32 %v802, %v350
        %v805 = vmul.f32 %v802, %v351
        %v809 = vrot.slane %v803, 3
        %v810 = vrot.slane %v804, 3
        %v811 = vsel %vm402, %v809, %v810
        %v812 = vrot.slane %v805, 3
        %v813 = vsel %vm402, %v810, %v812
        %814 = vrot.lane.b32.xlu0 %v811, 125
        %v815 = vpop.permute.xlu0 %814
        %816 = vrot.lane.b32.xlu0 %v813, 125
        %v817 = vpop.permute.xlu0 %816
        %v820 = vadd.f32 %v799, %v815
        %v821 = vadd.f32 %v800, %v817
        %s822 = sld [smem:[#allocation4 + $0x1f]]
        %v823 = vstv %s822
        %v824 = vmul.f32 %v823, %v349
        %v825 = vmul.f32 %v823, %v350
        %v826 = vmul.f32 %v823, %v351
        %v830 = vrot.slane %v824, 4
        %v831 = vrot.slane %v825, 4
        %v832 = vsel %vm176, %v830, %v831
        %v833 = vrot.slane %v826, 4
        %v834 = vsel %vm176, %v831, %v833
        %835 = vrot.lane.b32.xlu0 %v832, 125
        %v836 = vpop.permute.xlu0 %835
        %837 = vrot.lane.b32.xlu0 %v834, 125
        %v838 = vpop.permute.xlu0 %837
        %v841 = vadd.f32 %v820, %v836
        %v842 = vadd.f32 %v821, %v838
        %s843 = sld [smem:[#allocation4 + $0x26]]
        %v844 = vstv %s843
        %v845 = vmul.f32 %v844, %v349
        %v846 = vmul.f32 %v844, %v350
        %v847 = vmul.f32 %v844, %v351
        %v851 = vrot.slane %v845, 5
        %v852 = vrot.slane %v846, 5
        %v853 = vsel %vm437, %v851, %v852
        %v854 = vrot.slane %v847, 5
        %v855 = vsel %vm437, %v852, %v854
        %856 = vrot.lane.b32.xlu0 %v853, 125
        %v857 = vpop.permute.xlu0 %856
        %858 = vrot.lane.b32.xlu0 %v855, 125
        %v859 = vpop.permute.xlu0 %858
        %v862 = vadd.f32 %v841, %v857
        %v863 = vadd.f32 %v842, %v859
        %s864 = sld [smem:[#allocation4 + $0x2d]]
        %v865 = vstv %s864
        %v866 = vmul.f32 %v865, %v349
        %v867 = vmul.f32 %v865, %v350
        %v868 = vmul.f32 %v865, %v351
        %v872 = vrot.slane %v866, 6
        %v873 = vrot.slane %v867, 6
        %v874 = vsel %vm455, %v872, %v873
        %v875 = vrot.slane %v868, 6
        %v876 = vsel %vm455, %v873, %v875
        %877 = vrot.lane.b32.xlu0 %v874, 125
        %v878 = vpop.permute.xlu0 %877
        %879 = vrot.lane.b32.xlu0 %v876, 125
        %v880 = vpop.permute.xlu0 %879
        %v883 = vadd.f32 %v862, %v878
        %v884 = vadd.f32 %v863, %v880
        %s885 = sld [smem:[#allocation4 + $0x4]]
        %v886 = vstv %s885
        %v887 = vmul.f32 %v886, %v349
        %v888 = vmul.f32 %v886, %v350
        %891 = vrot.lane.b32.xlu0 %v887, 124
        %v892 = vpop.permute.xlu0 %891
        %893 = vrot.lane.b32.xlu0 %v888, 124
        %v894 = vpop.permute.xlu0 %893
        %v897 = vadd.f32 %v883, %v892
        %v898 = vadd.f32 %v884, %v894
        %s899 = sld [smem:[#allocation4 + $0xb]]
        %v900 = vstv %s899
        %v901 = vmul.f32 %v900, %v349
        %v902 = vmul.f32 %v900, %v350
        %v903 = vmul.f32 %v900, %v351
        %v907 = vrot.slane %v901, 1
        %v908 = vrot.slane %v902, 1
        %v909 = vsel %vm366, %v907, %v908
        %v910 = vrot.slane %v903, 1
        %v911 = vsel %vm366, %v908, %v910
        %912 = vrot.lane.b32.xlu0 %v909, 124
        %v913 = vpop.permute.xlu0 %912
        %914 = vrot.lane.b32.xlu0 %v911, 124
        %v915 = vpop.permute.xlu0 %914
        %v918 = vadd.f32 %v897, %v913
        %v919 = vadd.f32 %v898, %v915
        %s920 = sld [smem:[#allocation4 + $0x12]]
        %v921 = vstv %s920
        %v922 = vmul.f32 %v921, %v349
        %v923 = vmul.f32 %v921, %v350
        %v924 = vmul.f32 %v921, %v351
        %v928 = vrot.slane %v922, 2
        %v929 = vrot.slane %v923, 2
        %v930 = vsel %vm384, %v928, %v929
        %v931 = vrot.slane %v924, 2
        %v932 = vsel %vm384, %v929, %v931
        %933 = vrot.lane.b32.xlu0 %v930, 124
        %v934 = vpop.permute.xlu0 %933
        %935 = vrot.lane.b32.xlu0 %v932, 124
        %v936 = vpop.permute.xlu0 %935
        %v939 = vadd.f32 %v918, %v934
        %v940 = vadd.f32 %v919, %v936
        %s941 = sld [smem:[#allocation4 + $0x19]]
        %v942 = vstv %s941
        %v943 = vmul.f32 %v942, %v349
        %v944 = vmul.f32 %v942, %v350
        %v945 = vmul.f32 %v942, %v351
        %v949 = vrot.slane %v943, 3
        %v950 = vrot.slane %v944, 3
        %v951 = vsel %vm402, %v949, %v950
        %v952 = vrot.slane %v945, 3
        %v953 = vsel %vm402, %v950, %v952
        %954 = vrot.lane.b32.xlu0 %v951, 124
        %v955 = vpop.permute.xlu0 %954
        %956 = vrot.lane.b32.xlu0 %v953, 124
        %v957 = vpop.permute.xlu0 %956
        %v960 = vadd.f32 %v939, %v955
        %v961 = vadd.f32 %v940, %v957
        %s962 = sld [smem:[#allocation4 + $0x20]]
        %v963 = vstv %s962
        %v964 = vmul.f32 %v963, %v349
        %v965 = vmul.f32 %v963, %v350
        %v966 = vmul.f32 %v963, %v351
        %v970 = vrot.slane %v964, 4
        %v971 = vrot.slane %v965, 4
        %v972 = vsel %vm176, %v970, %v971
        %v973 = vrot.slane %v966, 4
        %v974 = vsel %vm176, %v971, %v973
        %975 = vrot.lane.b32.xlu0 %v972, 124
        %v976 = vpop.permute.xlu0 %975
        %977 = vrot.lane.b32.xlu0 %v974, 124
        %v978 = vpop.permute.xlu0 %977
        %v981 = vadd.f32 %v960, %v976
        %v982 = vadd.f32 %v961, %v978
        %s983 = sld [smem:[#allocation4 + $0x27]]
        %v984 = vstv %s983
        %v985 = vmul.f32 %v984, %v349
        %v986 = vmul.f32 %v984, %v350
        %v987 = vmul.f32 %v984, %v351
        %v991 = vrot.slane %v985, 5
        %v992 = vrot.slane %v986, 5
        %v993 = vsel %vm437, %v991, %v992
        %v994 = vrot.slane %v987, 5
        %v995 = vsel %vm437, %v992, %v994
        %996 = vrot.lane.b32.xlu0 %v993, 124
        %v997 = vpop.permute.xlu0 %996
        %998 = vrot.lane.b32.xlu0 %v995, 124
        %v999 = vpop.permute.xlu0 %998
        %v1002 = vadd.f32 %v981, %v997
        %v1003 = vadd.f32 %v982, %v999
        %s1004 = sld [smem:[#allocation4 + $0x2e]]
        %v1005 = vstv %s1004
        %v1006 = vmul.f32 %v1005, %v349
        %v1007 = vmul.f32 %v1005, %v350
        %v1008 = vmul.f32 %v1005, %v351
        %v1012 = vrot.slane %v1006, 6
        %v1013 = vrot.slane %v1007, 6
        %v1014 = vsel %vm455, %v1012, %v1013
        %v1015 = vrot.slane %v1008, 6
        %v1016 = vsel %vm455, %v1013, %v1015
        %1017 = vrot.lane.b32.xlu0 %v1014, 124
        %v1018 = vpop.permute.xlu0 %1017
        %1019 = vrot.lane.b32.xlu0 %v1016, 124
        %v1020 = vpop.permute.xlu0 %1019
        %v1023 = vadd.f32 %v1002, %v1018
        %v1024 = vadd.f32 %v1003, %v1020
        %s1025 = sld [smem:[#allocation4 + $0x5]]
        %v1026 = vstv %s1025
        %v1027 = vmul.f32 %v1026, %v349
        %v1028 = vmul.f32 %v1026, %v350
        %1031 = vrot.lane.b32.xlu0 %v1027, 123
        %v1032 = vpop.permute.xlu0 %1031
        %1033 = vrot.lane.b32.xlu0 %v1028, 123
        %v1034 = vpop.permute.xlu0 %1033
        %v1037 = vadd.f32 %v1023, %v1032
        %v1038 = vadd.f32 %v1024, %v1034
        %s1039 = sld [smem:[#allocation4 + $0xc]]
        %v1040 = vstv %s1039
        %v1041 = vmul.f32 %v1040, %v349
        %v1042 = vmul.f32 %v1040, %v350
        %v1043 = vmul.f32 %v1040, %v351
        %v1047 = vrot.slane %v1041, 1
        %v1048 = vrot.slane %v1042, 1
        %v1049 = vsel %vm366, %v1047, %v1048
        %v1050 = vrot.slane %v1043, 1
        %v1051 = vsel %vm366, %v1048, %v1050
        %1052 = vrot.lane.b32.xlu0 %v1049, 123
        %v1053 = vpop.permute.xlu0 %1052
        %1054 = vrot.lane.b32.xlu0 %v1051, 123
        %v1055 = vpop.permute.xlu0 %1054
        %v1058 = vadd.f32 %v1037, %v1053
        %v1059 = vadd.f32 %v1038, %v1055
        %s1060 = sld [smem:[#allocation4 + $0x13]]
        %v1061 = vstv %s1060
        %v1062 = vmul.f32 %v1061, %v349
        %v1063 = vmul.f32 %v1061, %v350
        %v1064 = vmul.f32 %v1061, %v351
        %v1068 = vrot.slane %v1062, 2
        %v1069 = vrot.slane %v1063, 2
        %v1070 = vsel %vm384, %v1068, %v1069
        %v1071 = vrot.slane %v1064, 2
        %v1072 = vsel %vm384, %v1069, %v1071
        %1073 = vrot.lane.b32.xlu0 %v1070, 123
        %v1074 = vpop.permute.xlu0 %1073
        %1075 = vrot.lane.b32.xlu0 %v1072, 123
        %v1076 = vpop.permute.xlu0 %1075
        %v1079 = vadd.f32 %v1058, %v1074
        %v1080 = vadd.f32 %v1059, %v1076
        %s1081 = sld [smem:[#allocation4 + $0x1a]]
        %v1082 = vstv %s1081
        %v1083 = vmul.f32 %v1082, %v349
        %v1084 = vmul.f32 %v1082, %v350
        %v1085 = vmul.f32 %v1082, %v351
        %v1089 = vrot.slane %v1083, 3
        %v1090 = vrot.slane %v1084, 3
        %v1091 = vsel %vm402, %v1089, %v1090
        %v1092 = vrot.slane %v1085, 3
        %v1093 = vsel %vm402, %v1090, %v1092
        %1094 = vrot.lane.b32.xlu0 %v1091, 123
        %v1095 = vpop.permute.xlu0 %1094
        %1096 = vrot.lane.b32.xlu0 %v1093, 123
        %v1097 = vpop.permute.xlu0 %1096
        %v1100 = vadd.f32 %v1079, %v1095
        %v1101 = vadd.f32 %v1080, %v1097
        %s1102 = sld [smem:[#allocation4 + $0x21]]
        %v1103 = vstv %s1102
        %v1104 = vmul.f32 %v1103, %v349
        %v1105 = vmul.f32 %v1103, %v350
        %v1106 = vmul.f32 %v1103, %v351
        %v1110 = vrot.slane %v1104, 4
        %v1111 = vrot.slane %v1105, 4
        %v1112 = vsel %vm176, %v1110, %v1111
        %v1113 = vrot.slane %v1106, 4
        %v1114 = vsel %vm176, %v1111, %v1113
        %1115 = vrot.lane.b32.xlu0 %v1112, 123
        %v1116 = vpop.permute.xlu0 %1115
        %1117 = vrot.lane.b32.xlu0 %v1114, 123
        %v1118 = vpop.permute.xlu0 %1117
        %v1121 = vadd.f32 %v1100, %v1116
        %v1122 = vadd.f32 %v1101, %v1118
        %s1123 = sld [smem:[#allocation4 + $0x28]]
        %v1124 = vstv %s1123
        %v1125 = vmul.f32 %v1124, %v349
        %v1126 = vmul.f32 %v1124, %v350
        %v1127 = vmul.f32 %v1124, %v351
        %v1131 = vrot.slane %v1125, 5
        %v1132 = vrot.slane %v1126, 5
        %v1133 = vsel %vm437, %v1131, %v1132
        %v1134 = vrot.slane %v1127, 5
        %v1135 = vsel %vm437, %v1132, %v1134
        %1136 = vrot.lane.b32.xlu0 %v1133, 123
        %v1137 = vpop.permute.xlu0 %1136
        %1138 = vrot.lane.b32.xlu0 %v1135, 123
        %v1139 = vpop.permute.xlu0 %1138
        %v1142 = vadd.f32 %v1121, %v1137
        %v1143 = vadd.f32 %v1122, %v1139
        %s1144 = sld [smem:[#allocation4 + $0x2f]]
        %v1145 = vstv %s1144
        %v1146 = vmul.f32 %v1145, %v349
        %v1147 = vmul.f32 %v1145, %v350
        %v1148 = vmul.f32 %v1145, %v351
        %v1152 = vrot.slane %v1146, 6
        %v1153 = vrot.slane %v1147, 6
        %v1154 = vsel %vm455, %v1152, %v1153
        %v1155 = vrot.slane %v1148, 6
        %v1156 = vsel %vm455, %v1153, %v1155
        %1157 = vrot.lane.b32.xlu0 %v1154, 123
        %v1158 = vpop.permute.xlu0 %1157
        %1159 = vrot.lane.b32.xlu0 %v1156, 123
        %v1160 = vpop.permute.xlu0 %1159
        %v1163 = vadd.f32 %v1142, %v1158
        %v1164 = vadd.f32 %v1143, %v1160
        %s1165 = sld [smem:[#allocation4 + $0x6]]
        %v1166 = vstv %s1165
        %v1167 = vmul.f32 %v1166, %v349
        %v1168 = vmul.f32 %v1166, %v350
        %1171 = vrot.lane.b32.xlu0 %v1167, 122
        %v1172 = vpop.permute.xlu0 %1171
        %1173 = vrot.lane.b32.xlu0 %v1168, 122
        %v1174 = vpop.permute.xlu0 %1173
        %v1177 = vadd.f32 %v1163, %v1172
        %v1178 = vadd.f32 %v1164, %v1174
        %s1179 = sld [smem:[#allocation4 + $0xd]]
        %v1180 = vstv %s1179
        %v1181 = vmul.f32 %v1180, %v349
        %v1182 = vmul.f32 %v1180, %v350
        %v1183 = vmul.f32 %v1180, %v351
        %v1187 = vrot.slane %v1181, 1
        %v1188 = vrot.slane %v1182, 1
        %v1189 = vsel %vm366, %v1187, %v1188
        %v1190 = vrot.slane %v1183, 1
        %v1191 = vsel %vm366, %v1188, %v1190
        %1192 = vrot.lane.b32.xlu0 %v1189, 122
        %v1193 = vpop.permute.xlu0 %1192
        %1194 = vrot.lane.b32.xlu0 %v1191, 122
        %v1195 = vpop.permute.xlu0 %1194
        %v1198 = vadd.f32 %v1177, %v1193
        %v1199 = vadd.f32 %v1178, %v1195
        %s1200 = sld [smem:[#allocation4 + $0x14]]
        %v1201 = vstv %s1200
        %v1202 = vmul.f32 %v1201, %v349
        %v1203 = vmul.f32 %v1201, %v350
        %v1204 = vmul.f32 %v1201, %v351
        %v1208 = vrot.slane %v1202, 2
        %v1209 = vrot.slane %v1203, 2
        %v1210 = vsel %vm384, %v1208, %v1209
        %v1211 = vrot.slane %v1204, 2
        %v1212 = vsel %vm384, %v1209, %v1211
        %1213 = vrot.lane.b32.xlu0 %v1210, 122
        %v1214 = vpop.permute.xlu0 %1213
        %1215 = vrot.lane.b32.xlu0 %v1212, 122
        %v1216 = vpop.permute.xlu0 %1215
        %v1219 = vadd.f32 %v1198, %v1214
        %v1220 = vadd.f32 %v1199, %v1216
        %s1221 = sld [smem:[#allocation4 + $0x1b]]
        %v1222 = vstv %s1221
        %v1223 = vmul.f32 %v1222, %v349
        %v1224 = vmul.f32 %v1222, %v350
        %v1225 = vmul.f32 %v1222, %v351
        %v1229 = vrot.slane %v1223, 3
        %v1230 = vrot.slane %v1224, 3
        %v1231 = vsel %vm402, %v1229, %v1230
        %v1232 = vrot.slane %v1225, 3
        %v1233 = vsel %vm402, %v1230, %v1232
        %1234 = vrot.lane.b32.xlu0 %v1231, 122
        %v1235 = vpop.permute.xlu0 %1234
        %1236 = vrot.lane.b32.xlu0 %v1233, 122
        %v1237 = vpop.permute.xlu0 %1236
        %v1240 = vadd.f32 %v1219, %v1235
        %v1241 = vadd.f32 %v1220, %v1237
        %s1242 = sld [smem:[#allocation4 + $0x22]]
        %v1243 = vstv %s1242
        %v1244 = vmul.f32 %v1243, %v349
        %v1245 = vmul.f32 %v1243, %v350
        %v1246 = vmul.f32 %v1243, %v351
        %v1250 = vrot.slane %v1244, 4
        %v1251 = vrot.slane %v1245, 4
        %v1252 = vsel %vm176, %v1250, %v1251
        %v1253 = vrot.slane %v1246, 4
        %v1254 = vsel %vm176, %v1251, %v1253
        %1255 = vrot.lane.b32.xlu0 %v1252, 122
        %v1256 = vpop.permute.xlu0 %1255
        %1257 = vrot.lane.b32.xlu0 %v1254, 122
        %v1258 = vpop.permute.xlu0 %1257
        %v1261 = vadd.f32 %v1240, %v1256
        %v1262 = vadd.f32 %v1241, %v1258
        %s1263 = sld [smem:[#allocation4 + $0x29]]
        %v1264 = vstv %s1263
        %v1265 = vmul.f32 %v1264, %v349
        %v1266 = vmul.f32 %v1264, %v350
        %v1267 = vmul.f32 %v1264, %v351
        %v1271 = vrot.slane %v1265, 5
        %v1272 = vrot.slane %v1266, 5
        %v1273 = vsel %vm437, %v1271, %v1272
        %v1274 = vrot.slane %v1267, 5
        %v1275 = vsel %vm437, %v1272, %v1274
        %1276 = vrot.lane.b32.xlu0 %v1273, 122
        %v1277 = vpop.permute.xlu0 %1276
        %1278 = vrot.lane.b32.xlu0 %v1275, 122
        %v1279 = vpop.permute.xlu0 %1278
        %v1282 = vadd.f32 %v1261, %v1277
        %v1283 = vadd.f32 %v1262, %v1279
        %s1284 = sld [smem:[#allocation4 + $0x30]]
        %v1285 = vstv %s1284
        %v1286 = vmul.f32 %v1285, %v349
        %v1287 = vmul.f32 %v1285, %v350
        %v1288 = vmul.f32 %v1285, %v351
        %v1292 = vrot.slane %v1286, 6
        %v1293 = vrot.slane %v1287, 6
        %v1294 = vsel %vm455, %v1292, %v1293
        %v1295 = vrot.slane %v1288, 6
        %v1296 = vsel %vm455, %v1293, %v1295
        %1297 = vrot.lane.b32.xlu0 %v1294, 122
        %v1298 = vpop.permute.xlu0 %1297
        %1299 = vrot.lane.b32.xlu0 %v1296, 122
        %v1300 = vpop.permute.xlu0 %1299
        %v1303 = vadd.f32 %v1282, %v1298
        %v1304 = vadd.f32 %v1283, %v1300
        %v1305 = vld [vmem:[%s225] sm:$0xff]
        %v1306 = vld [vmem:[%s225 + $0x8] sm:$0xff]
        %v1307 = vld [vmem:[%s225 + $0x10] sm:$0x3f]
        %s1308 = sld [smem:[#allocation4 + $0x31]]
        %v1309 = vstv %s1308
        %v1310 = vmul.f32 %v1309, %v1305
        %v1311 = vmul.f32 %v1309, %v1306
        %v1312 = vadd.f32 %v1303, %v1310
        %v1313 = vadd.f32 %v1304, %v1311
        %s1314 = sld [smem:[#allocation4 + $0x38]]
        %v1315 = vstv %s1314
        %v1316 = vmul.f32 %v1315, %v1305
        %v1317 = vmul.f32 %v1315, %v1306
        %v1318 = vmul.f32 %v1315, %v1307
        %v1322 = vrot.slane %v1316, 1
        %v1323 = vrot.slane %v1317, 1
        %v1324 = vsel %vm366, %v1322, %v1323
        %v1325 = vrot.slane %v1318, 1
        %v1326 = vsel %vm366, %v1323, %v1325
        %v1329 = vadd.f32 %v1312, %v1324
        %v1330 = vadd.f32 %v1313, %v1326
        %s1331 = sld [smem:[#allocation4 + $0x3f]]
        %v1332 = vstv %s1331
        %v1333 = vmul.f32 %v1332, %v1305
        %v1334 = vmul.f32 %v1332, %v1306
        %v1335 = vmul.f32 %v1332, %v1307
        %v1339 = vrot.slane %v1333, 2
        %v1340 = vrot.slane %v1334, 2
        %v1341 = vsel %vm384, %v1339, %v1340
        %v1342 = vrot.slane %v1335, 2
        %v1343 = vsel %vm384, %v1340, %v1342
        %v1346 = vadd.f32 %v1329, %v1341
        %v1347 = vadd.f32 %v1330, %v1343
        %s1348 = sld [smem:[#allocation4 + $0x46]]
        %v1349 = vstv %s1348
        %v1350 = vmul.f32 %v1349, %v1305
        %v1351 = vmul.f32 %v1349, %v1306
        %v1352 = vmul.f32 %v1349, %v1307
        %v1356 = vrot.slane %v1350, 3
        %v1357 = vrot.slane %v1351, 3
        %v1358 = vsel %vm402, %v1356, %v1357
        %v1359 = vrot.slane %v1352, 3
        %v1360 = vsel %vm402, %v1357, %v1359
        %v1363 = vadd.f32 %v1346, %v1358
        %v1364 = vadd.f32 %v1347, %v1360
        %s1365 = sld [smem:[#allocation4 + $0x4d]]
        %v1366 = vstv %s1365
        %v1367 = vmul.f32 %v1366, %v1305
        %v1368 = vmul.f32 %v1366, %v1306
        %v1369 = vmul.f32 %v1366, %v1307
        %v1373 = vrot.slane %v1367, 4
        %v1374 = vrot.slane %v1368, 4
        %v1375 = vsel %vm176, %v1373, %v1374
        %v1376 = vrot.slane %v1369, 4
        %v1377 = vsel %vm176, %v1374, %v1376
        %v1380 = vadd.f32 %v1363, %v1375
        %v1381 = vadd.f32 %v1364, %v1377
        %s1382 = sld [smem:[#allocation4 + $0x54]]
        %v1383 = vstv %s1382
        %v1384 = vmul.f32 %v1383, %v1305
        %v1385 = vmul.f32 %v1383, %v1306
        %v1386 = vmul.f32 %v1383, %v1307
        %v1390 = vrot.slane %v1384, 5
        %v1391 = vrot.slane %v1385, 5
        %v1392 = vsel %vm437, %v1390, %v1391
        %v1393 = vrot.slane %v1386, 5
        %v1394 = vsel %vm437, %v1391, %v1393
        %v1397 = vadd.f32 %v1380, %v1392
        %v1398 = vadd.f32 %v1381, %v1394
        %s1399 = sld [smem:[#allocation4 + $0x5b]]
        %v1400 = vstv %s1399
        %v1401 = vmul.f32 %v1400, %v1305
        %v1402 = vmul.f32 %v1400, %v1306
        %v1403 = vmul.f32 %v1400, %v1307
        %v1407 = vrot.slane %v1401, 6
        %v1408 = vrot.slane %v1402, 6
        %v1409 = vsel %vm455, %v1407, %v1408
        %v1410 = vrot.slane %v1403, 6
        %v1411 = vsel %vm455, %v1408, %v1410
        %v1414 = vadd.f32 %v1397, %v1409
        %v1415 = vadd.f32 %v1398, %v1411
        %s1416 = sld [smem:[#allocation4 + $0x32]]
        %v1417 = vstv %s1416
        %v1418 = vmul.f32 %v1417, %v1305
        %v1419 = vmul.f32 %v1417, %v1306
        %1422 = vrot.lane.b32.xlu0 %v1418, 127
        %v1423 = vpop.permute.xlu0 %1422
        %1424 = vrot.lane.b32.xlu0 %v1419, 127
        %v1425 = vpop.permute.xlu0 %1424
        %v1428 = vadd.f32 %v1414, %v1423
        %v1429 = vadd.f32 %v1415, %v1425
        %s1430 = sld [smem:[#allocation4 + $0x39]]
        %v1431 = vstv %s1430
        %v1432 = vmul.f32 %v1431, %v1305
        %v1433 = vmul.f32 %v1431, %v1306
        %v1434 = vmul.f32 %v1431, %v1307
        %v1438 = vrot.slane %v1432, 1
        %v1439 = vrot.slane %v1433, 1
        %v1440 = vsel %vm366, %v1438, %v1439
        %v1441 = vrot.slane %v1434, 1
        %v1442 = vsel %vm366, %v1439, %v1441
        %1443 = vrot.lane.b32.xlu0 %v1440, 127
        %v1444 = vpop.permute.xlu0 %1443
        %1445 = vrot.lane.b32.xlu0 %v1442, 127
        %v1446 = vpop.permute.xlu0 %1445
        %v1449 = vadd.f32 %v1428, %v1444
        %v1450 = vadd.f32 %v1429, %v1446
        %s1451 = sld [smem:[#allocation4 + $0x40]]
        %v1452 = vstv %s1451
        %v1453 = vmul.f32 %v1452, %v1305
        %v1454 = vmul.f32 %v1452, %v1306
        %v1455 = vmul.f32 %v1452, %v1307
        %v1459 = vrot.slane %v1453, 2
        %v1460 = vrot.slane %v1454, 2
        %v1461 = vsel %vm384, %v1459, %v1460
        %v1462 = vrot.slane %v1455, 2
        %v1463 = vsel %vm384, %v1460, %v1462
        %1464 = vrot.lane.b32.xlu0 %v1461, 127
        %v1465 = vpop.permute.xlu0 %1464
        %1466 = vrot.lane.b32.xlu0 %v1463, 127
        %v1467 = vpop.permute.xlu0 %1466
        %v1470 = vadd.f32 %v1449, %v1465
        %v1471 = vadd.f32 %v1450, %v1467
        %s1472 = sld [smem:[#allocation4 + $0x47]]
        %v1473 = vstv %s1472
        %v1474 = vmul.f32 %v1473, %v1305
        %v1475 = vmul.f32 %v1473, %v1306
        %v1476 = vmul.f32 %v1473, %v1307
        %v1480 = vrot.slane %v1474, 3
        %v1481 = vrot.slane %v1475, 3
        %v1482 = vsel %vm402, %v1480, %v1481
        %v1483 = vrot.slane %v1476, 3
        %v1484 = vsel %vm402, %v1481, %v1483
        %1485 = vrot.lane.b32.xlu0 %v1482, 127
        %v1486 = vpop.permute.xlu0 %1485
        %1487 = vrot.lane.b32.xlu0 %v1484, 127
        %v1488 = vpop.permute.xlu0 %1487
        %v1491 = vadd.f32 %v1470, %v1486
        %v1492 = vadd.f32 %v1471, %v1488
        %s1493 = sld [smem:[#allocation4 + $0x4e]]
        %v1494 = vstv %s1493
        %v1495 = vmul.f32 %v1494, %v1305
        %v1496 = vmul.f32 %v1494, %v1306
        %v1497 = vmul.f32 %v1494, %v1307
        %v1501 = vrot.slane %v1495, 4
        %v1502 = vrot.slane %v1496, 4
        %v1503 = vsel %vm176, %v1501, %v1502
        %v1504 = vrot.slane %v1497, 4
        %v1505 = vsel %vm176, %v1502, %v1504
        %1506 = vrot.lane.b32.xlu0 %v1503, 127
        %v1507 = vpop.permute.xlu0 %1506
        %1508 = vrot.lane.b32.xlu0 %v1505, 127
        %v1509 = vpop.permute.xlu0 %1508
        %v1512 = vadd.f32 %v1491, %v1507
        %v1513 = vadd.f32 %v1492, %v1509
        %s1514 = sld [smem:[#allocation4 + $0x55]]
        %v1515 = vstv %s1514
        %v1516 = vmul.f32 %v1515, %v1305
        %v1517 = vmul.f32 %v1515, %v1306
        %v1518 = vmul.f32 %v1515, %v1307
        %v1522 = vrot.slane %v1516, 5
        %v1523 = vrot.slane %v1517, 5
        %v1524 = vsel %vm437, %v1522, %v1523
        %v1525 = vrot.slane %v1518, 5
        %v1526 = vsel %vm437, %v1523, %v1525
        %1527 = vrot.lane.b32.xlu0 %v1524, 127
        %v1528 = vpop.permute.xlu0 %1527
        %1529 = vrot.lane.b32.xlu0 %v1526, 127
        %v1530 = vpop.permute.xlu0 %1529
        %v1533 = vadd.f32 %v1512, %v1528
        %v1534 = vadd.f32 %v1513, %v1530
        %s1535 = sld [smem:[#allocation4 + $0x5c]]
        %v1536 = vstv %s1535
        %v1537 = vmul.f32 %v1536, %v1305
        %v1538 = vmul.f32 %v1536, %v1306
        %v1539 = vmul.f32 %v1536, %v1307
        %v1543 = vrot.slane %v1537, 6
        %v1544 = vrot.slane %v1538, 6
        %v1545 = vsel %vm455, %v1543, %v1544
        %v1546 = vrot.slane %v1539, 6
        %v1547 = vsel %vm455, %v1544, %v1546
        %1548 = vrot.lane.b32.xlu0 %v1545, 127
        %v1549 = vpop.permute.xlu0 %1548
        %1550 = vrot.lane.b32.xlu0 %v1547, 127
        %v1551 = vpop.permute.xlu0 %1550
        %v1554 = vadd.f32 %v1533, %v1549
        %v1555 = vadd.f32 %v1534, %v1551
        %s1556 = sld [smem:[#allocation4 + $0x33]]
        %v1557 = vstv %s1556
        %v1558 = vmul.f32 %v1557, %v1305
        %v1559 = vmul.f32 %v1557, %v1306
        %1562 = vrot.lane.b32.xlu0 %v1558, 126
        %v1563 = vpop.permute.xlu0 %1562
        %1564 = vrot.lane.b32.xlu0 %v1559, 126
        %v1565 = vpop.permute.xlu0 %1564
        %v1568 = vadd.f32 %v1554, %v1563
        %v1569 = vadd.f32 %v1555, %v1565
        %s1570 = sld [smem:[#allocation4 + $0x3a]]
        %v1571 = vstv %s1570
        %v1572 = vmul.f32 %v1571, %v1305
        %v1573 = vmul.f32 %v1571, %v1306
        %v1574 = vmul.f32 %v1571, %v1307
        %v1578 = vrot.slane %v1572, 1
        %v1579 = vrot.slane %v1573, 1
        %v1580 = vsel %vm366, %v1578, %v1579
        %v1581 = vrot.slane %v1574, 1
        %v1582 = vsel %vm366, %v1579, %v1581
        %1583 = vrot.lane.b32.xlu0 %v1580, 126
        %v1584 = vpop.permute.xlu0 %1583
        %1585 = vrot.lane.b32.xlu0 %v1582, 126
        %v1586 = vpop.permute.xlu0 %1585
        %v1589 = vadd.f32 %v1568, %v1584
        %v1590 = vadd.f32 %v1569, %v1586
        %s1591 = sld [smem:[#allocation4 + $0x41]]
        %v1592 = vstv %s1591
        %v1593 = vmul.f32 %v1592, %v1305
        %v1594 = vmul.f32 %v1592, %v1306
        %v1595 = vmul.f32 %v1592, %v1307
        %v1599 = vrot.slane %v1593, 2
        %v1600 = vrot.slane %v1594, 2
        %v1601 = vsel %vm384, %v1599, %v1600
        %v1602 = vrot.slane %v1595, 2
        %v1603 = vsel %vm384, %v1600, %v1602
        %1604 = vrot.lane.b32.xlu0 %v1601, 126
        %v1605 = vpop.permute.xlu0 %1604
        %1606 = vrot.lane.b32.xlu0 %v1603, 126
        %v1607 = vpop.permute.xlu0 %1606
        %v1610 = vadd.f32 %v1589, %v1605
        %v1611 = vadd.f32 %v1590, %v1607
        %s1612 = sld [smem:[#allocation4 + $0x48]]
        %v1613 = vstv %s1612
        %v1614 = vmul.f32 %v1613, %v1305
        %v1615 = vmul.f32 %v1613, %v1306
        %v1616 = vmul.f32 %v1613, %v1307
        %v1620 = vrot.slane %v1614, 3
        %v1621 = vrot.slane %v1615, 3
        %v1622 = vsel %vm402, %v1620, %v1621
        %v1623 = vrot.slane %v1616, 3
        %v1624 = vsel %vm402, %v1621, %v1623
        %1625 = vrot.lane.b32.xlu0 %v1622, 126
        %v1626 = vpop.permute.xlu0 %1625
        %1627 = vrot.lane.b32.xlu0 %v1624, 126
        %v1628 = vpop.permute.xlu0 %1627
        %v1631 = vadd.f32 %v1610, %v1626
        %v1632 = vadd.f32 %v1611, %v1628
        %s1633 = sld [smem:[#allocation4 + $0x4f]]
        %v1634 = vstv %s1633
        %v1635 = vmul.f32 %v1634, %v1305
        %v1636 = vmul.f32 %v1634, %v1306
        %v1637 = vmul.f32 %v1634, %v1307
        %v1641 = vrot.slane %v1635, 4
        %v1642 = vrot.slane %v1636, 4
        %v1643 = vsel %vm176, %v1641, %v1642
        %v1644 = vrot.slane %v1637, 4
        %v1645 = vsel %vm176, %v1642, %v1644
        %1646 = vrot.lane.b32.xlu0 %v1643, 126
        %v1647 = vpop.permute.xlu0 %1646
        %1648 = vrot.lane.b32.xlu0 %v1645, 126
        %v1649 = vpop.permute.xlu0 %1648
        %v1652 = vadd.f32 %v1631, %v1647
        %v1653 = vadd.f32 %v1632, %v1649
        %s1654 = sld [smem:[#allocation4 + $0x56]]
        %v1655 = vstv %s1654
        %v1656 = vmul.f32 %v1655, %v1305
        %v1657 = vmul.f32 %v1655, %v1306
        %v1658 = vmul.f32 %v1655, %v1307
        %v1662 = vrot.slane %v1656, 5
        %v1663 = vrot.slane %v1657, 5
        %v1664 = vsel %vm437, %v1662, %v1663
        %v1665 = vrot.slane %v1658, 5
        %v1666 = vsel %vm437, %v1663, %v1665
        %1667 = vrot.lane.b32.xlu0 %v1664, 126
        %v1668 = vpop.permute.xlu0 %1667
        %1669 = vrot.lane.b32.xlu0 %v1666, 126
        %v1670 = vpop.permute.xlu0 %1669
        %v1673 = vadd.f32 %v1652, %v1668
        %v1674 = vadd.f32 %v1653, %v1670
        %s1675 = sld [smem:[#allocation4 + $0x5d]]
        %v1676 = vstv %s1675
        %v1677 = vmul.f32 %v1676, %v1305
        %v1678 = vmul.f32 %v1676, %v1306
        %v1679 = vmul.f32 %v1676, %v1307
        %v1683 = vrot.slane %v1677, 6
        %v1684 = vrot.slane %v1678, 6
        %v1685 = vsel %vm455, %v1683, %v1684
        %v1686 = vrot.slane %v1679, 6
        %v1687 = vsel %vm455, %v1684, %v1686
        %1688 = vrot.lane.b32.xlu0 %v1685, 126
        %v1689 = vpop.permute.xlu0 %1688
        %1690 = vrot.lane.b32.xlu0 %v1687, 126
        %v1691 = vpop.permute.xlu0 %1690
        %v1694 = vadd.f32 %v1673, %v1689
        %v1695 = vadd.f32 %v1674, %v1691
        %s1696 = sld [smem:[#allocation4 + $0x34]]
        %v1697 = vstv %s1696
        %v1698 = vmul.f32 %v1697, %v1305
        %v1699 = vmul.f32 %v1697, %v1306
        %1702 = vrot.lane.b32.xlu0 %v1698, 125
        %v1703 = vpop.permute.xlu0 %1702
        %1704 = vrot.lane.b32.xlu0 %v1699, 125
        %v1705 = vpop.permute.xlu0 %1704
        %v1708 = vadd.f32 %v1694, %v1703
        %v1709 = vadd.f32 %v1695, %v1705
        %s1710 = sld [smem:[#allocation4 + $0x3b]]
        %v1711 = vstv %s1710
        %v1712 = vmul.f32 %v1711, %v1305
        %v1713 = vmul.f32 %v1711, %v1306
        %v1714 = vmul.f32 %v1711, %v1307
        %v1718 = vrot.slane %v1712, 1
        %v1719 = vrot.slane %v1713, 1
        %v1720 = vsel %vm366, %v1718, %v1719
        %v1721 = vrot.slane %v1714, 1
        %v1722 = vsel %vm366, %v1719, %v1721
        %1723 = vrot.lane.b32.xlu0 %v1720, 125
        %v1724 = vpop.permute.xlu0 %1723
        %1725 = vrot.lane.b32.xlu0 %v1722, 125
        %v1726 = vpop.permute.xlu0 %1725
        %v1729 = vadd.f32 %v1708, %v1724
        %v1730 = vadd.f32 %v1709, %v1726
        %s1731 = sld [smem:[#allocation4 + $0x42]]
        %v1732 = vstv %s1731
        %v1733 = vmul.f32 %v1732, %v1305
        %v1734 = vmul.f32 %v1732, %v1306
        %v1735 = vmul.f32 %v1732, %v1307
        %v1739 = vrot.slane %v1733, 2
        %v1740 = vrot.slane %v1734, 2
        %v1741 = vsel %vm384, %v1739, %v1740
        %v1742 = vrot.slane %v1735, 2
        %v1743 = vsel %vm384, %v1740, %v1742
        %1744 = vrot.lane.b32.xlu0 %v1741, 125
        %v1745 = vpop.permute.xlu0 %1744
        %1746 = vrot.lane.b32.xlu0 %v1743, 125
        %v1747 = vpop.permute.xlu0 %1746
        %v1750 = vadd.f32 %v1729, %v1745
        %v1751 = vadd.f32 %v1730, %v1747
        %s1752 = sld [smem:[#allocation4 + $0x49]]
        %v1753 = vstv %s1752
        %v1754 = vmul.f32 %v1753, %v1305
        %v1755 = vmul.f32 %v1753, %v1306
        %v1756 = vmul.f32 %v1753, %v1307
        %v1760 = vrot.slane %v1754, 3
        %v1761 = vrot.slane %v1755, 3
        %v1762 = vsel %vm402, %v1760, %v1761
        %v1763 = vrot.slane %v1756, 3
        %v1764 = vsel %vm402, %v1761, %v1763
        %1765 = vrot.lane.b32.xlu0 %v1762, 125
        %v1766 = vpop.permute.xlu0 %1765
        %1767 = vrot.lane.b32.xlu0 %v1764, 125
        %v1768 = vpop.permute.xlu0 %1767
        %v1771 = vadd.f32 %v1750, %v1766
        %v1772 = vadd.f32 %v1751, %v1768
        %s1773 = sld [smem:[#allocation4 + $0x50]]
        %v1774 = vstv %s1773
        %v1775 = vmul.f32 %v1774, %v1305
        %v1776 = vmul.f32 %v1774, %v1306
        %v1777 = vmul.f32 %v1774, %v1307
        %v1781 = vrot.slane %v1775, 4
        %v1782 = vrot.slane %v1776, 4
        %v1783 = vsel %vm176, %v1781, %v1782
        %v1784 = vrot.slane %v1777, 4
        %v1785 = vsel %vm176, %v1782, %v1784
        %1786 = vrot.lane.b32.xlu0 %v1783, 125
        %v1787 = vpop.permute.xlu0 %1786
        %1788 = vrot.lane.b32.xlu0 %v1785, 125
        %v1789 = vpop.permute.xlu0 %1788
        %v1792 = vadd.f32 %v1771, %v1787
        %v1793 = vadd.f32 %v1772, %v1789
        %s1794 = sld [smem:[#allocation4 + $0x57]]
        %v1795 = vstv %s1794
        %v1796 = vmul.f32 %v1795, %v1305
        %v1797 = vmul.f32 %v1795, %v1306
        %v1798 = vmul.f32 %v1795, %v1307
        %v1802 = vrot.slane %v1796, 5
        %v1803 = vrot.slane %v1797, 5
        %v1804 = vsel %vm437, %v1802, %v1803
        %v1805 = vrot.slane %v1798, 5
        %v1806 = vsel %vm437, %v1803, %v1805
        %1807 = vrot.lane.b32.xlu0 %v1804, 125
        %v1808 = vpop.permute.xlu0 %1807
        %1809 = vrot.lane.b32.xlu0 %v1806, 125
        %v1810 = vpop.permute.xlu0 %1809
        %v1813 = vadd.f32 %v1792, %v1808
        %v1814 = vadd.f32 %v1793, %v1810
        %s1815 = sld [smem:[#allocation4 + $0x5e]]
        %v1816 = vstv %s1815
        %v1817 = vmul.f32 %v1816, %v1305
        %v1818 = vmul.f32 %v1816, %v1306
        %v1819 = vmul.f32 %v1816, %v1307
        %v1823 = vrot.slane %v1817, 6
        %v1824 = vrot.slane %v1818, 6
        %v1825 = vsel %vm455, %v1823, %v1824
        %v1826 = vrot.slane %v1819, 6
        %v1827 = vsel %vm455, %v1824, %v1826
        %1828 = vrot.lane.b32.xlu0 %v1825, 125
        %v1829 = vpop.permute.xlu0 %1828
        %1830 = vrot.lane.b32.xlu0 %v1827, 125
        %v1831 = vpop.permute.xlu0 %1830
        %v1834 = vadd.f32 %v1813, %v1829
        %v1835 = vadd.f32 %v1814, %v1831
        %s1836 = sld [smem:[#allocation4 + $0x35]]
        %v1837 = vstv %s1836
        %v1838 = vmul.f32 %v1837, %v1305
        %v1839 = vmul.f32 %v1837, %v1306
        %1842 = vrot.lane.b32.xlu0 %v1838, 124
        %v1843 = vpop.permute.xlu0 %1842
        %1844 = vrot.lane.b32.xlu0 %v1839, 124
        %v1845 = vpop.permute.xlu0 %1844
        %v1848 = vadd.f32 %v1834, %v1843
        %v1849 = vadd.f32 %v1835, %v1845
        %s1850 = sld [smem:[#allocation4 + $0x3c]]
        %v1851 = vstv %s1850
        %v1852 = vmul.f32 %v1851, %v1305
        %v1853 = vmul.f32 %v1851, %v1306
        %v1854 = vmul.f32 %v1851, %v1307
        %v1858 = vrot.slane %v1852, 1
        %v1859 = vrot.slane %v1853, 1
        %v1860 = vsel %vm366, %v1858, %v1859
        %v1861 = vrot.slane %v1854, 1
        %v1862 = vsel %vm366, %v1859, %v1861
        %1863 = vrot.lane.b32.xlu0 %v1860, 124
        %v1864 = vpop.permute.xlu0 %1863
        %1865 = vrot.lane.b32.xlu0 %v1862, 124
        %v1866 = vpop.permute.xlu0 %1865
        %v1869 = vadd.f32 %v1848, %v1864
        %v1870 = vadd.f32 %v1849, %v1866
        %s1871 = sld [smem:[#allocation4 + $0x43]]
        %v1872 = vstv %s1871
        %v1873 = vmul.f32 %v1872, %v1305
        %v1874 = vmul.f32 %v1872, %v1306
        %v1875 = vmul.f32 %v1872, %v1307
        %v1879 = vrot.slane %v1873, 2
        %v1880 = vrot.slane %v1874, 2
        %v1881 = vsel %vm384, %v1879, %v1880
        %v1882 = vrot.slane %v1875, 2
        %v1883 = vsel %vm384, %v1880, %v1882
        %1884 = vrot.lane.b32.xlu0 %v1881, 124
        %v1885 = vpop.permute.xlu0 %1884
        %1886 = vrot.lane.b32.xlu0 %v1883, 124
        %v1887 = vpop.permute.xlu0 %1886
        %v1890 = vadd.f32 %v1869, %v1885
        %v1891 = vadd.f32 %v1870, %v1887
        %s1892 = sld [smem:[#allocation4 + $0x4a]]
        %v1893 = vstv %s1892
        %v1894 = vmul.f32 %v1893, %v1305
        %v1895 = vmul.f32 %v1893, %v1306
        %v1896 = vmul.f32 %v1893, %v1307
        %v1900 = vrot.slane %v1894, 3
        %v1901 = vrot.slane %v1895, 3
        %v1902 = vsel %vm402, %v1900, %v1901
        %v1903 = vrot.slane %v1896, 3
        %v1904 = vsel %vm402, %v1901, %v1903
        %1905 = vrot.lane.b32.xlu0 %v1902, 124
        %v1906 = vpop.permute.xlu0 %1905
        %1907 = vrot.lane.b32.xlu0 %v1904, 124
        %v1908 = vpop.permute.xlu0 %1907
        %v1911 = vadd.f32 %v1890, %v1906
        %v1912 = vadd.f32 %v1891, %v1908
        %s1913 = sld [smem:[#allocation4 + $0x51]]
        %v1914 = vstv %s1913
        %v1915 = vmul.f32 %v1914, %v1305
        %v1916 = vmul.f32 %v1914, %v1306
        %v1917 = vmul.f32 %v1914, %v1307
        %v1921 = vrot.slane %v1915, 4
        %v1922 = vrot.slane %v1916, 4
        %v1923 = vsel %vm176, %v1921, %v1922
        %v1924 = vrot.slane %v1917, 4
        %v1925 = vsel %vm176, %v1922, %v1924
        %1926 = vrot.lane.b32.xlu0 %v1923, 124
        %v1927 = vpop.permute.xlu0 %1926
        %1928 = vrot.lane.b32.xlu0 %v1925, 124
        %v1929 = vpop.permute.xlu0 %1928
        %v1932 = vadd.f32 %v1911, %v1927
        %v1933 = vadd.f32 %v1912, %v1929
        %s1934 = sld [smem:[#allocation4 + $0x58]]
        %v1935 = vstv %s1934
        %v1936 = vmul.f32 %v1935, %v1305
        %v1937 = vmul.f32 %v1935, %v1306
        %v1938 = vmul.f32 %v1935, %v1307
        %v1942 = vrot.slane %v1936, 5
        %v1943 = vrot.slane %v1937, 5
        %v1944 = vsel %vm437, %v1942, %v1943
        %v1945 = vrot.slane %v1938, 5
        %v1946 = vsel %vm437, %v1943, %v1945
        %1947 = vrot.lane.b32.xlu0 %v1944, 124
        %v1948 = vpop.permute.xlu0 %1947
        %1949 = vrot.lane.b32.xlu0 %v1946, 124
        %v1950 = vpop.permute.xlu0 %1949
        %v1953 = vadd.f32 %v1932, %v1948
        %v1954 = vadd.f32 %v1933, %v1950
        %s1955 = sld [smem:[#allocation4 + $0x5f]]
        %v1956 = vstv %s1955
        %v1957 = vmul.f32 %v1956, %v1305
        %v1958 = vmul.f32 %v1956, %v1306
        %v1959 = vmul.f32 %v1956, %v1307
        %v1963 = vrot.slane %v1957, 6
        %v1964 = vrot.slane %v1958, 6
        %v1965 = vsel %vm455, %v1963, %v1964
        %v1966 = vrot.slane %v1959, 6
        %v1967 = vsel %vm455, %v1964, %v1966
        %1968 = vrot.lane.b32.xlu0 %v1965, 124
        %v1969 = vpop.permute.xlu0 %1968
        %1970 = vrot.lane.b32.xlu0 %v1967, 124
        %v1971 = vpop.permute.xlu0 %1970
        %v1974 = vadd.f32 %v1953, %v1969
        %v1975 = vadd.f32 %v1954, %v1971
        %s1976 = sld [smem:[#allocation4 + $0x36]]
        %v1977 = vstv %s1976
        %v1978 = vmul.f32 %v1977, %v1305
        %v1979 = vmul.f32 %v1977, %v1306
        %1982 = vrot.lane.b32.xlu0 %v1978, 123
        %v1983 = vpop.permute.xlu0 %1982
        %1984 = vrot.lane.b32.xlu0 %v1979, 123
        %v1985 = vpop.permute.xlu0 %1984
        %v1988 = vadd.f32 %v1974, %v1983
        %v1989 = vadd.f32 %v1975, %v1985
        %s1990 = sld [smem:[#allocation4 + $0x3d]]
        %v1991 = vstv %s1990
        %v1992 = vmul.f32 %v1991, %v1305
        %v1993 = vmul.f32 %v1991, %v1306
        %v1994 = vmul.f32 %v1991, %v1307
        %v1998 = vrot.slane %v1992, 1
        %v1999 = vrot.slane %v1993, 1
        %v2000 = vsel %vm366, %v1998, %v1999
        %v2001 = vrot.slane %v1994, 1
        %v2002 = vsel %vm366, %v1999, %v2001
        %2003 = vrot.lane.b32.xlu0 %v2000, 123
        %v2004 = vpop.permute.xlu0 %2003
        %2005 = vrot.lane.b32.xlu0 %v2002, 123
        %v2006 = vpop.permute.xlu0 %2005
        %v2009 = vadd.f32 %v1988, %v2004
        %v2010 = vadd.f32 %v1989, %v2006
        %s2011 = sld [smem:[#allocation4 + $0x44]]
        %v2012 = vstv %s2011
        %v2013 = vmul.f32 %v2012, %v1305
        %v2014 = vmul.f32 %v2012, %v1306
        %v2015 = vmul.f32 %v2012, %v1307
        %v2019 = vrot.slane %v2013, 2
        %v2020 = vrot.slane %v2014, 2
        %v2021 = vsel %vm384, %v2019, %v2020
        %v2022 = vrot.slane %v2015, 2
        %v2023 = vsel %vm384, %v2020, %v2022
        %2024 = vrot.lane.b32.xlu0 %v2021, 123
        %v2025 = vpop.permute.xlu0 %2024
        %2026 = vrot.lane.b32.xlu0 %v2023, 123
        %v2027 = vpop.permute.xlu0 %2026
        %v2030 = vadd.f32 %v2009, %v2025
        %v2031 = vadd.f32 %v2010, %v2027
        %s2032 = sld [smem:[#allocation4 + $0x4b]]
        %v2033 = vstv %s2032
        %v2034 = vmul.f32 %v2033, %v1305
        %v2035 = vmul.f32 %v2033, %v1306
        %v2036 = vmul.f32 %v2033, %v1307
        %v2040 = vrot.slane %v2034, 3
        %v2041 = vrot.slane %v2035, 3
        %v2042 = vsel %vm402, %v2040, %v2041
        %v2043 = vrot.slane %v2036, 3
        %v2044 = vsel %vm402, %v2041, %v2043
        %2045 = vrot.lane.b32.xlu0 %v2042, 123
        %v2046 = vpop.permute.xlu0 %2045
        %2047 = vrot.lane.b32.xlu0 %v2044, 123
        %v2048 = vpop.permute.xlu0 %2047
        %v2051 = vadd.f32 %v2030, %v2046
        %v2052 = vadd.f32 %v2031, %v2048
        %s2053 = sld [smem:[#allocation4 + $0x52]]
        %v2054 = vstv %s2053
        %v2055 = vmul.f32 %v2054, %v1305
        %v2056 = vmul.f32 %v2054, %v1306
        %v2057 = vmul.f32 %v2054, %v1307
        %v2061 = vrot.slane %v2055, 4
        %v2062 = vrot.slane %v2056, 4
        %v2063 = vsel %vm176, %v2061, %v2062
        %v2064 = vrot.slane %v2057, 4
        %v2065 = vsel %vm176, %v2062, %v2064
        %2066 = vrot.lane.b32.xlu0 %v2063, 123
        %v2067 = vpop.permute.xlu0 %2066
        %2068 = vrot.lane.b32.xlu0 %v2065, 123
        %v2069 = vpop.permute.xlu0 %2068
        %v2072 = vadd.f32 %v2051, %v2067
        %v2073 = vadd.f32 %v2052, %v2069
        %s2074 = sld [smem:[#allocation4 + $0x59]]
        %v2075 = vstv %s2074
        %v2076 = vmul.f32 %v2075, %v1305
        %v2077 = vmul.f32 %v2075, %v1306
        %v2078 = vmul.f32 %v2075, %v1307
        %v2082 = vrot.slane %v2076, 5
        %v2083 = vrot.slane %v2077, 5
        %v2084 = vsel %vm437, %v2082, %v2083
        %v2085 = vrot.slane %v2078, 5
        %v2086 = vsel %vm437, %v2083, %v2085
        %2087 = vrot.lane.b32.xlu0 %v2084, 123
        %v2088 = vpop.permute.xlu0 %2087
        %2089 = vrot.lane.b32.xlu0 %v2086, 123
        %v2090 = vpop.permute.xlu0 %2089
        %v2093 = vadd.f32 %v2072, %v2088
        %v2094 = vadd.f32 %v2073, %v2090
        %s2095 = sld [smem:[#allocation4 + $0x60]]
        %v2096 = vstv %s2095
        %v2097 = vmul.f32 %v2096, %v1305
        %v2098 = vmul.f32 %v2096, %v1306
        %v2099 = vmul.f32 %v2096, %v1307
        %v2103 = vrot.slane %v2097, 6
        %v2104 = vrot.slane %v2098, 6
        %v2105 = vsel %vm455, %v2103, %v2104
        %v2106 = vrot.slane %v2099, 6
        %v2107 = vsel %vm455, %v2104, %v2106
        %2108 = vrot.lane.b32.xlu0 %v2105, 123
        %v2109 = vpop.permute.xlu0 %2108
        %2110 = vrot.lane.b32.xlu0 %v2107, 123
        %v2111 = vpop.permute.xlu0 %2110
        %v2114 = vadd.f32 %v2093, %v2109
        %v2115 = vadd.f32 %v2094, %v2111
        %s2116 = sld [smem:[#allocation4 + $0x37]]
        %v2117 = vstv %s2116
        %v2118 = vmul.f32 %v2117, %v1305
        %v2119 = vmul.f32 %v2117, %v1306
        %2122 = vrot.lane.b32.xlu0 %v2118, 122
        %v2123 = vpop.permute.xlu0 %2122
        %2124 = vrot.lane.b32.xlu0 %v2119, 122
        %v2125 = vpop.permute.xlu0 %2124
        %v2128 = vadd.f32 %v2114, %v2123
        %v2129 = vadd.f32 %v2115, %v2125
        %s2130 = sld [smem:[#allocation4 + $0x3e]]
        %v2131 = vstv %s2130
        %v2132 = vmul.f32 %v2131, %v1305
        %v2133 = vmul.f32 %v2131, %v1306
        %v2134 = vmul.f32 %v2131, %v1307
        %v2138 = vrot.slane %v2132, 1
        %v2139 = vrot.slane %v2133, 1
        %v2140 = vsel %vm366, %v2138, %v2139
        %v2141 = vrot.slane %v2134, 1
        %v2142 = vsel %vm366, %v2139, %v2141
        %2143 = vrot.lane.b32.xlu0 %v2140, 122
        %v2144 = vpop.permute.xlu0 %2143
        %2145 = vrot.lane.b32.xlu0 %v2142, 122
        %v2146 = vpop.permute.xlu0 %2145
        %v2149 = vadd.f32 %v2128, %v2144
        %v2150 = vadd.f32 %v2129, %v2146
        %s2151 = sld [smem:[#allocation4 + $0x45]]
        %v2152 = vstv %s2151
        %v2153 = vmul.f32 %v2152, %v1305
        %v2154 = vmul.f32 %v2152, %v1306
        %v2155 = vmul.f32 %v2152, %v1307
        %v2159 = vrot.slane %v2153, 2
        %v2160 = vrot.slane %v2154, 2
        %v2161 = vsel %vm384, %v2159, %v2160
        %v2162 = vrot.slane %v2155, 2
        %v2163 = vsel %vm384, %v2160, %v2162
        %2164 = vrot.lane.b32.xlu0 %v2161, 122
        %v2165 = vpop.permute.xlu0 %2164
        %2166 = vrot.lane.b32.xlu0 %v2163, 122
        %v2167 = vpop.permute.xlu0 %2166
        %v2170 = vadd.f32 %v2149, %v2165
        %v2171 = vadd.f32 %v2150, %v2167
        %s2172 = sld [smem:[#allocation4 + $0x4c]]
        %v2173 = vstv %s2172
        %v2174 = vmul.f32 %v2173, %v1305
        %v2175 = vmul.f32 %v2173, %v1306
        %v2176 = vmul.f32 %v2173, %v1307
        %v2180 = vrot.slane %v2174, 3
        %v2181 = vrot.slane %v2175, 3
        %v2182 = vsel %vm402, %v2180, %v2181
        %v2183 = vrot.slane %v2176, 3
        %v2184 = vsel %vm402, %v2181, %v2183
        %2185 = vrot.lane.b32.xlu0 %v2182, 122
        %v2186 = vpop.permute.xlu0 %2185
        %2187 = vrot.lane.b32.xlu0 %v2184, 122
        %v2188 = vpop.permute.xlu0 %2187
        %v2191 = vadd.f32 %v2170, %v2186
        %v2192 = vadd.f32 %v2171, %v2188
        %s2193 = sld [smem:[#allocation4 + $0x53]]
        %v2194 = vstv %s2193
        %v2195 = vmul.f32 %v2194, %v1305
        %v2196 = vmul.f32 %v2194, %v1306
        %v2197 = vmul.f32 %v2194, %v1307
        %v2201 = vrot.slane %v2195, 4
        %v2202 = vrot.slane %v2196, 4
        %v2203 = vsel %vm176, %v2201, %v2202
        %v2204 = vrot.slane %v2197, 4
        %v2205 = vsel %vm176, %v2202, %v2204
        %2206 = vrot.lane.b32.xlu0 %v2203, 122
        %v2207 = vpop.permute.xlu0 %2206
        %2208 = vrot.lane.b32.xlu0 %v2205, 122
        %v2209 = vpop.permute.xlu0 %2208
        %v2212 = vadd.f32 %v2191, %v2207
        %v2213 = vadd.f32 %v2192, %v2209
        %s2214 = sld [smem:[#allocation4 + $0x5a]]
        %v2215 = vstv %s2214
        %v2216 = vmul.f32 %v2215, %v1305
        %v2217 = vmul.f32 %v2215, %v1306
        %v2218 = vmul.f32 %v2215, %v1307
        %v2222 = vrot.slane %v2216, 5
        %v2223 = vrot.slane %v2217, 5
        %v2224 = vsel %vm437, %v2222, %v2223
        %v2225 = vrot.slane %v2218, 5
        %v2226 = vsel %vm437, %v2223, %v2225
        %2227 = vrot.lane.b32.xlu0 %v2224, 122
        %v2228 = vpop.permute.xlu0 %2227
        %2229 = vrot.lane.b32.xlu0 %v2226, 122
        %v2230 = vpop.permute.xlu0 %2229
        %v2233 = vadd.f32 %v2212, %v2228
        %v2234 = vadd.f32 %v2213, %v2230
        %s2235 = sld [smem:[#allocation4 + $0x61]]
        %v2236 = vstv %s2235
        %v2237 = vmul.f32 %v2236, %v1305
        %v2238 = vmul.f32 %v2236, %v1306
        %v2239 = vmul.f32 %v2236, %v1307
        %v2243 = vrot.slane %v2237, 6
        %v2244 = vrot.slane %v2238, 6
        %v2245 = vsel %vm455, %v2243, %v2244
        %v2246 = vrot.slane %v2239, 6
        %v2247 = vsel %vm455, %v2244, %v2246
        %2248 = vrot.lane.b32.xlu0 %v2245, 122
        %v2249 = vpop.permute.xlu0 %2248
        %2250 = vrot.lane.b32.xlu0 %v2247, 122
        %v2251 = vpop.permute.xlu0 %2250
        %v2254 = vadd.f32 %v2233, %v2249
        %v2255 = vadd.f32 %v2234, %v2251
        %v2256 = vxor.u32 %v2254, 2147483648
        %v2257 = vxor.u32 %v2255, 2147483648
        %v2258 = vmul.f32 %v2256, 1.442695
        %v2259 = vpow.pop %v2258
        %v2260 = vmul.f32 %v2257, 1.442695
        %v2261 = vpow.pop %v2260
        %v2262 = vadd.f32 %v2259, 1.0
        %v2263 = vadd.f32 %v2261, 1.0
        %v2264 = vrcp.pop %v2262
        %v2265 = vmul.f32 1.0, %v2264
        %v2266 = vrcp.pop %v2263
        %v2267 = vmul.f32 1.0, %v2266
        %v2268 = vlaneseq
        %vm2269 = vcmp.ge.s32.totalorder %v2268, 0
        %vm2270 = vcmp.lt.s32.totalorder %v2268, 16
        %vm2271 = vmand %vm2269, %vm2270
        %2272 = vst.msk [vmem:[#allocation2] sm:$0x1] %vm2271, %v2265
        %v2275 = vunpack.c.l.s4 1966171168
        %v2276 = vunpack.c.0.s8 %v2275
        %v2277 = vlaneseq
        %v2278 = vshrl.u32 %v2277, 7
        %v2279 = vsub.s32 %v2276, %v2278
        %v2280 = vrot.slane %v2265, %v2279
        %v2281 = vcombine.high %v2280, %v2280
        %v2283 = vunpack.c.l.s4 1966171168
        %v2284 = vunpack.c.0.s8 %v2283
        %v2285 = vlaneseq
        %v2286 = vshrl.u32 %v2285, 7
        %v2287 = vsub.s32 %v2284, %v2286
        %v2288 = vrot.slane %v2280, %v2287
        %v2290 = vunpack.c.l.s4 1966171168
        %v2291 = vunpack.c.0.s8 %v2290
        %v2292 = vlaneseq
        %v2293 = vshrl.u32 %v2292, 7
        %v2294 = vsub.s32 %v2291, %v2293
        %v2295 = vrot.slane %v2281, %v2294
        %2296 = vrot.lane.b32.xlu0 %v2295, 16
        %v2297 = vpop.permute.xlu0 %2296
        %vm2299 = vcmp.ge.s32.totalorder %v2268, 16
        %vm2300 = vcmp.lt.s32.totalorder %v2268, 32
        %vm2301 = vmand %vm2299, %vm2300
        %2302 = vst.msk [vmem:[#allocation2] sm:$0x1] %vm2301, %v2297
        %v2303 = vcombine.high %v2288, %v2288
        %2304 = vrot.lane.b32.xlu0 %v2303, 32
        %v2305 = vpop.permute.xlu0 %2304
        %vm2307 = vcmp.ge.s32.totalorder %v2268, 32
        %vm2308 = vcmp.lt.s32.totalorder %v2268, 48
        %vm2309 = vmand %vm2307, %vm2308
        %2310 = vst.msk [vmem:[#allocation2] sm:$0x1] %vm2309, %v2305
        %v2311 = vcombine.high %v2295, %v2295
        %2312 = vrot.lane.b32.xlu0 %v2311, 48
        %v2313 = vpop.permute.xlu0 %2312
        %vm2315 = vcmp.ge.s32.totalorder %v2268, 48
        %vm2316 = vcmp.lt.s32.totalorder %v2268, 64
        %vm2317 = vmand %vm2315, %vm2316
        %2318 = vst.msk [vmem:[#allocation2] sm:$0x1] %vm2317, %v2313
        %v2319 = vcombine.high %v2265, %v2265
        %v2321 = vunpack.c.l.s4 1966171168
        %v2322 = vunpack.c.0.s8 %v2321
        %v2323 = vlaneseq
        %v2324 = vshrl.u32 %v2323, 7
        %v2325 = vsub.s32 %v2322, %v2324
        %v2326 = vrot.slane %v2319, %v2325
        %v2328 = vunpack.c.l.s4 1966171168
        %v2329 = vunpack.c.0.s8 %v2328
        %v2330 = vlaneseq
        %v2331 = vshrl.u32 %v2330, 7
        %v2332 = vsub.s32 %v2329, %v2331
        %v2333 = vrot.slane %v2326, %v2332
        %2334 = vrot.lane.b32.xlu0 %v2333, 64
        %v2335 = vpop.permute.xlu0 %2334
        %vm2337 = vcmp.ge.s32.totalorder %v2268, 64
        %vm2338 = vcmp.lt.s32.totalorder %v2268, 80
        %vm2339 = vmand %vm2337, %vm2338
        %2340 = vst.msk [vmem:[#allocation2] sm:$0x1] %vm2339, %v2335
        %v2341 = vcombine.high %v2326, %v2326
        %v2343 = vunpack.c.l.s4 1966171168
        %v2344 = vunpack.c.0.s8 %v2343
        %v2345 = vlaneseq
        %v2346 = vshrl.u32 %v2345, 7
        %v2347 = vsub.s32 %v2344, %v2346
        %v2348 = vrot.slane %v2341, %v2347
        %2349 = vrot.lane.b32.xlu0 %v2348, 80
        %v2350 = vpop.permute.xlu0 %2349
        %vm2352 = vcmp.ge.s32.totalorder %v2268, 80
        %vm2353 = vcmp.lt.s32.totalorder %v2268, 96
        %vm2354 = vmand %vm2352, %vm2353
        %2355 = vst.msk [vmem:[#allocation2] sm:$0x1] %vm2354, %v2350
        %v2356 = vcombine.high %v2333, %v2333
        %2357 = vrot.lane.b32.xlu0 %v2356, 96
        %v2358 = vpop.permute.xlu0 %2357
        %vm2360 = vcmp.ge.s32.totalorder %v2268, 96
        %vm2361 = vcmp.lt.s32.totalorder %v2268, 112
        %vm2362 = vmand %vm2360, %vm2361
        %2363 = vst.msk [vmem:[#allocation2] sm:$0x1] %vm2362, %v2358
        %v2364 = vcombine.high %v2348, %v2348
        %2365 = vrot.lane.b32.xlu0 %v2364, 112
        %v2366 = vpop.permute.xlu0 %2365
        %vm2368 = vcmp.ge.s32.totalorder %v2268, 112
        %vm2369 = vcmp.lt.s32.totalorder %v2268, 128
        %vm2370 = vmand %vm2368, %vm2369
        %2371 = vst.msk [vmem:[#allocation2] sm:$0x1] %vm2370, %v2366
        %2372 = vst.msk [vmem:[#allocation2 + $0x1] sm:$0x1] %vm2271, %v2267
        %v2375 = vunpack.c.l.s4 1966171168
        %v2376 = vunpack.c.0.s8 %v2375
        %v2377 = vlaneseq
        %v2378 = vshrl.u32 %v2377, 7
        %v2379 = vsub.s32 %v2376, %v2378
        %v2380 = vrot.slane %v2267, %v2379
        %v2381 = vcombine.high %v2380, %v2380
        %v2383 = vunpack.c.l.s4 1966171168
        %v2384 = vunpack.c.0.s8 %v2383
        %v2385 = vlaneseq
        %v2386 = vshrl.u32 %v2385, 7
        %v2387 = vsub.s32 %v2384, %v2386
        %v2388 = vrot.slane %v2380, %v2387
        %v2390 = vunpack.c.l.s4 1966171168
        %v2391 = vunpack.c.0.s8 %v2390
        %v2392 = vlaneseq
        %v2393 = vshrl.u32 %v2392, 7
        %v2394 = vsub.s32 %v2391, %v2393
        %v2395 = vrot.slane %v2381, %v2394
        %2396 = vrot.lane.b32.xlu0 %v2395, 16
        %v2397 = vpop.permute.xlu0 %2396
        %2399 = vst.msk [vmem:[#allocation2 + $0x1] sm:$0x1] %vm2301, %v2397
        %v2400 = vcombine.high %v2388, %v2388
        %2401 = vrot.lane.b32.xlu0 %v2400, 32
        %v2402 = vpop.permute.xlu0 %2401
        %2404 = vst.msk [vmem:[#allocation2 + $0x1] sm:$0x1] %vm2309, %v2402
        %v2405 = vcombine.high %v2395, %v2395
        %2406 = vrot.lane.b32.xlu0 %v2405, 48
        %v2407 = vpop.permute.xlu0 %2406
        %2409 = vst.msk [vmem:[#allocation2 + $0x1] sm:$0x1] %vm2317, %v2407
        %v2410 = vcombine.high %v2267, %v2267
        %v2412 = vunpack.c.l.s4 1966171168
        %v2413 = vunpack.c.0.s8 %v2412
        %v2414 = vlaneseq
        %v2415 = vshrl.u32 %v2414, 7
        %v2416 = vsub.s32 %v2413, %v2415
        %v2417 = vrot.slane %v2410, %v2416
        %v2419 = vunpack.c.l.s4 1966171168
        %v2420 = vunpack.c.0.s8 %v2419
        %v2421 = vlaneseq
        %v2422 = vshrl.u32 %v2421, 7
        %v2423 = vsub.s32 %v2420, %v2422
        %v2424 = vrot.slane %v2417, %v2423
        %2425 = vrot.lane.b32.xlu0 %v2424, 64
        %v2426 = vpop.permute.xlu0 %2425
        %2428 = vst.msk [vmem:[#allocation2 + $0x1] sm:$0x1] %vm2339, %v2426
        %v2429 = vcombine.high %v2417, %v2417
        %v2431 = vunpack.c.l.s4 1966171168
        %v2432 = vunpack.c.0.s8 %v2431
        %v2433 = vlaneseq
        %v2434 = vshrl.u32 %v2433, 7
        %v2435 = vsub.s32 %v2432, %v2434
        %v2436 = vrot.slane %v2429, %v2435
        %2437 = vrot.lane.b32.xlu0 %v2436, 80
        %v2438 = vpop.permute.xlu0 %2437
        %2440 = vst.msk [vmem:[#allocation2 + $0x1] sm:$0x1] %vm2354, %v2438
        %v2441 = vcombine.high %v2424, %v2424
        %2442 = vrot.lane.b32.xlu0 %v2441, 96
        %v2443 = vpop.permute.xlu0 %2442
        %2445 = vst.msk [vmem:[#allocation2 + $0x1] sm:$0x1] %vm2362, %v2443
        %v2446 = vcombine.high %v2436, %v2436
        %2447 = vrot.lane.b32.xlu0 %v2446, 112
        %v2448 = vpop.permute.xlu0 %2447
        %2450 = vst.msk [vmem:[#allocation2 + $0x1] sm:$0x1] %vm2370, %v2448
        %v2451 = vld [vmem:[#allocation2] sm:$0x3]
        %v2453 = vlaneseq
        %v2454 = vshrl.u32 %v2453, 7
        %v2455 = vsub.s32 0, %v2454
        %v2456 = vrot.slane %v2451, %v2455
        %v2457 = vlaneseq
        %v2458 = vshrl.u32 %v2457, 7
        %v2459 = vsub.s32 1, %v2458
        %v2460 = vrot.slane %v2451, %v2459
        %v2461 = vcombine.low %v2456, %v2460
        %v2463 = vmul.f32 %v172, %v2461
        %2464 = vst [vmem:[%s171] sm:$0xff] %v2463
        %s2465 = sand.u32 %s75, 1
        %s2466 = scalar_lea.sflag [#allocation6], %s2465
        %s2467 = sand.u32 %s75, 1
        %s2468 = smul.addr %s2467, 8
        %s2469 = scalar_lea.vmem [#allocation9], %s2468
        // Predicated region
        $region37: #{tpu_custom_call.1} parent=27 // pred_check
          %p2470 = pneg %p85
        $region38: #{tpu_custom_call.1} parent=27 // pred_check_branch
          %2472 = sbr.rel (%p2470) target = $region40
        $region39: #{tpu_custom_call.1} parent=27 // pred_region
          %s2474 = ssub.s32 128, 128
          %2475 = vsyncadd %s2466, %s2474
          %s2476 = smul.addr %s20, 2
          %s2477 = smul.addr %s2476, 64
          %s2478 = scalar_lea.hbm %s2, %s2477
          %s2480 = sshll.u32 %s2469, 4
          %s2481 = int_to_ptr.vmem [resolvable:$true] %s2480
          %2483 = dma.vmem_to_hbm [thread:$0]  %s2481, 128, %s2478, %s2466
        $region40: #{tpu_custom_call.1} parent=27 // pred_fallthru
          _
      $region28: #{tpu_custom_call.1} parent=5 // pred_fallthru
        _
      %p2484 = scmp.le.s32.totalorder 2, %s15
      // Predicated region
      $region41: #{tpu_custom_call.1} parent=5 // pred_check
        %p2485 = pneg %p2484
      $region42: #{tpu_custom_call.1} parent=5 // pred_check_branch
        %2487 = sbr.rel (%p2485) target = $region44
      $region43: #{tpu_custom_call.1} parent=5 // pred_region
        %s2488 = ssub.s32 %s15, 2
        // Predicated region
        $region45: #{tpu_custom_call.1} parent=43 // pred_check
          %p2489 = pneg %p91
        $region46: #{tpu_custom_call.1} parent=43 // pred_check_branch
          %2491 = sbr.rel (%p2489) target = $region48
        $region47: #{tpu_custom_call.1} parent=43 // pred_region
          %s2492 = sand.u32 %s76, 1
          %s2493 = scalar_lea.sflag [#allocation6], %s2492
          %s2494 = sand.u32 %s76, 1
          %s2495 = smul.addr %s2494, 8
          %s2496 = scalar_lea.vmem [#allocation9], %s2495
          %2497 = dma.done %s2493, 128
        $region48: #{tpu_custom_call.1} parent=43 // pred_fallthru
          _
      $region44: #{tpu_custom_call.1} parent=5 // pred_fallthru
        _
    $region6: #{tpu_custom_call.1} parent=1 // loop_footer
      %s19 = sadd.s32 1, %s15
    $region7: #{tpu_custom_call.1} parent=1 // loop_footer_branch
      %14 = sbr.rel target = $region3
    $region8: #{tpu_custom_call.1} parent=1 // loop_exit
      _
    %2498 = vsyncpa [#allocation5], 1
    %s2499 = scalar_lea.sflag [#allocation5], 1
    %2500 = vsyncpa %s2499, 1
    %2501 = vsyncpa [#allocation6], 1
    %s2502 = scalar_lea.sflag [#allocation6], 1
    %2503 = vsyncpa %s2502, 1
    %2504 = vsyncpa [#allocation7], 1
    %s2505 = scalar_lea.sflag [#allocation7], 1
    %2506 = vsyncpa %s2505, 1

</llo_original>
